<compile_context>
chip_gen: v7x
topology: tpu7x:2x2x1
jax: 0.10.0
libtpu: 0.0.40
codegen_flags: <defaults>
</compile_context>

<pallas_src>
import functools
import math

import jax
import jax.numpy as jnp
from jax.experimental import pallas as pl
from jax.experimental.pallas import tpu as pltpu


# --------------------------------------------------------------------------- #
# Kernel helpers                                                              #
# --------------------------------------------------------------------------- #
def _lane_roll(x, delta):
    """Circular lane shift: out[:, q] = x[:, (q + delta) % L]  (static delta)."""
    lsz = x.shape[-1]
    d = delta % lsz
    if d == 0:
        return x
    return jnp.concatenate([x[:, d:], x[:, :d]], axis=1)


def _const_index(ndim, *_):
    """Index map for operands that are identical for every grid step."""
    return (0,) * ndim


# --------------------------------------------------------------------------- #
# Fused forward kernel (one batch element per grid step)                      #
# --------------------------------------------------------------------------- #
def _fused_forward_kernel(*refs, n_conv, conv_deltas, n_fc):
    """Whole VisionDeepQ forward for one batch element.

    refs layout:
      x_ref    : (1, Cin, Lp)      input embedded in the zero-padded frame
      mask_ref : (1, Lp)           1.0 at valid frame positions, 0.0 elsewhere
      then per conv layer l: w (Cout_l, taps_l*Cin_l), b (Cout_l, 1)
      then FC layer 0:       w (C_last, Lp, N0) frame layout, b (1, N0)
      then FC layer i>0:     w (N_{i-1}, N_i), b (1, N_i)
      out_ref  : (1, 1, outputs)
    """
    x_ref, mask_ref, out_ref = refs[0], refs[1], refs[-1]
    params = refs[2:-1]

    mask = mask_ref[...]                                   # (1, Lp)
    frame = x_ref[0]                                       # (Cin, Lp), f32

    # ---- conv stack: one MXU matmul per layer (K = taps * Cin) ----------- #
    for l in range(n_conv):
        w_ref, b_ref = params[2 * l], params[2 * l + 1]
        # tap with frame offset d: column q must read frame[:, q + d]
        xcol = jnp.concatenate(
            [_lane_roll(frame, d) for d in conv_deltas[l]], axis=0
        )                                                  # (taps*Cin, Lp)
        acc = jnp.dot(w_ref[...], xcol, preferred_element_type=jnp.float32)
        # ReLU, then zero the padding/garbage positions so the next layer's
        # 'same' padding (and the FC contraction) stays exact.
        frame = jnp.maximum(acc + b_ref[...], 0.0) * mask  # (Cout, Lp)

    # ---- fully connected stack ------------------------------------------- #
    base = 2 * n_conv
    w0_ref, b0_ref = params[base], params[base + 1]        # (C, Lp, N0), (1, N0)
    acc = b0_ref[...]
    for c in range(frame.shape[0]):                        # contract over (C, Lp)
        acc = acc + jnp.dot(frame[c:c + 1, :], w0_ref[c],
                            preferred_element_type=jnp.float32)
    x_vec = jnp.maximum(acc, 0.0) if n_fc > 1 else acc     # ReLU unless last layer

    for i in range(1, n_fc):
        w_ref, b_ref = params[base + 2 * i], params[base + 2 * i + 1]
        x_vec = jnp.dot(x_vec, w_ref[...],
                        preferred_element_type=jnp.float32) + b_ref[...]
        if i < n_fc - 1:
            x_vec = jnp.maximum(x_vec, 0.0)

    out_ref[0] = x_vec


# --------------------------------------------------------------------------- #
# VisionDeepQ forward (Pallas)                                                #
# --------------------------------------------------------------------------- #
class VisionDeepQPallas:
    """Forward pass of VisionDeepQ as a single fused Pallas TPU kernel."""

    def __init__(self, network, *, height, width, key):
        network = dict(network)
        network.setdefault("channels", [32] * len(network.get("kernels", [1])))
        network.setdefault("kernels", [3] * len(network["channels"]))
        if len(network["kernels"]) != len(network["channels"]):
            network["kernels"] = [3] * len(network["channels"])

        self.height, self.width = int(height), int(width)
        self.cin = int(network["input_channels"])
        self.outputs = int(network["outputs"])

        kernels = [int(k) for k in network["kernels"]]
        channels = [int(c) for c in network["channels"]]

        # Common zero-padded frame shared by every stride-1 'same' conv layer.
        self.pad_lo = max((k - 1) // 2 for k in kernels)
        self.pad_hi = max(k - 1 - (k - 1) // 2 for k in kernels)
        self.hp = self.height + self.pad_lo + self.pad_hi
        self.wp = self.width + self.pad_lo + self.pad_hi
        lp = self.hp * self.wp
        self.lp_pad = -(-lp // 128) * 128     # lane-align the flattened frame

        # Valid-position mask over the flattened padded frame (constant).
        m = jnp.zeros((self.hp, self.wp), jnp.float32)
        m = m.at[self.pad_lo:self.pad_lo + self.height,
                 self.pad_lo:self.pad_lo + self.width].set(1.0)
        self.valid_mask = jnp.pad(m.reshape(1, lp),
                                  ((0, 0), (0, self.lp_pad - lp)))

        # Conv layers: torch OIHW weights (reference) + kernel layout
        # (Cout, taps*Cin) with taps ordered (i, j) row-major, plus the static
        # lane offset of each tap inside the padded frame.
        self.ref_conv, self.conv_params, conv_deltas = [], [], []
        chans = [self.cin] + channels
        for cin_l, cout_l, k in zip(chans[:-1], chans[1:], kernels):
            key, kw_, kb_ = jax.random.split(key, 3)
            bound = 1.0 / math.sqrt(cin_l * k * k)
            w_oihw = jax.random.uniform(kw_, (cout_l, cin_l, k, k),
                                        jnp.float32, -bound, bound)
            bias = jax.random.uniform(kb_, (cout_l,), jnp.float32, -bound, bound)
            self.ref_conv.append((w_oihw, bias))
            wmat = jnp.transpose(w_oihw, (0, 2, 3, 1)).reshape(cout_l, k * k * cin_l)
            self.conv_params.append((wmat, bias.reshape(cout_l, 1)))
            p = (k - 1) // 2
            conv_deltas.append(tuple((i - p) * self.wp + (j - p)
                                     for i in range(k) for j in range(k)))
        self.conv_deltas = tuple(conv_deltas)

        # Fully connected layers: torch (out, in) weights kept for reference;
        # kernel layouts prepared once here (review item: no per-call w.T).
        c_last = channels[-1]
        flat = c_last * self.height * self.width
        nodes = list(network.get("nodes") or [])
        dims = [flat] + nodes + [self.outputs]
        self.ref_fc = []
        for din, dout in zip(dims[:-1], dims[1:]):
            key, kw_, kb_ = jax.random.split(key, 3)
            bound = 1.0 / math.sqrt(din)
            w_ = jax.random.uniform(kw_, (dout, din), jnp.float32, -bound, bound)
            b_ = jax.random.uniform(kb_, (dout,), jnp.float32, -bound, bound)
            self.ref_fc.append((w_, b_))

        # First FC weight folded into the padded-frame layout:
        # w0f[c, q, n] = W0[n, c*H*W + h*W + w] at q = (h+pad)*Wp + (w+pad), else 0.
        w0, b0 = self.ref_fc[0]
        n0 = w0.shape[0]
        w0r = jnp.transpose(w0.reshape(n0, c_last, self.height, self.width),
                            (1, 2, 3, 0))                          # (C, H, W, N0)
        w0f = jnp.zeros((c_last, self.hp, self.wp, n0), jnp.float32)
        w0f = w0f.at[:, self.pad_lo:self.pad_lo + self.height,
                     self.pad_lo:self.pad_lo + self.width, :].set(w0r)
        w0f = w0f.reshape(c_last, lp, n0)
        w0f = jnp.pad(w0f, ((0, 0), (0, self.lp_pad - lp), (0, 0)))
        self.fc_params = [(w0f, b0.reshape(1, n0))]
        for w_, b_ in self.ref_fc[1:]:
            self.fc_params.append((jnp.transpose(w_), b_.reshape(1, -1)))

        self._jit_forward = jax.jit(self._forward)

    # ------------------------------------------------------------------ #
    def _forward(self, state):
        """state: (B, Cin, H, W) float32 NCHW  ->  (B, outputs) float32."""
        state = jnp.asarray(state, jnp.float32)
        b = state.shape[0]
        h, w, hp, wp = self.height, self.width, self.hp, self.wp
        lp = hp * wp

        # Embed the NCHW input into the zero-padded, lane-aligned frame.
        frame = jnp.zeros((b, self.cin, hp, wp), jnp.float32)
        frame = frame.at[:, :, self.pad_lo:self.pad_lo + h,
                         self.pad_lo:self.pad_lo + w].set(state)
        frame = frame.reshape(b, self.cin, lp)
        frame = jnp.pad(frame, ((0, 0), (0, 0), (0, self.lp_pad - lp)))

        operands = [frame, self.valid_mask]
        for wm, bm in self.conv_params:
            operands += [wm, bm]
        for wm, bm in self.fc_params:
            operands += [wm, bm]

        in_specs = [pl.BlockSpec((1, self.cin, self.lp_pad),
                                 lambda i: (i, 0, 0))]
        for arr in operands[1:]:
            in_specs.append(
                pl.BlockSpec(arr.shape, functools.partial(_const_index, arr.ndim)))

        kernel = functools.partial(
            _fused_forward_kernel,
            n_conv=len(self.conv_params),
            conv_deltas=self.conv_deltas,
            n_fc=len(self.fc_params))

        out = pl.pallas_call(
            kernel,
            out_shape=jax.ShapeDtypeStruct((b, 1, self.outputs), jnp.float32),
            grid=(b,),
            in_specs=in_specs,
            out_specs=pl.BlockSpec((1, 1, self.outputs), lambda i: (i, 0, 0)),
            compiler_params=pltpu.CompilerParams(
                dimension_semantics=("parallel",)),
        )(*operands)
        return out.reshape(b, self.outputs)

    def forward(self, state):
        return self._jit_forward(state)

    __call__ = forward

    # ------------------------------------------------------------------ #
    def reference_forward(self, state):
        """Pure-JAX (XLA) reference with identical semantics to the torch model."""
        x = jnp.asarray(state, jnp.float32)
        for w_oihw, bias in self.ref_conv:
            x = jax.lax.conv_general_dilated(
                x, w_oihw, window_strides=(1, 1), padding="SAME",
                dimension_numbers=("NCHW", "OIHW", "NCHW"))
            x = jnp.maximum(x + bias.reshape(1, -1, 1, 1), 0.0)
        x = x.reshape(x.shape[0], -1)                       # (C, H, W) flatten order
        for i, (w_, b_) in enumerate(self.ref_fc):
            x = x @ w_.T + b_
            if i < len(self.ref_fc) - 1:
                x = jnp.maximum(x, 0.0)
        return x


# --------------------------------------------------------------------------- #
# Demo                                                                        #
# --------------------------------------------------------------------------- #
if __name__ == "__main__":
    key = jax.random.PRNGKey(0)
    k_model, k_state = jax.random.split(key)

    network = {
        "input_channels": 4,
        "outputs": 5,
        "channels": [8, 16],
        "kernels": [3, 3],
        "nodes": [32],
    }
    # Tetris game-area shape from the module defaults: (B, Cin, 22, 10).
    model = VisionDeepQPallas(network, height=22, width=10, key=k_model)

    state = jax.random.uniform(k_state, (2, 4, 22, 10), jnp.float32)
    out = jax.block_until_ready(model(state))
    assert out.shape == (2, network["outputs"])
    assert out.dtype == jnp.float32

    ref = jax.block_until_ready(model.reference_forward(state))
    err = float(jnp.max(jnp.abs(out - ref)))
    assert err < 1e-3, f"Pallas forward mismatch vs XLA reference: {err}"
    print("KERNEL_OK")
</pallas_src>

<mosaic_0001>
module attributes {stable_mosaic.version = 11 : i64} {
  func.func @_fused_forward_kernel(%arg0: i32, %arg1: memref<1x4x384xf32, #tpu.memory_space<vmem>>, %arg2: memref<1x384xf32, #tpu.memory_space<vmem>>, %arg3: memref<8x36xf32, #tpu.memory_space<vmem>>, %arg4: memref<8x1xf32, #tpu.memory_space<vmem>>, %arg5: memref<16x72xf32, #tpu.memory_space<vmem>>, %arg6: memref<16x1xf32, #tpu.memory_space<vmem>>, %arg7: memref<16x384x32xf32, #tpu.memory_space<vmem>>, %arg8: memref<1x32xf32, #tpu.memory_space<vmem>>, %arg9: memref<32x5xf32, #tpu.memory_space<vmem>>, %arg10: memref<1x5xf32, #tpu.memory_space<vmem>>, %arg11: memref<1x1x5xf32, #tpu.memory_space<vmem>>) attributes {dimension_semantics = [#tpu.dimension_semantics<parallel>], iteration_bounds = array<i64: 2>, scalar_prefetch = 0 : i64, scratch_operands = 0 : i64, tpu.core_type = #tpu.core_type<tc>, window_params = [{transform_indices = @transform_0, window_bounds = array<i64: 1, 4, 384>}, {pipeline_mode = #tpu.pipeline_mode<synchronous>, transform_indices = @transform_1, window_bounds = array<i64: 1, 384>}, {pipeline_mode = #tpu.pipeline_mode<synchronous>, transform_indices = @transform_2, window_bounds = array<i64: 8, 36>}, {pipeline_mode = #tpu.pipeline_mode<synchronous>, transform_indices = @transform_3, window_bounds = array<i64: 8, 1>}, {pipeline_mode = #tpu.pipeline_mode<synchronous>, transform_indices = @transform_4, window_bounds = array<i64: 16, 72>}, {pipeline_mode = #tpu.pipeline_mode<synchronous>, transform_indices = @transform_5, window_bounds = array<i64: 16, 1>}, {pipeline_mode = #tpu.pipeline_mode<synchronous>, transform_indices = @transform_6, window_bounds = array<i64: 16, 384, 32>}, {pipeline_mode = #tpu.pipeline_mode<synchronous>, transform_indices = @transform_7, window_bounds = array<i64: 1, 32>}, {pipeline_mode = #tpu.pipeline_mode<synchronous>, transform_indices = @transform_8, window_bounds = array<i64: 32, 5>}, {pipeline_mode = #tpu.pipeline_mode<synchronous>, transform_indices = @transform_9, window_bounds = array<i64: 1, 5>}, {transform_indices = @transform_10, window_bounds = array<i64: 1, 1, 5>}]} {
    %c0 = arith.constant 0 : index
    %c0_0 = arith.constant 0 : index
    %0 = vector.load %arg2[%c0, %c0_0] : memref<1x384xf32, #tpu.memory_space<vmem>>, vector<1x384xf32>
    %c0_1 = arith.constant 0 : index
    %c0_2 = arith.constant 0 : index
    %c0_3 = arith.constant 0 : index
    %1 = vector.load %arg1[%c0_1, %c0_2, %c0_3] : memref<1x4x384xf32, #tpu.memory_space<vmem>>, vector<1x4x384xf32>
    %2 = vector.shape_cast %1 : vector<1x4x384xf32> to vector<4x384xf32>
    %3 = vector.extract_strided_slice %2 {offsets = [0, 371], sizes = [4, 13], strides = [1, 1]} : vector<4x384xf32> to vector<4x13xf32>
    %4 = vector.extract_strided_slice %2 {offsets = [0, 0], sizes = [4, 371], strides = [1, 1]} : vector<4x384xf32> to vector<4x371xf32>
    %5 = tpu.concatenate %3, %4 in 1 : vector<4x13xf32>, vector<4x371xf32> -> vector<4x384xf32>
    %6 = vector.extract_strided_slice %2 {offsets = [0, 372], sizes = [4, 12], strides = [1, 1]} : vector<4x384xf32> to vector<4x12xf32>
    %7 = vector.extract_strided_slice %2 {offsets = [0, 0], sizes = [4, 372], strides = [1, 1]} : vector<4x384xf32> to vector<4x372xf32>
    %8 = tpu.concatenate %6, %7 in 1 : vector<4x12xf32>, vector<4x372xf32> -> vector<4x384xf32>
    %9 = vector.extract_strided_slice %2 {offsets = [0, 373], sizes = [4, 11], strides = [1, 1]} : vector<4x384xf32> to vector<4x11xf32>
    %10 = vector.extract_strided_slice %2 {offsets = [0, 0], sizes = [4, 373], strides = [1, 1]} : vector<4x384xf32> to vector<4x373xf32>
    %11 = tpu.concatenate %9, %10 in 1 : vector<4x11xf32>, vector<4x373xf32> -> vector<4x384xf32>
    %12 = vector.extract_strided_slice %2 {offsets = [0, 383], sizes = [4, 1], strides = [1, 1]} : vector<4x384xf32> to vector<4x1xf32>
    %13 = vector.extract_strided_slice %2 {offsets = [0, 0], sizes = [4, 383], strides = [1, 1]} : vector<4x384xf32> to vector<4x383xf32>
    %14 = tpu.concatenate %12, %13 in 1 : vector<4x1xf32>, vector<4x383xf32> -> vector<4x384xf32>
    %15 = vector.extract_strided_slice %2 {offsets = [0, 1], sizes = [4, 383], strides = [1, 1]} : vector<4x384xf32> to vector<4x383xf32>
    %16 = vector.extract_strided_slice %2 {offsets = [0, 0], sizes = [4, 1], strides = [1, 1]} : vector<4x384xf32> to vector<4x1xf32>
    %17 = tpu.concatenate %15, %16 in 1 : vector<4x383xf32>, vector<4x1xf32> -> vector<4x384xf32>
    %18 = vector.extract_strided_slice %2 {offsets = [0, 11], sizes = [4, 373], strides = [1, 1]} : vector<4x384xf32> to vector<4x373xf32>
    %19 = vector.extract_strided_slice %2 {offsets = [0, 0], sizes = [4, 11], strides = [1, 1]} : vector<4x384xf32> to vector<4x11xf32>
    %20 = tpu.concatenate %18, %19 in 1 : vector<4x373xf32>, vector<4x11xf32> -> vector<4x384xf32>
    %21 = vector.extract_strided_slice %2 {offsets = [0, 12], sizes = [4, 372], strides = [1, 1]} : vector<4x384xf32> to vector<4x372xf32>
    %22 = vector.extract_strided_slice %2 {offsets = [0, 0], sizes = [4, 12], strides = [1, 1]} : vector<4x384xf32> to vector<4x12xf32>
    %23 = tpu.concatenate %21, %22 in 1 : vector<4x372xf32>, vector<4x12xf32> -> vector<4x384xf32>
    %24 = vector.extract_strided_slice %2 {offsets = [0, 13], sizes = [4, 371], strides = [1, 1]} : vector<4x384xf32> to vector<4x371xf32>
    %25 = vector.extract_strided_slice %2 {offsets = [0, 0], sizes = [4, 13], strides = [1, 1]} : vector<4x384xf32> to vector<4x13xf32>
    %26 = tpu.concatenate %24, %25 in 1 : vector<4x371xf32>, vector<4x13xf32> -> vector<4x384xf32>
    %27 = tpu.concatenate %5, %8, %11, %14, %2, %17, %20, %23, %26 in 0 : vector<4x384xf32>, vector<4x384xf32>, vector<4x384xf32>, vector<4x384xf32>, vector<4x384xf32>, vector<4x384xf32>, vector<4x384xf32>, vector<4x384xf32>, vector<4x384xf32> -> vector<36x384xf32>
    %c0_4 = arith.constant 0 : index
    %c0_5 = arith.constant 0 : index
    %28 = vector.load %arg3[%c0_4, %c0_5] : memref<8x36xf32, #tpu.memory_space<vmem>>, vector<8x36xf32>
    %cst = arith.constant dense<0.000000e+00> : vector<8x384xf32>
    %29 = tpu.matmul %28, %27, %cst {dimension_numbers = #tpu.dot_dimension_numbers<[1], [0], [0], [1], [0, 0, 1, 1], [], []>} : vector<8x36xf32>, vector<36x384xf32>, vector<8x384xf32> -> vector<8x384xf32>
    %c0_6 = arith.constant 0 : index
    %c0_7 = arith.constant 0 : index
    %30 = vector.load %arg4[%c0_6, %c0_7] : memref<8x1xf32, #tpu.memory_space<vmem>>, vector<8x1xf32>
    %31 = vector.broadcast %30 : vector<8x1xf32> to vector<8x384xf32>
    %32 = arith.addf %29, %31 : vector<8x384xf32>
    %cst_8 = arith.constant 0.000000e+00 : f32
    %33 = vector.broadcast %cst_8 : f32 to vector<8x384xf32>
    %34 = arith.maximumf %32, %33 : vector<8x384xf32>
    %35 = vector.broadcast %0 : vector<1x384xf32> to vector<8x384xf32>
    %36 = arith.mulf %34, %35 : vector<8x384xf32>
    %37 = vector.extract_strided_slice %36 {offsets = [0, 371], sizes = [8, 13], strides = [1, 1]} : vector<8x384xf32> to vector<8x13xf32>
    %38 = vector.extract_strided_slice %36 {offsets = [0, 0], sizes = [8, 371], strides = [1, 1]} : vector<8x384xf32> to vector<8x371xf32>
    %39 = tpu.concatenate %37, %38 in 1 : vector<8x13xf32>, vector<8x371xf32> -> vector<8x384xf32>
    %40 = vector.extract_strided_slice %36 {offsets = [0, 372], sizes = [8, 12], strides = [1, 1]} : vector<8x384xf32> to vector<8x12xf32>
    %41 = vector.extract_strided_slice %36 {offsets = [0, 0], sizes = [8, 372], strides = [1, 1]} : vector<8x384xf32> to vector<8x372xf32>
    %42 = tpu.concatenate %40, %41 in 1 : vector<8x12xf32>, vector<8x372xf32> -> vector<8x384xf32>
    %43 = vector.extract_strided_slice %36 {offsets = [0, 373], sizes = [8, 11], strides = [1, 1]} : vector<8x384xf32> to vector<8x11xf32>
    %44 = vector.extract_strided_slice %36 {offsets = [0, 0], sizes = [8, 373], strides = [1, 1]} : vector<8x384xf32> to vector<8x373xf32>
    %45 = tpu.concatenate %43, %44 in 1 : vector<8x11xf32>, vector<8x373xf32> -> vector<8x384xf32>
    %46 = vector.extract_strided_slice %36 {offsets = [0, 383], sizes = [8, 1], strides = [1, 1]} : vector<8x384xf32> to vector<8x1xf32>
    %47 = vector.extract_strided_slice %36 {offsets = [0, 0], sizes = [8, 383], strides = [1, 1]} : vector<8x384xf32> to vector<8x383xf32>
    %48 = tpu.concatenate %46, %47 in 1 : vector<8x1xf32>, vector<8x383xf32> -> vector<8x384xf32>
    %49 = vector.extract_strided_slice %36 {offsets = [0, 1], sizes = [8, 383], strides = [1, 1]} : vector<8x384xf32> to vector<8x383xf32>
    %50 = vector.extract_strided_slice %36 {offsets = [0, 0], sizes = [8, 1], strides = [1, 1]} : vector<8x384xf32> to vector<8x1xf32>
    %51 = tpu.concatenate %49, %50 in 1 : vector<8x383xf32>, vector<8x1xf32> -> vector<8x384xf32>
    %52 = vector.extract_strided_slice %36 {offsets = [0, 11], sizes = [8, 373], strides = [1, 1]} : vector<8x384xf32> to vector<8x373xf32>
    %53 = vector.extract_strided_slice %36 {offsets = [0, 0], sizes = [8, 11], strides = [1, 1]} : vector<8x384xf32> to vector<8x11xf32>
    %54 = tpu.concatenate %52, %53 in 1 : vector<8x373xf32>, vector<8x11xf32> -> vector<8x384xf32>
    %55 = vector.extract_strided_slice %36 {offsets = [0, 12], sizes = [8, 372], strides = [1, 1]} : vector<8x384xf32> to vector<8x372xf32>
    %56 = vector.extract_strided_slice %36 {offsets = [0, 0], sizes = [8, 12], strides = [1, 1]} : vector<8x384xf32> to vector<8x12xf32>
    %57 = tpu.concatenate %55, %56 in 1 : vector<8x372xf32>, vector<8x12xf32> -> vector<8x384xf32>
    %58 = vector.extract_strided_slice %36 {offsets = [0, 13], sizes = [8, 371], strides = [1, 1]} : vector<8x384xf32> to vector<8x371xf32>
    %59 = vector.extract_strided_slice %36 {offsets = [0, 0], sizes = [8, 13], strides = [1, 1]} : vector<8x384xf32> to vector<8x13xf32>
    %60 = tpu.concatenate %58, %59 in 1 : vector<8x371xf32>, vector<8x13xf32> -> vector<8x384xf32>
    %61 = tpu.concatenate %39, %42, %45, %48, %36, %51, %54, %57, %60 in 0 : vector<8x384xf32>, vector<8x384xf32>, vector<8x384xf32>, vector<8x384xf32>, vector<8x384xf32>, vector<8x384xf32>, vector<8x384xf32>, vector<8x384xf32>, vector<8x384xf32> -> vector<72x384xf32>
    %c0_9 = arith.constant 0 : index
    %c0_10 = arith.constant 0 : index
    %62 = vector.load %arg5[%c0_9, %c0_10] : memref<16x72xf32, #tpu.memory_space<vmem>>, vector<16x72xf32>
    %cst_11 = arith.constant dense<0.000000e+00> : vector<16x384xf32>
    %63 = tpu.matmul %62, %61, %cst_11 {dimension_numbers = #tpu.dot_dimension_numbers<[1], [0], [0], [1], [0, 0, 1, 1], [], []>} : vector<16x72xf32>, vector<72x384xf32>, vector<16x384xf32> -> vector<16x384xf32>
    %c0_12 = arith.constant 0 : index
    %c0_13 = arith.constant 0 : index
    %64 = vector.load %arg6[%c0_12, %c0_13] : memref<16x1xf32, #tpu.memory_space<vmem>>, vector<16x1xf32>
    %65 = vector.broadcast %64 : vector<16x1xf32> to vector<16x384xf32>
    %66 = arith.addf %63, %65 : vector<16x384xf32>
    %cst_14 = arith.constant 0.000000e+00 : f32
    %67 = vector.broadcast %cst_14 : f32 to vector<16x384xf32>
    %68 = arith.maximumf %66, %67 : vector<16x384xf32>
    %69 = vector.broadcast %0 : vector<1x384xf32> to vector<16x384xf32>
    %70 = arith.mulf %68, %69 : vector<16x384xf32>
    %c0_15 = arith.constant 0 : index
    %c0_16 = arith.constant 0 : index
    %71 = vector.load %arg8[%c0_15, %c0_16] : memref<1x32xf32, #tpu.memory_space<vmem>>, vector<1x32xf32>
    %72 = vector.extract_strided_slice %70 {offsets = [0, 0], sizes = [1, 384], strides = [1, 1]} : vector<16x384xf32> to vector<1x384xf32>
    %c0_17 = arith.constant 0 : index
    %c0_18 = arith.constant 0 : index
    %c0_19 = arith.constant 0 : index
    %73 = vector.load %arg7[%c0_17, %c0_18, %c0_19] : memref<16x384x32xf32, #tpu.memory_space<vmem>>, vector<1x384x32xf32>
    %74 = vector.shape_cast %73 : vector<1x384x32xf32> to vector<384x32xf32>
    %cst_20 = arith.constant dense<0.000000e+00> : vector<1x32xf32>
    %75 = tpu.matmul %72, %74, %cst_20 {dimension_numbers = #tpu.dot_dimension_numbers<[1], [0], [0], [1], [0, 0, 1, 1], [], []>} : vector<1x384xf32>, vector<384x32xf32>, vector<1x32xf32> -> vector<1x32xf32>
    %76 = arith.addf %71, %75 : vector<1x32xf32>
    %77 = vector.extract_strided_slice %70 {offsets = [1, 0], sizes = [1, 384], strides = [1, 1]} : vector<16x384xf32> to vector<1x384xf32>
    %c1 = arith.constant 1 : index
    %c0_21 = arith.constant 0 : index
    %c0_22 = arith.constant 0 : index
    %78 = vector.load %arg7[%c1, %c0_21, %c0_22] : memref<16x384x32xf32, #tpu.memory_space<vmem>>, vector<1x384x32xf32>
    %79 = vector.shape_cast %78 : vector<1x384x32xf32> to vector<384x32xf32>
    %cst_23 = arith.constant dense<0.000000e+00> : vector<1x32xf32>
    %80 = tpu.matmul %77, %79, %cst_23 {dimension_numbers = #tpu.dot_dimension_numbers<[1], [0], [0], [1], [0, 0, 1, 1], [], []>} : vector<1x384xf32>, vector<384x32xf32>, vector<1x32xf32> -> vector<1x32xf32>
    %81 = arith.addf %76, %80 : vector<1x32xf32>
    %82 = vector.extract_strided_slice %70 {offsets = [2, 0], sizes = [1, 384], strides = [1, 1]} : vector<16x384xf32> to vector<1x384xf32>
    %c2 = arith.constant 2 : index
    %c0_24 = arith.constant 0 : index
    %c0_25 = arith.constant 0 : index
    %83 = vector.load %arg7[%c2, %c0_24, %c0_25] : memref<16x384x32xf32, #tpu.memory_space<vmem>>, vector<1x384x32xf32>
    %84 = vector.shape_cast %83 : vector<1x384x32xf32> to vector<384x32xf32>
    %cst_26 = arith.constant dense<0.000000e+00> : vector<1x32xf32>
    %85 = tpu.matmul %82, %84, %cst_26 {dimension_numbers = #tpu.dot_dimension_numbers<[1], [0], [0], [1], [0, 0, 1, 1], [], []>} : vector<1x384xf32>, vector<384x32xf32>, vector<1x32xf32> -> vector<1x32xf32>
    %86 = arith.addf %81, %85 : vector<1x32xf32>
    %87 = vector.extract_strided_slice %70 {offsets = [3, 0], sizes = [1, 384], strides = [1, 1]} : vector<16x384xf32> to vector<1x384xf32>
    %c3 = arith.constant 3 : index
    %c0_27 = arith.constant 0 : index
    %c0_28 = arith.constant 0 : index
    %88 = vector.load %arg7[%c3, %c0_27, %c0_28] : memref<16x384x32xf32, #tpu.memory_space<vmem>>, vector<1x384x32xf32>
    %89 = vector.shape_cast %88 : vector<1x384x32xf32> to vector<384x32xf32>
    %cst_29 = arith.constant dense<0.000000e+00> : vector<1x32xf32>
    %90 = tpu.matmul %87, %89, %cst_29 {dimension_numbers = #tpu.dot_dimension_numbers<[1], [0], [0], [1], [0, 0, 1, 1], [], []>} : vector<1x384xf32>, vector<384x32xf32>, vector<1x32xf32> -> vector<1x32xf32>
    %91 = arith.addf %86, %90 : vector<1x32xf32>
    %92 = vector.extract_strided_slice %70 {offsets = [4, 0], sizes = [1, 384], strides = [1, 1]} : vector<16x384xf32> to vector<1x384xf32>
    %c4 = arith.constant 4 : index
    %c0_30 = arith.constant 0 : index
    %c0_31 = arith.constant 0 : index
    %93 = vector.load %arg7[%c4, %c0_30, %c0_31] : memref<16x384x32xf32, #tpu.memory_space<vmem>>, vector<1x384x32xf32>
    %94 = vector.shape_cast %93 : vector<1x384x32xf32> to vector<384x32xf32>
    %cst_32 = arith.constant dense<0.000000e+00> : vector<1x32xf32>
    %95 = tpu.matmul %92, %94, %cst_32 {dimension_numbers = #tpu.dot_dimension_numbers<[1], [0], [0], [1], [0, 0, 1, 1], [], []>} : vector<1x384xf32>, vector<384x32xf32>, vector<1x32xf32> -> vector<1x32xf32>
    %96 = arith.addf %91, %95 : vector<1x32xf32>
    %97 = vector.extract_strided_slice %70 {offsets = [5, 0], sizes = [1, 384], strides = [1, 1]} : vector<16x384xf32> to vector<1x384xf32>
    %c5 = arith.constant 5 : index
    %c0_33 = arith.constant 0 : index
    %c0_34 = arith.constant 0 : index
    %98 = vector.load %arg7[%c5, %c0_33, %c0_34] : memref<16x384x32xf32, #tpu.memory_space<vmem>>, vector<1x384x32xf32>
    %99 = vector.shape_cast %98 : vector<1x384x32xf32> to vector<384x32xf32>
    %cst_35 = arith.constant dense<0.000000e+00> : vector<1x32xf32>
    %100 = tpu.matmul %97, %99, %cst_35 {dimension_numbers = #tpu.dot_dimension_numbers<[1], [0], [0], [1], [0, 0, 1, 1], [], []>} : vector<1x384xf32>, vector<384x32xf32>, vector<1x32xf32> -> vector<1x32xf32>
    %101 = arith.addf %96, %100 : vector<1x32xf32>
    %102 = vector.extract_strided_slice %70 {offsets = [6, 0], sizes = [1, 384], strides = [1, 1]} : vector<16x384xf32> to vector<1x384xf32>
    %c6 = arith.constant 6 : index
    %c0_36 = arith.constant 0 : index
    %c0_37 = arith.constant 0 : index
    %103 = vector.load %arg7[%c6, %c0_36, %c0_37] : memref<16x384x32xf32, #tpu.memory_space<vmem>>, vector<1x384x32xf32>
    %104 = vector.shape_cast %103 : vector<1x384x32xf32> to vector<384x32xf32>
    %cst_38 = arith.constant dense<0.000000e+00> : vector<1x32xf32>
    %105 = tpu.matmul %102, %104, %cst_38 {dimension_numbers = #tpu.dot_dimension_numbers<[1], [0], [0], [1], [0, 0, 1, 1], [], []>} : vector<1x384xf32>, vector<384x32xf32>, vector<1x32xf32> -> vector<1x32xf32>
    %106 = arith.addf %101, %105 : vector<1x32xf32>
    %107 = vector.extract_strided_slice %70 {offsets = [7, 0], sizes = [1, 384], strides = [1, 1]} : vector<16x384xf32> to vector<1x384xf32>
    %c7 = arith.constant 7 : index
    %c0_39 = arith.constant 0 : index
    %c0_40 = arith.constant 0 : index
    %108 = vector.load %arg7[%c7, %c0_39, %c0_40] : memref<16x384x32xf32, #tpu.memory_space<vmem>>, vector<1x384x32xf32>
    %109 = vector.shape_cast %108 : vector<1x384x32xf32> to vector<384x32xf32>
    %cst_41 = arith.constant dense<0.000000e+00> : vector<1x32xf32>
    %110 = tpu.matmul %107, %109, %cst_41 {dimension_numbers = #tpu.dot_dimension_numbers<[1], [0], [0], [1], [0, 0, 1, 1], [], []>} : vector<1x384xf32>, vector<384x32xf32>, vector<1x32xf32> -> vector<1x32xf32>
    %111 = arith.addf %106, %110 : vector<1x32xf32>
    %112 = vector.extract_strided_slice %70 {offsets = [8, 0], sizes = [1, 384], strides = [1, 1]} : vector<16x384xf32> to vector<1x384xf32>
    %c8 = arith.constant 8 : index
    %c0_42 = arith.constant 0 : index
    %c0_43 = arith.constant 0 : index
    %113 = vector.load %arg7[%c8, %c0_42, %c0_43] : memref<16x384x32xf32, #tpu.memory_space<vmem>>, vector<1x384x32xf32>
    %114 = vector.shape_cast %113 : vector<1x384x32xf32> to vector<384x32xf32>
    %cst_44 = arith.constant dense<0.000000e+00> : vector<1x32xf32>
    %115 = tpu.matmul %112, %114, %cst_44 {dimension_numbers = #tpu.dot_dimension_numbers<[1], [0], [0], [1], [0, 0, 1, 1], [], []>} : vector<1x384xf32>, vector<384x32xf32>, vector<1x32xf32> -> vector<1x32xf32>
    %116 = arith.addf %111, %115 : vector<1x32xf32>
    %117 = vector.extract_strided_slice %70 {offsets = [9, 0], sizes = [1, 384], strides = [1, 1]} : vector<16x384xf32> to vector<1x384xf32>
    %c9 = arith.constant 9 : index
    %c0_45 = arith.constant 0 : index
    %c0_46 = arith.constant 0 : index
    %118 = vector.load %arg7[%c9, %c0_45, %c0_46] : memref<16x384x32xf32, #tpu.memory_space<vmem>>, vector<1x384x32xf32>
    %119 = vector.shape_cast %118 : vector<1x384x32xf32> to vector<384x32xf32>
    %cst_47 = arith.constant dense<0.000000e+00> : vector<1x32xf32>
    %120 = tpu.matmul %117, %119, %cst_47 {dimension_numbers = #tpu.dot_dimension_numbers<[1], [0], [0], [1], [0, 0, 1, 1], [], []>} : vector<1x384xf32>, vector<384x32xf32>, vector<1x32xf32> -> vector<1x32xf32>
    %121 = arith.addf %116, %120 : vector<1x32xf32>
    %122 = vector.extract_strided_slice %70 {offsets = [10, 0], sizes = [1, 384], strides = [1, 1]} : vector<16x384xf32> to vector<1x384xf32>
    %c10 = arith.constant 10 : index
    %c0_48 = arith.constant 0 : index
    %c0_49 = arith.constant 0 : index
    %123 = vector.load %arg7[%c10, %c0_48, %c0_49] : memref<16x384x32xf32, #tpu.memory_space<vmem>>, vector<1x384x32xf32>
    %124 = vector.shape_cast %123 : vector<1x384x32xf32> to vector<384x32xf32>
    %cst_50 = arith.constant dense<0.000000e+00> : vector<1x32xf32>
    %125 = tpu.matmul %122, %124, %cst_50 {dimension_numbers = #tpu.dot_dimension_numbers<[1], [0], [0], [1], [0, 0, 1, 1], [], []>} : vector<1x384xf32>, vector<384x32xf32>, vector<1x32xf32> -> vector<1x32xf32>
    %126 = arith.addf %121, %125 : vector<1x32xf32>
    %127 = vector.extract_strided_slice %70 {offsets = [11, 0], sizes = [1, 384], strides = [1, 1]} : vector<16x384xf32> to vector<1x384xf32>
    %c11 = arith.constant 11 : index
    %c0_51 = arith.constant 0 : index
    %c0_52 = arith.constant 0 : index
    %128 = vector.load %arg7[%c11, %c0_51, %c0_52] : memref<16x384x32xf32, #tpu.memory_space<vmem>>, vector<1x384x32xf32>
    %129 = vector.shape_cast %128 : vector<1x384x32xf32> to vector<384x32xf32>
    %cst_53 = arith.constant dense<0.000000e+00> : vector<1x32xf32>
    %130 = tpu.matmul %127, %129, %cst_53 {dimension_numbers = #tpu.dot_dimension_numbers<[1], [0], [0], [1], [0, 0, 1, 1], [], []>} : vector<1x384xf32>, vector<384x32xf32>, vector<1x32xf32> -> vector<1x32xf32>
    %131 = arith.addf %126, %130 : vector<1x32xf32>
    %132 = vector.extract_strided_slice %70 {offsets = [12, 0], sizes = [1, 384], strides = [1, 1]} : vector<16x384xf32> to vector<1x384xf32>
    %c12 = arith.constant 12 : index
    %c0_54 = arith.constant 0 : index
    %c0_55 = arith.constant 0 : index
    %133 = vector.load %arg7[%c12, %c0_54, %c0_55] : memref<16x384x32xf32, #tpu.memory_space<vmem>>, vector<1x384x32xf32>
    %134 = vector.shape_cast %133 : vector<1x384x32xf32> to vector<384x32xf32>
    %cst_56 = arith.constant dense<0.000000e+00> : vector<1x32xf32>
    %135 = tpu.matmul %132, %134, %cst_56 {dimension_numbers = #tpu.dot_dimension_numbers<[1], [0], [0], [1], [0, 0, 1, 1], [], []>} : vector<1x384xf32>, vector<384x32xf32>, vector<1x32xf32> -> vector<1x32xf32>
    %136 = arith.addf %131, %135 : vector<1x32xf32>
    %137 = vector.extract_strided_slice %70 {offsets = [13, 0], sizes = [1, 384], strides = [1, 1]} : vector<16x384xf32> to vector<1x384xf32>
    %c13 = arith.constant 13 : index
    %c0_57 = arith.constant 0 : index
    %c0_58 = arith.constant 0 : index
    %138 = vector.load %arg7[%c13, %c0_57, %c0_58] : memref<16x384x32xf32, #tpu.memory_space<vmem>>, vector<1x384x32xf32>
    %139 = vector.shape_cast %138 : vector<1x384x32xf32> to vector<384x32xf32>
    %cst_59 = arith.constant dense<0.000000e+00> : vector<1x32xf32>
    %140 = tpu.matmul %137, %139, %cst_59 {dimension_numbers = #tpu.dot_dimension_numbers<[1], [0], [0], [1], [0, 0, 1, 1], [], []>} : vector<1x384xf32>, vector<384x32xf32>, vector<1x32xf32> -> vector<1x32xf32>
    %141 = arith.addf %136, %140 : vector<1x32xf32>
    %142 = vector.extract_strided_slice %70 {offsets = [14, 0], sizes = [1, 384], strides = [1, 1]} : vector<16x384xf32> to vector<1x384xf32>
    %c14 = arith.constant 14 : index
    %c0_60 = arith.constant 0 : index
    %c0_61 = arith.constant 0 : index
    %143 = vector.load %arg7[%c14, %c0_60, %c0_61] : memref<16x384x32xf32, #tpu.memory_space<vmem>>, vector<1x384x32xf32>
    %144 = vector.shape_cast %143 : vector<1x384x32xf32> to vector<384x32xf32>
    %cst_62 = arith.constant dense<0.000000e+00> : vector<1x32xf32>
    %145 = tpu.matmul %142, %144, %cst_62 {dimension_numbers = #tpu.dot_dimension_numbers<[1], [0], [0], [1], [0, 0, 1, 1], [], []>} : vector<1x384xf32>, vector<384x32xf32>, vector<1x32xf32> -> vector<1x32xf32>
    %146 = arith.addf %141, %145 : vector<1x32xf32>
    %147 = vector.extract_strided_slice %70 {offsets = [15, 0], sizes = [1, 384], strides = [1, 1]} : vector<16x384xf32> to vector<1x384xf32>
    %c15 = arith.constant 15 : index
    %c0_63 = arith.constant 0 : index
    %c0_64 = arith.constant 0 : index
    %148 = vector.load %arg7[%c15, %c0_63, %c0_64] : memref<16x384x32xf32, #tpu.memory_space<vmem>>, vector<1x384x32xf32>
    %149 = vector.shape_cast %148 : vector<1x384x32xf32> to vector<384x32xf32>
    %cst_65 = arith.constant dense<0.000000e+00> : vector<1x32xf32>
    %150 = tpu.matmul %147, %149, %cst_65 {dimension_numbers = #tpu.dot_dimension_numbers<[1], [0], [0], [1], [0, 0, 1, 1], [], []>} : vector<1x384xf32>, vector<384x32xf32>, vector<1x32xf32> -> vector<1x32xf32>
    %151 = arith.addf %146, %150 : vector<1x32xf32>
    %cst_66 = arith.constant 0.000000e+00 : f32
    %152 = vector.broadcast %cst_66 : f32 to vector<1x32xf32>
    %153 = arith.maximumf %151, %152 : vector<1x32xf32>
    %c0_67 = arith.constant 0 : index
    %c0_68 = arith.constant 0 : index
    %154 = vector.load %arg9[%c0_67, %c0_68] : memref<32x5xf32, #tpu.memory_space<vmem>>, vector<32x5xf32>
    %cst_69 = arith.constant dense<0.000000e+00> : vector<1x5xf32>
    %155 = tpu.matmul %153, %154, %cst_69 {dimension_numbers = #tpu.dot_dimension_numbers<[1], [0], [0], [1], [0, 0, 1, 1], [], []>} : vector<1x32xf32>, vector<32x5xf32>, vector<1x5xf32> -> vector<1x5xf32>
    %c0_70 = arith.constant 0 : index
    %c0_71 = arith.constant 0 : index
    %156 = vector.load %arg10[%c0_70, %c0_71] : memref<1x5xf32, #tpu.memory_space<vmem>>, vector<1x5xf32>
    %157 = arith.addf %155, %156 : vector<1x5xf32>
    %c0_72 = arith.constant 0 : index
    %c0_73 = arith.constant 0 : index
    %c0_74 = arith.constant 0 : index
    %158 = vector.load %arg11[%c0_72, %c0_73, %c0_74] : memref<1x1x5xf32, #tpu.memory_space<vmem>>, vector<1x1x5xf32>
    %159 = vector.shape_cast %158 : vector<1x1x5xf32> to vector<1x5xf32>
    %160 = vector.shape_cast %157 : vector<1x5xf32> to vector<1x1x5xf32>
    tpu.vector_store %arg11[%c0_72, %c0_73, %c0_74], %160 {strides = array<i32>} : memref<1x1x5xf32, #tpu.memory_space<vmem>>, vector<1x1x5xf32>,
    return
  }
  func.func @transform_0(%arg0: i32) -> (i32, i32, i32) {
    %c0_i32 = arith.constant 0 : i32
    %c0_i32_0 = arith.constant 0 : i32
    %c0_i32_1 = arith.constant 0 : i32
    return %arg0, %c0_i32, %c0_i32_0 : i32, i32, i32
  }
  func.func @transform_1(%arg0: i32) -> (i32, i32) {
    %c0_i32 = arith.constant 0 : i32
    %c0_i32_0 = arith.constant 0 : i32
    %c0_i32_1 = arith.constant 0 : i32
    return %c0_i32, %c0_i32_0 : i32, i32
  }
  func.func @transform_2(%arg0: i32) -> (i32, i32) {
    %c0_i32 = arith.constant 0 : i32
    %c0_i32_0 = arith.constant 0 : i32
    %c0_i32_1 = arith.constant 0 : i32
    return %c0_i32, %c0_i32_0 : i32, i32
  }
  func.func @transform_3(%arg0: i32) -> (i32, i32) {
    %c0_i32 = arith.constant 0 : i32
    %c0_i32_0 = arith.constant 0 : i32
    %c0_i32_1 = arith.constant 0 : i32
    return %c0_i32, %c0_i32_0 : i32, i32
  }
  func.func @transform_4(%arg0: i32) -> (i32, i32) {
    %c0_i32 = arith.constant 0 : i32
    %c0_i32_0 = arith.constant 0 : i32
    %c0_i32_1 = arith.constant 0 : i32
    return %c0_i32, %c0_i32_0 : i32, i32
  }
  func.func @transform_5(%arg0: i32) -> (i32, i32) {
    %c0_i32 = arith.constant 0 : i32
    %c0_i32_0 = arith.constant 0 : i32
    %c0_i32_1 = arith.constant 0 : i32
    return %c0_i32, %c0_i32_0 : i32, i32
  }
  func.func @transform_6(%arg0: i32) -> (i32, i32, i32) {
    %c0_i32 = arith.constant 0 : i32
    %c0_i32_0 = arith.constant 0 : i32
    %c0_i32_1 = arith.constant 0 : i32
    %c0_i32_2 = arith.constant 0 : i32
    return %c0_i32, %c0_i32_0, %c0_i32_1 : i32, i32, i32
  }
  func.func @transform_7(%arg0: i32) -> (i32, i32) {
    %c0_i32 = arith.constant 0 : i32
    %c0_i32_0 = arith.constant 0 : i32
    %c0_i32_1 = arith.constant 0 : i32
    return %c0_i32, %c0_i32_0 : i32, i32
  }
  func.func @transform_8(%arg0: i32) -> (i32, i32) {
    %c0_i32 = arith.constant 0 : i32
    %c0_i32_0 = arith.constant 0 : i32
    %c0_i32_1 = arith.constant 0 : i32
    return %c0_i32, %c0_i32_0 : i32, i32
  }
  func.func @transform_9(%arg0: i32) -> (i32, i32) {
    %c0_i32 = arith.constant 0 : i32
    %c0_i32_0 = arith.constant 0 : i32
    %c0_i32_1 = arith.constant 0 : i32
    return %c0_i32, %c0_i32_0 : i32, i32
  }
  func.func @transform_10(%arg0: i32) -> (i32, i32, i32) {
    %c0_i32 = arith.constant 0 : i32
    %c0_i32_0 = arith.constant 0 : i32
    %c0_i32_1 = arith.constant 0 : i32
    return %arg0, %c0_i32, %c0_i32_0 : i32, i32, i32
  }
}

</mosaic_0001>

<llo_original>
// kernel: _forward.1
$region0: #{_forward.1}
  #allocation0 [shape = 'u32[]', space=smem, size = 0x4, offset = 0x4, fixed_abs, tag = 'smem constant byte address 0x4 - core index']
  #allocation1 [shape = 'u32[144,128]{1,0:T(1,128)}', space=vmem, size = 0x12000, scoped, tag = 'internal scratch']
  %s0 = inlined_call_operand.vmem [shape: f32[2,4,384], index: 0, kind: input, shape index: {}]
  %s1 = inlined_call_operand.hbm [shape: f32[1,384], index: 1, kind: input, shape index: {}]
  %s2 = inlined_call_operand.hbm [shape: f32[8,36], index: 2, kind: input, shape index: {}]
  %s3 = inlined_call_operand.hbm [shape: f32[8,1], index: 3, kind: input, shape index: {}]
  %s4 = inlined_call_operand.hbm [shape: f32[16,72], index: 4, kind: input, shape index: {}]
  %s5 = inlined_call_operand.hbm [shape: f32[16,1], index: 5, kind: input, shape index: {}]
  %s6 = inlined_call_operand.hbm [shape: f32[16,384,32], index: 6, kind: input, shape index: {}]
  %s7 = inlined_call_operand.hbm [shape: f32[1,32], index: 7, kind: input, shape index: {}]
  %s8 = inlined_call_operand.hbm [shape: f32[32,5], index: 8, kind: input, shape index: {}]
  %s9 = inlined_call_operand.hbm [shape: f32[1,5], index: 9, kind: input, shape index: {}]
  %s10 = inlined_call_operand.hbm [shape: f32[2,1,5], index: 10, kind: output, shape index: {}]
  %s11 = sld [smem:[#allocation0]]
  $region109: #{_forward.1} parent=0
    _
  %s13 = ssub.s32 1, %s11
  %s14 = scalar_select 0, %s13, %s11
  $region1: #{_forward.1} parent=0
    #allocation2 [shape = 'u8[1536]{0}', space=vmem, size = 0x800, scoped, tag = 'input window, operand 1, single buffered']
    #allocation3 [shape = 's32[2]{0}', space=sflag, size = 0x8, scoped, tag = 'scoped memory for _forward.1']
    #allocation4 [shape = 's32[2]{0}', space=sflag, size = 0x8, scoped, tag = 'scoped memory for _forward.1']
    #allocation5 [shape = 'u8[4096]{0}', space=vmem, size = 0x1000, scoped, tag = 'input window, operand 2, single buffered']
    #allocation6 [shape = 's32[1]{0}', space=sflag, size = 0x4, scoped, tag = 'scoped memory for _forward.1']
    #allocation7 [shape = 'u8[4096]{0}', space=vmem, size = 0x1000, scoped, tag = 'input window, operand 3, single buffered']
    #allocation8 [shape = 'u8[8192]{0}', space=vmem, size = 0x2000, scoped, tag = 'input window, operand 4, single buffered']
    #allocation9 [shape = 's32[1]{0}', space=sflag, size = 0x4, scoped, tag = 'scoped memory for _forward.1']
    #allocation10 [shape = 'u8[8192]{0}', space=vmem, size = 0x2000, scoped, tag = 'input window, operand 5, single buffered']
    #allocation11 [shape = 'u8[3145728]{0}', space=vmem, size = 0x300000, scoped, tag = 'input window, operand 6, single buffered']
    #allocation12 [shape = 's32[1]{0}', space=sflag, size = 0x4, scoped, tag = 'scoped memory for _forward.1']
    #allocation13 [shape = 'u8[512]{0}', space=vmem, size = 0x400, scoped, tag = 'input window, operand 7, single buffered']
    #allocation14 [shape = 'u8[16384]{0}', space=vmem, size = 0x4000, scoped, tag = 'input window, operand 8, single buffered']
    #allocation15 [shape = 's32[1]{0}', space=sflag, size = 0x4, scoped, tag = 'scoped memory for _forward.1']
    #allocation16 [shape = 'u8[512]{0}', space=vmem, size = 0x400, scoped, tag = 'input window, operand 9, single buffered']
    #allocation17 [shape = 'u8[1024]{0}', space=vmem, size = 0x400, scoped, tag = 'output window, operand 0']
    %15 = vsyncpa [#allocation3], 0
    %16 = vsyncpa [#allocation6], 0
    %17 = vsyncpa [#allocation9], 0
    %18 = vsyncpa [#allocation12], 0
    %19 = vsyncpa [#allocation15], 0
    %20 = vsyncpa [#allocation4], 0
    %s21 = scalar_lea.sflag [#allocation4], 1
    %22 = vsyncpa %s21, 0
    loop: start=0, step=1, limit=4
    $region2: #{_forward.1} parent=1 // loop_pre_header
      _
    $region3: #{_forward.1} parent=1 // loop_header
      %s24 = sphi 0, %s28
      %p25 = scmp.ge.s32.totalorder %s24, 4
      %s34 = sphi 0, %s36
      %s37 = sphi 0, %s34
      %s38 = sphi 0, %s37
      %s54 = sphi 0, %s38
      %s58 = sphi 0, %s58
      %s60 = sphi 0, %s58
      %s61 = sphi 0, %s60
      %s75 = sphi 0, %s61
      %s79 = sphi 0, %s79
      %s81 = sphi 0, %s79
      %s82 = sphi 0, %s81
      %s96 = sphi 0, %s82
      %s100 = sphi 0, %s100
      %s102 = sphi 0, %s100
      %s103 = sphi 0, %s102
      %s117 = sphi 0, %s103
      %s121 = sphi 0, %s121
      %s123 = sphi 0, %s121
      %s124 = sphi 0, %s123
      %s138 = sphi 0, %s124
      %s142 = sphi 0, %s142
      %s144 = sphi 0, %s142
      %s145 = sphi 0, %s144
      %s159 = sphi 0, %s145
      %s163 = sphi 0, %s163
      %s165 = sphi 0, %s163
      %s166 = sphi 0, %s165
      %s180 = sphi 0, %s166
      %s184 = sphi 0, %s184
      %s186 = sphi 0, %s184
      %s187 = sphi 0, %s186
      %s201 = sphi 0, %s187
      %s205 = sphi 0, %s205
      %s207 = sphi 0, %s205
      %s208 = sphi 0, %s207
      %s222 = sphi 0, %s208
      %s226 = sphi 0, %s226
      %s228 = sphi 0, %s226
      %s229 = sphi 0, %s228
      %s243 = sphi 0, %s229
      %s249 = sphi 0, %s251
      %s252 = sphi 0, %s249
      %s253 = sphi 0, %s252
      %s269 = sphi 0, %s253
    $region4: #{_forward.1} parent=1 // loop_header_branch
      %27 = sbr.rel (%p25) target = $region8
    $region5: #{_forward.1} parent=1 // loop_body
      %s29 = ssub.s32 %s24, 1
      %s30 = ssub.s32 %s24, 2
      %s31 = sadd.s32 %s24, 1
      %s32 = ssub.s32 %s24, %s31
      %p33 = scmp.eq.s32.totalorder %s32, 0
      %s35 = sadd.s32 %s34, 1
      %s36 = scalar_select %p33, %s34, %s35
      %p39 = pneg %p33
      %p40 = scmp.eq.s32.totalorder %s24, 1
      %p41 = por %p39, %p40
      %p42 = scmp.ne.s32.totalorder %s34, %s37
      %p43 = scmp.eq.s32.totalorder %s24, 0
      %p44 = por %p42, %p43
      %p45 = scmp.ne.s32.totalorder %s34, %s37
      %p46 = scmp.eq.s32.totalorder %s29, 1
      %p47 = por %p45, %p46
      %p48 = scmp.ne.s32.totalorder %s37, %s38
      %p49 = scmp.eq.s32.totalorder %s29, 0
      %p50 = por %p48, %p49
      %p51 = scmp.ne.s32.totalorder %s37, %s38
      %p52 = scmp.eq.s32.totalorder %s30, 1
      %p53 = por %p51, %p52
      %p55 = scmp.ne.s32.totalorder %s38, %s54
      %p56 = scmp.eq.s32.totalorder %s30, 0
      %p57 = por %p55, %p56
      %s59 = sadd.s32 %s58, 1
      %p62 = scmp.eq.s32.totalorder %s24, 1
      %p63 = scmp.ne.s32.totalorder %s58, %s60
      %p64 = scmp.eq.s32.totalorder %s24, 0
      %p65 = por %p63, %p64
      %p66 = scmp.ne.s32.totalorder %s58, %s60
      %p67 = scmp.eq.s32.totalorder %s29, 1
      %p68 = por %p66, %p67
      %p69 = scmp.ne.s32.totalorder %s60, %s61
      %p70 = scmp.eq.s32.totalorder %s29, 0
      %p71 = por %p69, %p70
      %p72 = scmp.ne.s32.totalorder %s60, %s61
      %p73 = scmp.eq.s32.totalorder %s30, 1
      %p74 = por %p72, %p73
      %p76 = scmp.ne.s32.totalorder %s61, %s75
      %p77 = scmp.eq.s32.totalorder %s30, 0
      %p78 = por %p76, %p77
      %s80 = sadd.s32 %s79, 1
      %p83 = scmp.eq.s32.totalorder %s24, 1
      %p84 = scmp.ne.s32.totalorder %s79, %s81
      %p85 = scmp.eq.s32.totalorder %s24, 0
      %p86 = por %p84, %p85
      %p87 = scmp.ne.s32.totalorder %s79, %s81
      %p88 = scmp.eq.s32.totalorder %s29, 1
      %p89 = por %p87, %p88
      %p90 = scmp.ne.s32.totalorder %s81, %s82
      %p91 = scmp.eq.s32.totalorder %s29, 0
      %p92 = por %p90, %p91
      %p93 = scmp.ne.s32.totalorder %s81, %s82
      %p94 = scmp.eq.s32.totalorder %s30, 1
      %p95 = por %p93, %p94
      %p97 = scmp.ne.s32.totalorder %s82, %s96
      %p98 = scmp.eq.s32.totalorder %s30, 0
      %p99 = por %p97, %p98
      %s101 = sadd.s32 %s100, 1
      %p104 = scmp.eq.s32.totalorder %s24, 1
      %p105 = scmp.ne.s32.totalorder %s100, %s102
      %p106 = scmp.eq.s32.totalorder %s24, 0
      %p107 = por %p105, %p106
      %p108 = scmp.ne.s32.totalorder %s100, %s102
      %p109 = scmp.eq.s32.totalorder %s29, 1
      %p110 = por %p108, %p109
      %p111 = scmp.ne.s32.totalorder %s102, %s103
      %p112 = scmp.eq.s32.totalorder %s29, 0
      %p113 = por %p111, %p112
      %p114 = scmp.ne.s32.totalorder %s102, %s103
      %p115 = scmp.eq.s32.totalorder %s30, 1
      %p116 = por %p114, %p115
      %p118 = scmp.ne.s32.totalorder %s103, %s117
      %p119 = scmp.eq.s32.totalorder %s30, 0
      %p120 = por %p118, %p119
      %s122 = sadd.s32 %s121, 1
      %p125 = scmp.eq.s32.totalorder %s24, 1
      %p126 = scmp.ne.s32.totalorder %s121, %s123
      %p127 = scmp.eq.s32.totalorder %s24, 0
      %p128 = por %p126, %p127
      %p129 = scmp.ne.s32.totalorder %s121, %s123
      %p130 = scmp.eq.s32.totalorder %s29, 1
      %p131 = por %p129, %p130
      %p132 = scmp.ne.s32.totalorder %s123, %s124
      %p133 = scmp.eq.s32.totalorder %s29, 0
      %p134 = por %p132, %p133
      %p135 = scmp.ne.s32.totalorder %s123, %s124
      %p136 = scmp.eq.s32.totalorder %s30, 1
      %p137 = por %p135, %p136
      %p139 = scmp.ne.s32.totalorder %s124, %s138
      %p140 = scmp.eq.s32.totalorder %s30, 0
      %p141 = por %p139, %p140
      %s143 = sadd.s32 %s142, 1
      %p146 = scmp.eq.s32.totalorder %s24, 1
      %p147 = scmp.ne.s32.totalorder %s142, %s144
      %p148 = scmp.eq.s32.totalorder %s24, 0
      %p149 = por %p147, %p148
      %p150 = scmp.ne.s32.totalorder %s142, %s144
      %p151 = scmp.eq.s32.totalorder %s29, 1
      %p152 = por %p150, %p151
      %p153 = scmp.ne.s32.totalorder %s144, %s145
      %p154 = scmp.eq.s32.totalorder %s29, 0
      %p155 = por %p153, %p154
      %p156 = scmp.ne.s32.totalorder %s144, %s145
      %p157 = scmp.eq.s32.totalorder %s30, 1
      %p158 = por %p156, %p157
      %p160 = scmp.ne.s32.totalorder %s145, %s159
      %p161 = scmp.eq.s32.totalorder %s30, 0
      %p162 = por %p160, %p161
      %s164 = sadd.s32 %s163, 1
      %p167 = scmp.eq.s32.totalorder %s24, 1
      %p168 = scmp.ne.s32.totalorder %s163, %s165
      %p169 = scmp.eq.s32.totalorder %s24, 0
      %p170 = por %p168, %p169
      %p171 = scmp.ne.s32.totalorder %s163, %s165
      %p172 = scmp.eq.s32.totalorder %s29, 1
      %p173 = por %p171, %p172
      %p174 = scmp.ne.s32.totalorder %s165, %s166
      %p175 = scmp.eq.s32.totalorder %s29, 0
      %p176 = por %p174, %p175
      %p177 = scmp.ne.s32.totalorder %s165, %s166
      %p178 = scmp.eq.s32.totalorder %s30, 1
      %p179 = por %p177, %p178
      %p181 = scmp.ne.s32.totalorder %s166, %s180
      %p182 = scmp.eq.s32.totalorder %s30, 0
      %p183 = por %p181, %p182
      %s185 = sadd.s32 %s184, 1
      %p188 = scmp.eq.s32.totalorder %s24, 1
      %p189 = scmp.ne.s32.totalorder %s184, %s186
      %p190 = scmp.eq.s32.totalorder %s24, 0
      %p191 = por %p189, %p190
      %p192 = scmp.ne.s32.totalorder %s184, %s186
      %p193 = scmp.eq.s32.totalorder %s29, 1
      %p194 = por %p192, %p193
      %p195 = scmp.ne.s32.totalorder %s186, %s187
      %p196 = scmp.eq.s32.totalorder %s29, 0
      %p197 = por %p195, %p196
      %p198 = scmp.ne.s32.totalorder %s186, %s187
      %p199 = scmp.eq.s32.totalorder %s30, 1
      %p200 = por %p198, %p199
      %p202 = scmp.ne.s32.totalorder %s187, %s201
      %p203 = scmp.eq.s32.totalorder %s30, 0
      %p204 = por %p202, %p203
      %s206 = sadd.s32 %s205, 1
      %p209 = scmp.eq.s32.totalorder %s24, 1
      %p210 = scmp.ne.s32.totalorder %s205, %s207
      %p211 = scmp.eq.s32.totalorder %s24, 0
      %p212 = por %p210, %p211
      %p213 = scmp.ne.s32.totalorder %s205, %s207
      %p214 = scmp.eq.s32.totalorder %s29, 1
      %p215 = por %p213, %p214
      %p216 = scmp.ne.s32.totalorder %s207, %s208
      %p217 = scmp.eq.s32.totalorder %s29, 0
      %p218 = por %p216, %p217
      %p219 = scmp.ne.s32.totalorder %s207, %s208
      %p220 = scmp.eq.s32.totalorder %s30, 1
      %p221 = por %p219, %p220
      %p223 = scmp.ne.s32.totalorder %s208, %s222
      %p224 = scmp.eq.s32.totalorder %s30, 0
      %p225 = por %p223, %p224
      %s227 = sadd.s32 %s226, 1
      %p230 = scmp.eq.s32.totalorder %s24, 1
      %p231 = scmp.ne.s32.totalorder %s226, %s228
      %p232 = scmp.eq.s32.totalorder %s24, 0
      %p233 = por %p231, %p232
      %p234 = scmp.ne.s32.totalorder %s226, %s228
      %p235 = scmp.eq.s32.totalorder %s29, 1
      %p236 = por %p234, %p235
      %p237 = scmp.ne.s32.totalorder %s228, %s229
      %p238 = scmp.eq.s32.totalorder %s29, 0
      %p239 = por %p237, %p238
      %p240 = scmp.ne.s32.totalorder %s228, %s229
      %p241 = scmp.eq.s32.totalorder %s30, 1
      %p242 = por %p240, %p241
      %p244 = scmp.ne.s32.totalorder %s229, %s243
      %p245 = scmp.eq.s32.totalorder %s30, 0
      %p246 = por %p244, %p245
      %s247 = ssub.s32 %s24, %s31
      %p248 = scmp.eq.s32.totalorder %s247, 0
      %s250 = sadd.s32 %s249, 1
      %s251 = scalar_select %p248, %s249, %s250
      %p254 = pneg %p248
      %p255 = scmp.eq.s32.totalorder %s24, 1
      %p256 = por %p254, %p255
      %p257 = scmp.ne.s32.totalorder %s249, %s252
      %p258 = scmp.eq.s32.totalorder %s24, 0
      %p259 = por %p257, %p258
      %p260 = scmp.ne.s32.totalorder %s249, %s252
      %p261 = scmp.eq.s32.totalorder %s29, 1
      %p262 = por %p260, %p261
      %p263 = scmp.ne.s32.totalorder %s252, %s253
      %p264 = scmp.eq.s32.totalorder %s29, 0
      %p265 = por %p263, %p264
      %p266 = scmp.ne.s32.totalorder %s252, %s253
      %p267 = scmp.eq.s32.totalorder %s30, 1
      %p268 = por %p266, %p267
      %p270 = scmp.ne.s32.totalorder %s253, %s269
      %p271 = scmp.eq.s32.totalorder %s30, 0
      %p272 = por %p270, %p271
      %p273 = scmp.le.s32.totalorder 1, %s24
      %p274 = scmp.lt.s32.totalorder %s24, 3
      %p275 = pnand %p273, %p274
      %p276 = pneg %p275
      // Predicated region
      $region9: #{_forward.1} parent=5 // pred_check
        _
      $region10: #{_forward.1} parent=5 // pred_check_branch
        %278 = sbr.rel (%p275) target = $region12
      $region11: #{_forward.1} parent=5 // pred_region
        %s279 = ssub.s32 %s24, 1
        // Predicated region
        $region13: #{_forward.1} parent=11 // pred_check
          %p280 = pneg %p71
        $region14: #{_forward.1} parent=11 // pred_check_branch
          %282 = sbr.rel (%p280) target = $region16
        $region15: #{_forward.1} parent=11 // pred_region
          %s284 = ssub.s32 48, 48
          %285 = vsyncadd [#allocation3], %s284
          %s287 = sshll.u32 [#allocation2], 4
          %s288 = int_to_ptr.vmem [resolvable:$true] %s287
          %290 = dma.hbm_to_vmem [thread:$0]  %s1, 48, %s288, [#allocation3]
        $region16: #{_forward.1} parent=11 // pred_fallthru
          _
        // Predicated region
        $region17: #{_forward.1} parent=11 // pred_check
          %p291 = pneg %p92
        $region18: #{_forward.1} parent=11 // pred_check_branch
          %293 = sbr.rel (%p291) target = $region20
        $region19: #{_forward.1} parent=11 // pred_region
          %s295 = ssub.s32 128, 128
          %296 = vsyncadd [#allocation6], %s295
          %s298 = sshll.u32 [#allocation5], 4
          %s299 = int_to_ptr.vmem [resolvable:$true] %s298
          %301 = dma.hbm_to_vmem [thread:$0]  %s2, 128, %s299, [#allocation6]
        $region20: #{_forward.1} parent=11 // pred_fallthru
          _
        // Predicated region
        $region21: #{_forward.1} parent=11 // pred_check
          %p302 = pneg %p113
        $region22: #{_forward.1} parent=11 // pred_check_branch
          %304 = sbr.rel (%p302) target = $region24
        $region23: #{_forward.1} parent=11 // pred_region
          %s306 = ssub.s32 128, 128
          %307 = vsyncadd [#allocation6], %s306
          %s309 = sshll.u32 [#allocation7], 4
          %s310 = int_to_ptr.vmem [resolvable:$true] %s309
          %312 = dma.hbm_to_vmem [thread:$0]  %s3, 128, %s310, [#allocation6]
        $region24: #{_forward.1} parent=11 // pred_fallthru
          _
        // Predicated region
        $region25: #{_forward.1} parent=11 // pred_check
          %p313 = pneg %p134
        $region26: #{_forward.1} parent=11 // pred_check_branch
          %315 = sbr.rel (%p313) target = $region28
        $region27: #{_forward.1} parent=11 // pred_region
          %s317 = ssub.s32 256, 256
          %318 = vsyncadd [#allocation9], %s317
          %s319 = sshll.u32 [#allocation8], 4
          %s320 = int_to_ptr.vmem [resolvable:$true] %s319
          %325 = dma.hbm_to_vmem [thread:$0]  %s4, 256, %s320, [#allocation9], 128, 128, 8
        $region28: #{_forward.1} parent=11 // pred_fallthru
          _
        // Predicated region
        $region29: #{_forward.1} parent=11 // pred_check
          %p326 = pneg %p155
        $region30: #{_forward.1} parent=11 // pred_check_branch
          %328 = sbr.rel (%p326) target = $region32
        $region31: #{_forward.1} parent=11 // pred_region
          %s330 = ssub.s32 256, 256
          %331 = vsyncadd [#allocation9], %s330
          %s332 = sshll.u32 [#allocation10], 4
          %s333 = int_to_ptr.vmem [resolvable:$true] %s332
          %338 = dma.hbm_to_vmem [thread:$0]  %s5, 256, %s333, [#allocation9], 128, 128, 8
        $region32: #{_forward.1} parent=11 // pred_fallthru
          _
        // Predicated region
        $region33: #{_forward.1} parent=11 // pred_check
          %p339 = pneg %p176
        $region34: #{_forward.1} parent=11 // pred_check_branch
          %341 = sbr.rel (%p339) target = $region36
        $region35: #{_forward.1} parent=11 // pred_region
          %s343 = ssub.s32 98304, 98304
          %344 = vsyncadd [#allocation12], %s343
          %s345 = sshll.u32 [#allocation11], 4
          %s346 = int_to_ptr.vmem [resolvable:$true] %s345
          %351 = dma.hbm_to_vmem [thread:$0]  %s6, 98304, %s346, [#allocation12], 128, 128, 8
        $region36: #{_forward.1} parent=11 // pred_fallthru
          _
        // Predicated region
        $region37: #{_forward.1} parent=11 // pred_check
          %p352 = pneg %p197
        $region38: #{_forward.1} parent=11 // pred_check_branch
          %354 = sbr.rel (%p352) target = $region40
        $region39: #{_forward.1} parent=11 // pred_region
          %s356 = ssub.s32 16, 16
          %357 = vsyncadd [#allocation12], %s356
          %s359 = sshll.u32 [#allocation13], 4
          %s360 = int_to_ptr.vmem [resolvable:$true] %s359
          %362 = dma.hbm_to_vmem [thread:$0]  %s7, 16, %s360, [#allocation12]
        $region40: #{_forward.1} parent=11 // pred_fallthru
          _
        // Predicated region
        $region41: #{_forward.1} parent=11 // pred_check
          %p363 = pneg %p218
        $region42: #{_forward.1} parent=11 // pred_check_branch
          %365 = sbr.rel (%p363) target = $region44
        $region43: #{_forward.1} parent=11 // pred_region
          %s367 = ssub.s32 512, 512
          %368 = vsyncadd [#allocation15], %s367
          %s369 = sshll.u32 [#allocation14], 4
          %s370 = int_to_ptr.vmem [resolvable:$true] %s369
          %375 = dma.hbm_to_vmem [thread:$0]  %s8, 512, %s370, [#allocation15], 128, 128, 8
        $region44: #{_forward.1} parent=11 // pred_fallthru
          _
        // Predicated region
        $region45: #{_forward.1} parent=11 // pred_check
          %p376 = pneg %p239
        $region46: #{_forward.1} parent=11 // pred_check_branch
          %378 = sbr.rel (%p376) target = $region48
        $region47: #{_forward.1} parent=11 // pred_region
          %s380 = ssub.s32 16, 16
          %381 = vsyncadd [#allocation15], %s380
          %s383 = sshll.u32 [#allocation16], 4
          %s384 = int_to_ptr.vmem [resolvable:$true] %s383
          %386 = dma.hbm_to_vmem [thread:$0]  %s9, 16, %s384, [#allocation15]
        $region48: #{_forward.1} parent=11 // pred_fallthru
          _
      $region12: #{_forward.1} parent=5 // pred_fallthru
        _
      %p387 = scmp.lt.s32.totalorder %s24, 2
      // Predicated region
      $region49: #{_forward.1} parent=5 // pred_check
        %p388 = pneg %p387
      $region50: #{_forward.1} parent=5 // pred_check_branch
        %390 = sbr.rel (%p388) target = $region52
      $region51: #{_forward.1} parent=5 // pred_region
        // Predicated region
        $region53: #{_forward.1} parent=51 // pred_check
          %p391 = pneg %p44
        $region54: #{_forward.1} parent=51 // pred_check_branch
          %393 = sbr.rel (%p391) target = $region56
        $region55: #{_forward.1} parent=51 // pred_region
          %p394 = scmp.lt.s32.totalorder %s24, 1
          %s395 = scalar_select %p394, %s24, 1
          %s396 = smul.addr %s395, 3
          %s397 = smul.addr %s396, 4
          %s398 = scalar_lea.vmem %s0, %s397
        $region56: #{_forward.1} parent=51 // pred_fallthru
          _
      $region52: #{_forward.1} parent=5 // pred_fallthru
        _
      %p399 = scmp.le.s32.totalorder 1, %s24
      %p400 = scmp.lt.s32.totalorder %s24, 3
      %p401 = pnand %p399, %p400
      %p402 = pneg %p401
      // Predicated region
      $region57: #{_forward.1} parent=5 // pred_check
        _
      $region58: #{_forward.1} parent=5 // pred_check_branch
        %404 = sbr.rel (%p401) target = $region60
      $region59: #{_forward.1} parent=5 // pred_region
        %s405 = ssub.s32 %s24, 1
        // Predicated region
        $region61: #{_forward.1} parent=59 // pred_check
          %p406 = pneg %p71
        $region62: #{_forward.1} parent=59 // pred_check_branch
          %408 = sbr.rel (%p406) target = $region64
        $region63: #{_forward.1} parent=59 // pred_region
          %409 = dma.done [#allocation3], 48
        $region64: #{_forward.1} parent=59 // pred_fallthru
          _
        // Predicated region
        $region65: #{_forward.1} parent=59 // pred_check
          %p410 = pneg %p92
        $region66: #{_forward.1} parent=59 // pred_check_branch
          %412 = sbr.rel (%p410) target = $region68
        $region67: #{_forward.1} parent=59 // pred_region
          %413 = dma.done [#allocation6], 128
        $region68: #{_forward.1} parent=59 // pred_fallthru
          _
        // Predicated region
        $region69: #{_forward.1} parent=59 // pred_check
          %p414 = pneg %p113
        $region70: #{_forward.1} parent=59 // pred_check_branch
          %416 = sbr.rel (%p414) target = $region72
        $region71: #{_forward.1} parent=59 // pred_region
          %417 = dma.done [#allocation6], 128
        $region72: #{_forward.1} parent=59 // pred_fallthru
          _
        // Predicated region
        $region73: #{_forward.1} parent=59 // pred_check
          %p418 = pneg %p134
        $region74: #{_forward.1} parent=59 // pred_check_branch
          %420 = sbr.rel (%p418) target = $region76
        $region75: #{_forward.1} parent=59 // pred_region
          %421 = dma.done [#allocation9], 256
        $region76: #{_forward.1} parent=59 // pred_fallthru
          _
        // Predicated region
        $region77: #{_forward.1} parent=59 // pred_check
          %p422 = pneg %p155
        $region78: #{_forward.1} parent=59 // pred_check_branch
          %424 = sbr.rel (%p422) target = $region80
        $region79: #{_forward.1} parent=59 // pred_region
          %425 = dma.done [#allocation9], 256
        $region80: #{_forward.1} parent=59 // pred_fallthru
          _
        // Predicated region
        $region81: #{_forward.1} parent=59 // pred_check
          %p426 = pneg %p176
        $region82: #{_forward.1} parent=59 // pred_check_branch
          %428 = sbr.rel (%p426) target = $region84
        $region83: #{_forward.1} parent=59 // pred_region
          %429 = dma.done [#allocation12], 98304
        $region84: #{_forward.1} parent=59 // pred_fallthru
          _
        // Predicated region
        $region85: #{_forward.1} parent=59 // pred_check
          %p430 = pneg %p197
        $region86: #{_forward.1} parent=59 // pred_check_branch
          %432 = sbr.rel (%p430) target = $region88
        $region87: #{_forward.1} parent=59 // pred_region
          %433 = dma.done [#allocation12], 16
        $region88: #{_forward.1} parent=59 // pred_fallthru
          _
        // Predicated region
        $region89: #{_forward.1} parent=59 // pred_check
          %p434 = pneg %p218
        $region90: #{_forward.1} parent=59 // pred_check_branch
          %436 = sbr.rel (%p434) target = $region92
        $region91: #{_forward.1} parent=59 // pred_region
          %437 = dma.done [#allocation15], 512
        $region92: #{_forward.1} parent=59 // pred_fallthru
          _
        // Predicated region
        $region93: #{_forward.1} parent=59 // pred_check
          %p438 = pneg %p239
        $region94: #{_forward.1} parent=59 // pred_check_branch
          %440 = sbr.rel (%p438) target = $region96
        $region95: #{_forward.1} parent=59 // pred_region
          %441 = dma.done [#allocation15], 16
        $region96: #{_forward.1} parent=59 // pred_fallthru
          _
        %p442 = scmp.lt.s32.totalorder %s29, 1
        %s443 = scalar_select %p442, %s29, 1
        %s444 = smul.addr %s443, 3
        %s445 = smul.addr %s444, 4
        %s446 = scalar_lea.vmem %s0, %s445
        %p447 = pneg %p50
        %p448 = pneg %p47
        %p449 = pneg %p71
        %p450 = pneg %p68
        %p451 = pneg %p92
        %p452 = pneg %p89
        %p453 = pneg %p113
        %p454 = pneg %p110
        %p455 = pneg %p134
        %p456 = pneg %p131
        %p457 = pneg %p155
        %p458 = pneg %p152
        %p459 = pneg %p176
        %p460 = pneg %p173
        %p461 = pneg %p197
        %p462 = pneg %p194
        %p463 = pneg %p218
        %p464 = pneg %p215
        %p465 = pneg %p239
        %p466 = pneg %p236
        %p467 = pneg %p265
        %p468 = pneg %p262
        %s469 = sand.u32 %s252, 1
        %s470 = scalar_lea.sflag [#allocation4], %s469
        %s471 = sand.u32 %s252, 1
        %s472 = scalar_lea.vmem [#allocation17], %s471
        %p473 = scmp.lt.s32.totalorder %s29, 1
        %s474 = scalar_select %p473, %s29, 1
        %s475 = smul.addr %s474, 3
        %s476 = smul.addr %s475, 4
        %s477 = scalar_lea.vmem %s0, %s476
        %v478 = vld [vmem:[#allocation2] sm:$0x7]
        %v479 = vld [vmem:[%s477] sm:$0xff]
        %v480 = vld [vmem:[%s477 + $0x8] sm:$0xf]
        %482 = vrot.lane.b32.xlu0 %v480, 13
        %v483 = vpop.permute.xlu0 %482
        %v486 = vcombine.high %v479, %v479
        %487 = vrot.lane.b32.xlu0 %v479, 13
        %v488 = vpop.permute.xlu0 %487
        %489 = vrot.lane.b32.xlu0 %v486, 13
        %v490 = vpop.permute.xlu0 %489
        %vm491 = vcmask 105472
        %v492 = vsel %vm491, %v488, %v490
        %v493 = vsel %vm491, %v490, %v483
        %v497 = vsel %vm491, %v483, %v488
        %498 = vrot.lane.b32.xlu0 %v480, 12
        %v499 = vpop.permute.xlu0 %498
        %501 = vrot.lane.b32.xlu0 %v479, 12
        %v502 = vpop.permute.xlu0 %501
        %503 = vrot.lane.b32.xlu0 %v486, 12
        %v504 = vpop.permute.xlu0 %503
        %vm505 = vcmask 97280
        %v506 = vsel %vm505, %v502, %v504
        %v507 = vsel %vm505, %v504, %v499
        %v509 = vsel %vm505, %v499, %v502
        %510 = vrot.lane.b32.xlu0 %v480, 11
        %v511 = vpop.permute.xlu0 %510
        %513 = vrot.lane.b32.xlu0 %v479, 11
        %v514 = vpop.permute.xlu0 %513
        %515 = vrot.lane.b32.xlu0 %v486, 11
        %v516 = vpop.permute.xlu0 %515
        %vm517 = vcmask 89088
        %v518 = vsel %vm517, %v514, %v516
        %v519 = vsel %vm517, %v516, %v511
        %v523 = vsel %vm517, %v511, %v514
        %524 = vrot.lane.b32.xlu0 %v480, 1
        %v525 = vpop.permute.xlu0 %524
        %527 = vrot.lane.b32.xlu0 %v479, 1
        %v528 = vpop.permute.xlu0 %527
        %529 = vrot.lane.b32.xlu0 %v486, 1
        %v530 = vpop.permute.xlu0 %529
        %vm531 = vcmask 7168
        %v532 = vsel %vm531, %v528, %v530
        %v533 = vsel %vm531, %v530, %v525
        %v535 = vsel %vm531, %v525, %v528
        %536 = vrot.lane.b32.xlu0 %v479, 127
        %v537 = vpop.permute.xlu0 %536
        %538 = vrot.lane.b32.xlu0 %v486, 127
        %v539 = vpop.permute.xlu0 %538
        %540 = vrot.lane.b32.xlu0 %v480, 127
        %v541 = vpop.permute.xlu0 %540
        %vm542 = vcmask 1039360
        %v543 = vsel %vm542, %v537, %v539
        %v544 = vsel %vm542, %v539, %v541
        %v547 = vsel %vm542, %v541, %v537
        %548 = vrot.lane.b32.xlu0 %v479, 117
        %v549 = vpop.permute.xlu0 %548
        %550 = vrot.lane.b32.xlu0 %v486, 117
        %v551 = vpop.permute.xlu0 %550
        %552 = vrot.lane.b32.xlu0 %v480, 117
        %v553 = vpop.permute.xlu0 %552
        %vm554 = vcmask 957440
        %v555 = vsel %vm554, %v549, %v551
        %v556 = vsel %vm554, %v551, %v553
        %v561 = vsel %vm554, %v553, %v549
        %562 = vrot.lane.b32.xlu0 %v479, 116
        %v563 = vpop.permute.xlu0 %562
        %564 = vrot.lane.b32.xlu0 %v486, 116
        %v565 = vpop.permute.xlu0 %564
        %566 = vrot.lane.b32.xlu0 %v480, 116
        %v567 = vpop.permute.xlu0 %566
        %vm568 = vcmask 949248
        %v569 = vsel %vm568, %v563, %v565
        %v570 = vsel %vm568, %v565, %v567
        %v573 = vsel %vm568, %v567, %v563
        %574 = vrot.lane.b32.xlu0 %v479, 115
        %v575 = vpop.permute.xlu0 %574
        %576 = vrot.lane.b32.xlu0 %v486, 115
        %v577 = vpop.permute.xlu0 %576
        %578 = vrot.lane.b32.xlu0 %v480, 115
        %v579 = vpop.permute.xlu0 %578
        %vm580 = vcmask 941056
        %v581 = vsel %vm580, %v575, %v577
        %v582 = vsel %vm580, %v577, %v579
        %v585 = vsel %vm580, %v579, %v575
        %v587 = vrot.slane %v509, 4
        %v588 = vrot.slane %v506, 4
        %v589 = vrot.slane %v507, 4
        %v594 = vrot.slane %v535, 4
        %v595 = vrot.slane %v532, 4
        %v596 = vrot.slane %v533, 4
        %v602 = vrot.slane %v543, 4
        %v603 = vrot.slane %v544, 4
        %v604 = vrot.slane %v547, 4
        %v609 = vrot.slane %v569, 4
        %v610 = vrot.slane %v570, 4
        %v611 = vrot.slane %v573, 4
        %vm615 = vcmask 1043456
        %v616 = vsel %vm615, %v497, %v587
        %v617 = vsel %vm615, %v492, %v588
        %v618 = vsel %vm615, %v493, %v589
        %v619 = vsel %vm615, %v523, %v594
        %v620 = vsel %vm615, %v518, %v595
        %v621 = vsel %vm615, %v519, %v596
        %v622 = vsel %vm615, %v479, %v602
        %v623 = vsel %vm615, %v486, %v603
        %v624 = vsel %vm615, %v480, %v604
        %v625 = vsel %vm615, %v555, %v609
        %v626 = vsel %vm615, %v556, %v610
        %v627 = vsel %vm615, %v561, %v611
        %v628 = vld [vmem:[#allocation5] sm:$0xff]
        %v629 = vld [vmem:[#allocation7] sm:$0xff]
        %631 = vset.pattern.permute.xlu0 0
        %632 = vperm.xlu0 %631, %v629
        %v633 = vpop.permute.xlu0 %632
        %vm635 = vcmask 293888
        %v637 = vsel %vm635, %v628, 0
        %v639 = vsel %vm615, %v581, 0
        %v641 = vsel %vm615, %v582, 0
        %v644 = vsel %vm615, %v585, 0
        %646 = vmatprep.subr.mxu0 %v617
        %647 = vmatpush1.msra.mxu0 %v616
        %648 = vmatprep.subr.mxu0 %v620
        %649 = vmatpush1.msra.mxu0 %v619
        %650 = vmatprep.subr.mxu0 %v623
        %651 = vmatpush1.msra.mxu0 %v622
        %652 = vmatprep.subr.mxu0 %v626
        %653 = vmatpush1.msra.mxu0 %v625
        %654 = vmatprep.subr.mxu0 %v641
        %655 = vmatpush1.msra.mxu0 %v639
        %656 = vmatprep.subr.mxu0 0.0
        %657 = vmatpush1.msra.mxu0 0.0
        %658 = vmatprep.subr.mxu0 0.0
        %659 = vmatpush1.msra.mxu0 0.0
        %660 = vmatprep.subr.mxu0 0.0
        %661 = vmatpush1.msra.mxu0 0.0
        %662 = vmatprep.subr.mxu0 0.0
        %663 = vmatpush1.msra.mxu0 0.0
        %664 = vmatprep.subr.mxu0 0.0
        %665 = vmatpush1.msra.mxu0 0.0
        %666 = vmatprep.subr.mxu0 0.0
        %667 = vmatpush1.msra.mxu0 0.0
        %668 = vmatprep.subr.mxu0 0.0
        %669 = vmatpush1.msra.mxu0 0.0
        %670 = vmatprep.subr.mxu0 0.0
        %671 = vmatpush1.msra.mxu0 0.0
        %672 = vmatprep.subr.mxu0 0.0
        %673 = vmatpush1.msra.mxu0 0.0
        %674 = vmatprep.subr.mxu0 0.0
        %675 = vmatpush1.msra.mxu0 0.0
        %676 = vmatprep.subr.mxu0 0.0
        %677 = vmatpush1.msra.mxu0 0.0
        %678 = vmatprep.subr.mxu0 0.0
        %679 = vmatpush1.msra.mxu0 0.0
        %680 = vmatprep.subr.mxu0 0.0
        %681 = vmatpush1.msra.mxu0 0.0
        %682 = vmatprep.subr.mxu0 0.0
        %683 = vmatpush1.msra.mxu0 0.0
        %684 = vmatprep.subr.mxu0 0.0
        %685 = vmatpush1.msra.mxu0 0.0
        %686 = vmatprep.subr.mxu0 0.0
        %687 = vmatpush1.msra.mxu0 0.0
        %688 = vmatprep.subr.mxu0 0.0
        %689 = vmatpush1.msra.mxu0 0.0
        %690 = vmatprep.subr.mxu0 0.0
        %691 = vmatpush1.msra.mxu0 0.0
        %692 = vmatprep.subr.mxu0 0.0
        %693 = vmatpush1.msra.mxu0 0.0
        %694 = vmatprep.subr.mxu0 0.0
        %695 = vmatpush1.msra.mxu0 0.0
        %696 = vmatprep.subr.mxu0 0.0
        %697 = vmatpush1.msra.mxu0 0.0
        %698 = vmatprep.subr.mxu0 0.0
        %699 = vmatpush1.msra.mxu0 0.0
        %700 = vmatprep.subr.mxu0 0.0
        %701 = vmatpush1.msra.mxu0 0.0
        %702 = vmatprep.subr.mxu0 0.0
        %703 = vmatpush1.msra.mxu0 0.0
        %704 = vmatprep.subr.mxu0 0.0
        %705 = vmatpush1.msra.mxu0 0.0
        %706 = vmatprep.subr.mxu0 0.0
        %707 = vmatpush1.msra.mxu0 0.0
        %708 = vmatprep.subr.mxu0 0.0
        %709 = vmatpush1.msra.mxu0 0.0
        %710 = vmatprep.mubr.f32.mxu0 0.0
        %711 = vmatmul.mubr.f32.gmra.mrb[0].mxu0 %v637
        %v712 = vpop.f32.mrb[0].mxu0
        %v713 = vadd.f32 %v633, %v712
        %v714 = vpop.f32.mrb[0].mxu0
        %v715 = vadd.f32 %v633, %v714
        %716 = vdwg.mxu0
        %717 = vmatprep.subr.mxu0 0.0
        %718 = vmatpush1.msra.mxu0 %v618
        %719 = vmatprep.subr.mxu0 0.0
        %720 = vmatpush1.msra.mxu0 %v621
        %721 = vmatprep.subr.mxu0 0.0
        %722 = vmatpush1.msra.mxu0 %v624
        %723 = vmatprep.subr.mxu0 0.0
        %724 = vmatpush1.msra.mxu0 %v627
        %725 = vmatprep.subr.mxu0 0.0
        %726 = vmatpush1.msra.mxu0 %v644
        %727 = vmatprep.subr.mxu0 0.0
        %728 = vmatpush1.msra.mxu0 0.0
        %729 = vmatprep.subr.mxu0 0.0
        %730 = vmatpush1.msra.mxu0 0.0
        %731 = vmatprep.subr.mxu0 0.0
        %732 = vmatpush1.msra.mxu0 0.0
        %733 = vmatprep.subr.mxu0 0.0
        %734 = vmatpush1.msra.mxu0 0.0
        %735 = vmatprep.subr.mxu0 0.0
        %736 = vmatpush1.msra.mxu0 0.0
        %737 = vmatprep.subr.mxu0 0.0
        %738 = vmatpush1.msra.mxu0 0.0
        %739 = vmatprep.subr.mxu0 0.0
        %740 = vmatpush1.msra.mxu0 0.0
        %741 = vmatprep.subr.mxu0 0.0
        %742 = vmatpush1.msra.mxu0 0.0
        %743 = vmatprep.subr.mxu0 0.0
        %744 = vmatpush1.msra.mxu0 0.0
        %745 = vmatprep.subr.mxu0 0.0
        %746 = vmatpush1.msra.mxu0 0.0
        %747 = vmatprep.subr.mxu0 0.0
        %748 = vmatpush1.msra.mxu0 0.0
        %749 = vmatprep.subr.mxu0 0.0
        %750 = vmatpush1.msra.mxu0 0.0
        %751 = vmatprep.subr.mxu0 0.0
        %752 = vmatpush1.msra.mxu0 0.0
        %753 = vmatprep.subr.mxu0 0.0
        %754 = vmatpush1.msra.mxu0 0.0
        %755 = vmatprep.subr.mxu0 0.0
        %756 = vmatpush1.msra.mxu0 0.0
        %757 = vmatprep.subr.mxu0 0.0
        %758 = vmatpush1.msra.mxu0 0.0
        %759 = vmatprep.subr.mxu0 0.0
        %760 = vmatpush1.msra.mxu0 0.0
        %761 = vmatprep.subr.mxu0 0.0
        %762 = vmatpush1.msra.mxu0 0.0
        %763 = vmatprep.subr.mxu0 0.0
        %764 = vmatpush1.msra.mxu0 0.0
        %765 = vmatprep.subr.mxu0 0.0
        %766 = vmatpush1.msra.mxu0 0.0
        %767 = vmatprep.subr.mxu0 0.0
        %768 = vmatpush1.msra.mxu0 0.0
        %769 = vmatprep.subr.mxu0 0.0
        %770 = vmatpush1.msra.mxu0 0.0
        %771 = vmatprep.subr.mxu0 0.0
        %772 = vmatpush1.msra.mxu0 0.0
        %773 = vmatprep.subr.mxu0 0.0
        %774 = vmatpush1.msra.mxu0 0.0
        %775 = vmatprep.subr.mxu0 0.0
        %776 = vmatpush1.msra.mxu0 0.0
        %777 = vmatprep.subr.mxu0 0.0
        %778 = vmatpush1.msra.mxu0 0.0
        %779 = vmatprep.subr.mxu0 0.0
        %780 = vmatpush1.msra.mxu0 0.0
        %781 = vmatprep.mubr.f32.mxu0 0.0
        %782 = vmatmul.mubr.f32.gmra.mrb[0].mxu0 %v637
        %v783 = vpop.f32.mrb[0].mxu0
        %v784 = vadd.f32 %v633, %v783
        %v785 = vpop.f32.mrb[0].mxu0
        %786 = vdwg.mxu0
        %v787 = vmax.f32 %v713, 0.0
        %v788 = vmax.f32 %v715, 0.0
        %v789 = vmax.f32 %v784, 0.0
        %v791 = vlaneseq
        %v792 = vshrl.u32 %v791, 7
        %v793 = vsub.s32 0, %v792
        %v794 = vrot.slane %v478, %v793
        %v795 = vlaneseq
        %v796 = vshrl.u32 %v795, 7
        %v797 = vsub.s32 1, %v796
        %v798 = vrot.slane %v478, %v797
        %v799 = vlaneseq
        %v800 = vshrl.u32 %v799, 7
        %v801 = vsub.s32 2, %v800
        %v802 = vrot.slane %v478, %v801
        %v806 = vmul.f32 %v787, %v794
        %v807 = vmul.f32 %v788, %v798
        %v808 = vmul.f32 %v789, %v802
        %810 = vrot.lane.b32.xlu0 %v808, 13
        %v811 = vpop.permute.xlu0 %810
        %815 = vrot.lane.b32.xlu0 %v806, 13
        %v816 = vpop.permute.xlu0 %815
        %817 = vrot.lane.b32.xlu0 %v807, 13
        %v818 = vpop.permute.xlu0 %817
        %v819 = vsel %vm491, %v816, %v818
        %v820 = vsel %vm491, %v818, %v811
        %v824 = vsel %vm491, %v811, %v816
        %825 = vrot.lane.b32.xlu0 %v808, 12
        %v826 = vpop.permute.xlu0 %825
        %828 = vrot.lane.b32.xlu0 %v806, 12
        %v829 = vpop.permute.xlu0 %828
        %830 = vrot.lane.b32.xlu0 %v807, 12
        %v831 = vpop.permute.xlu0 %830
        %v832 = vsel %vm505, %v829, %v831
        %v833 = vsel %vm505, %v831, %v826
        %v837 = vsel %vm505, %v826, %v829
        %838 = vrot.lane.b32.xlu0 %v808, 11
        %v839 = vpop.permute.xlu0 %838
        %841 = vrot.lane.b32.xlu0 %v806, 11
        %v842 = vpop.permute.xlu0 %841
        %843 = vrot.lane.b32.xlu0 %v807, 11
        %v844 = vpop.permute.xlu0 %843
        %v845 = vsel %vm517, %v842, %v844
        %v846 = vsel %vm517, %v844, %v839
        %v850 = vsel %vm517, %v839, %v842
        %851 = vrot.lane.b32.xlu0 %v808, 1
        %v852 = vpop.permute.xlu0 %851
        %854 = vrot.lane.b32.xlu0 %v806, 1
        %v855 = vpop.permute.xlu0 %854
        %856 = vrot.lane.b32.xlu0 %v807, 1
        %v857 = vpop.permute.xlu0 %856
        %v858 = vsel %vm531, %v855, %v857
        %v859 = vsel %vm531, %v857, %v852
        %v863 = vsel %vm531, %v852, %v855
        %864 = vrot.lane.b32.xlu0 %v806, 127
        %v865 = vpop.permute.xlu0 %864
        %866 = vrot.lane.b32.xlu0 %v807, 127
        %v867 = vpop.permute.xlu0 %866
        %868 = vrot.lane.b32.xlu0 %v808, 127
        %v869 = vpop.permute.xlu0 %868
        %v870 = vsel %vm542, %v865, %v867
        %v871 = vsel %vm542, %v867, %v869
        %v876 = vsel %vm542, %v869, %v865
        %877 = vrot.lane.b32.xlu0 %v806, 117
        %v878 = vpop.permute.xlu0 %877
        %879 = vrot.lane.b32.xlu0 %v807, 117
        %v880 = vpop.permute.xlu0 %879
        %881 = vrot.lane.b32.xlu0 %v808, 117
        %v882 = vpop.permute.xlu0 %881
        %v883 = vsel %vm554, %v878, %v880
        %v884 = vsel %vm554, %v880, %v882
        %v889 = vsel %vm554, %v882, %v878
        %890 = vrot.lane.b32.xlu0 %v806, 116
        %v891 = vpop.permute.xlu0 %890
        %892 = vrot.lane.b32.xlu0 %v807, 116
        %v893 = vpop.permute.xlu0 %892
        %894 = vrot.lane.b32.xlu0 %v808, 116
        %v895 = vpop.permute.xlu0 %894
        %v896 = vsel %vm568, %v891, %v893
        %v897 = vsel %vm568, %v893, %v895
        %v902 = vsel %vm568, %v895, %v891
        %903 = vrot.lane.b32.xlu0 %v806, 115
        %v904 = vpop.permute.xlu0 %903
        %905 = vrot.lane.b32.xlu0 %v807, 115
        %v906 = vpop.permute.xlu0 %905
        %907 = vrot.lane.b32.xlu0 %v808, 115
        %v908 = vpop.permute.xlu0 %907
        %v909 = vsel %vm580, %v904, %v906
        %v910 = vsel %vm580, %v906, %v908
        %v915 = vsel %vm580, %v908, %v904
        %v916 = vld [vmem:[#allocation8] sm:$0xff]
        %v917 = vld [vmem:[#allocation8 + $0x8] sm:$0xff]
        %v918 = vld [vmem:[#allocation10] sm:$0xff]
        %v919 = vld [vmem:[#allocation10 + $0x8] sm:$0xff]
        %921 = vset.pattern.permute.xlu0 0
        %922 = vperm.xlu0 %921, %v918
        %v923 = vpop.permute.xlu0 %922
        %926 = vset.pattern.permute.xlu0 0
        %927 = vperm.xlu0 %926, %v919
        %v928 = vpop.permute.xlu0 %927
        %vm930 = vcmask 588800
        %v932 = vsel %vm930, %v916, 0
        %v935 = vsel %vm930, %v917, 0
        %937 = vmatprep.subr.mxu0 %v819
        %938 = vmatpush1.msra.mxu0 %v824
        %939 = vmatprep.subr.mxu0 %v832
        %940 = vmatpush1.msra.mxu0 %v837
        %941 = vmatprep.subr.mxu0 %v845
        %942 = vmatpush1.msra.mxu0 %v850
        %943 = vmatprep.subr.mxu0 %v858
        %944 = vmatpush1.msra.mxu0 %v863
        %945 = vmatprep.subr.mxu0 %v807
        %946 = vmatpush1.msra.mxu0 %v806
        %947 = vmatprep.subr.mxu0 %v871
        %948 = vmatpush1.msra.mxu0 %v870
        %949 = vmatprep.subr.mxu0 %v884
        %950 = vmatpush1.msra.mxu0 %v883
        %951 = vmatprep.subr.mxu0 %v897
        %952 = vmatpush1.msra.mxu0 %v896
        %953 = vmatprep.subr.mxu0 %v910
        %954 = vmatpush1.msra.mxu0 %v909
        %955 = vmatprep.subr.mxu0 0.0
        %956 = vmatpush1.msra.mxu0 0.0
        %957 = vmatprep.subr.mxu0 0.0
        %958 = vmatpush1.msra.mxu0 0.0
        %959 = vmatprep.subr.mxu0 0.0
        %960 = vmatpush1.msra.mxu0 0.0
        %961 = vmatprep.subr.mxu0 0.0
        %962 = vmatpush1.msra.mxu0 0.0
        %963 = vmatprep.subr.mxu0 0.0
        %964 = vmatpush1.msra.mxu0 0.0
        %965 = vmatprep.subr.mxu0 0.0
        %966 = vmatpush1.msra.mxu0 0.0
        %967 = vmatprep.subr.mxu0 0.0
        %968 = vmatpush1.msra.mxu0 0.0
        %969 = vmatprep.subr.mxu0 0.0
        %970 = vmatpush1.msra.mxu0 0.0
        %971 = vmatprep.subr.mxu0 0.0
        %972 = vmatpush1.msra.mxu0 0.0
        %973 = vmatprep.subr.mxu0 0.0
        %974 = vmatpush1.msra.mxu0 0.0
        %975 = vmatprep.subr.mxu0 0.0
        %976 = vmatpush1.msra.mxu0 0.0
        %977 = vmatprep.subr.mxu0 0.0
        %978 = vmatpush1.msra.mxu0 0.0
        %979 = vmatprep.subr.mxu0 0.0
        %980 = vmatpush1.msra.mxu0 0.0
        %981 = vmatprep.subr.mxu0 0.0
        %982 = vmatpush1.msra.mxu0 0.0
        %983 = vmatprep.subr.mxu0 0.0
        %984 = vmatpush1.msra.mxu0 0.0
        %985 = vmatprep.subr.mxu0 0.0
        %986 = vmatpush1.msra.mxu0 0.0
        %987 = vmatprep.subr.mxu0 0.0
        %988 = vmatpush1.msra.mxu0 0.0
        %989 = vmatprep.subr.mxu0 0.0
        %990 = vmatpush1.msra.mxu0 0.0
        %991 = vmatprep.subr.mxu0 0.0
        %992 = vmatpush1.msra.mxu0 0.0
        %993 = vmatprep.subr.mxu0 0.0
        %994 = vmatpush1.msra.mxu0 0.0
        %995 = vmatprep.subr.mxu0 0.0
        %996 = vmatpush1.msra.mxu0 0.0
        %997 = vmatprep.subr.mxu0 0.0
        %998 = vmatpush1.msra.mxu0 0.0
        %999 = vmatprep.subr.mxu0 0.0
        %1000 = vmatpush1.msra.mxu0 0.0
        %1001 = vmatprep.mubr.f32.mxu0 0.0
        %1002 = vmatmul.mubr.f32.gmra.mrb[0].mxu0 %v932
        %v1003 = vpop.f32.mrb[0].mxu0
        %v1004 = vadd.f32 %v923, %v1003
        %v1005 = vpop.f32.mrb[0].mxu0
        %v1006 = vadd.f32 %v923, %v1005
        %1007 = vmatprep.mubr.f32.mxu0 0.0
        %1008 = vmatmul.mubr.f32.gmra.mrb[0].mxu0 %v935
        %v1009 = vpop.f32.mrb[0].mxu0
        %v1010 = vadd.f32 %v928, %v1009
        %v1011 = vpop.f32.mrb[0].mxu0
        %v1012 = vadd.f32 %v928, %v1011
        %1013 = vdwg.mxu0
        %1014 = vmatprep.subr.mxu0 0.0
        %1015 = vmatpush1.msra.mxu0 %v820
        %1016 = vmatprep.subr.mxu0 0.0
        %1017 = vmatpush1.msra.mxu0 %v833
        %1018 = vmatprep.subr.mxu0 0.0
        %1019 = vmatpush1.msra.mxu0 %v846
        %1020 = vmatprep.subr.mxu0 0.0
        %1021 = vmatpush1.msra.mxu0 %v859
        %1022 = vmatprep.subr.mxu0 0.0
        %1023 = vmatpush1.msra.mxu0 %v808
        %1024 = vmatprep.subr.mxu0 0.0
        %1025 = vmatpush1.msra.mxu0 %v876
        %1026 = vmatprep.subr.mxu0 0.0
        %1027 = vmatpush1.msra.mxu0 %v889
        %1028 = vmatprep.subr.mxu0 0.0
        %1029 = vmatpush1.msra.mxu0 %v902
        %1030 = vmatprep.subr.mxu0 0.0
        %1031 = vmatpush1.msra.mxu0 %v915
        %1032 = vmatprep.subr.mxu0 0.0
        %1033 = vmatpush1.msra.mxu0 0.0
        %1034 = vmatprep.subr.mxu0 0.0
        %1035 = vmatpush1.msra.mxu0 0.0
        %1036 = vmatprep.subr.mxu0 0.0
        %1037 = vmatpush1.msra.mxu0 0.0
        %1038 = vmatprep.subr.mxu0 0.0
        %1039 = vmatpush1.msra.mxu0 0.0
        %1040 = vmatprep.subr.mxu0 0.0
        %1041 = vmatpush1.msra.mxu0 0.0
        %1042 = vmatprep.subr.mxu0 0.0
        %1043 = vmatpush1.msra.mxu0 0.0
        %1044 = vmatprep.subr.mxu0 0.0
        %1045 = vmatpush1.msra.mxu0 0.0
        %1046 = vmatprep.subr.mxu0 0.0
        %1047 = vmatpush1.msra.mxu0 0.0
        %1048 = vmatprep.subr.mxu0 0.0
        %1049 = vmatpush1.msra.mxu0 0.0
        %1050 = vmatprep.subr.mxu0 0.0
        %1051 = vmatpush1.msra.mxu0 0.0
        %1052 = vmatprep.subr.mxu0 0.0
        %1053 = vmatpush1.msra.mxu0 0.0
        %1054 = vmatprep.subr.mxu0 0.0
        %1055 = vmatpush1.msra.mxu0 0.0
        %1056 = vmatprep.subr.mxu0 0.0
        %1057 = vmatpush1.msra.mxu0 0.0
        %1058 = vmatprep.subr.mxu0 0.0
        %1059 = vmatpush1.msra.mxu0 0.0
        %1060 = vmatprep.subr.mxu0 0.0
        %1061 = vmatpush1.msra.mxu0 0.0
        %1062 = vmatprep.subr.mxu0 0.0
        %1063 = vmatpush1.msra.mxu0 0.0
        %1064 = vmatprep.subr.mxu0 0.0
        %1065 = vmatpush1.msra.mxu0 0.0
        %1066 = vmatprep.subr.mxu0 0.0
        %1067 = vmatpush1.msra.mxu0 0.0
        %1068 = vmatprep.subr.mxu0 0.0
        %1069 = vmatpush1.msra.mxu0 0.0
        %1070 = vmatprep.subr.mxu0 0.0
        %1071 = vmatpush1.msra.mxu0 0.0
        %1072 = vmatprep.subr.mxu0 0.0
        %1073 = vmatpush1.msra.mxu0 0.0
        %1074 = vmatprep.subr.mxu0 0.0
        %1075 = vmatpush1.msra.mxu0 0.0
        %1076 = vmatprep.subr.mxu0 0.0
        %1077 = vmatpush1.msra.mxu0 0.0
        %1078 = vmatprep.mubr.f32.mxu0 0.0
        %1079 = vmatmul.mubr.f32.gmra.mrb[0].mxu0 %v932
        %v1080 = vpop.f32.mrb[0].mxu0
        %v1081 = vadd.f32 %v923, %v1080
        %v1082 = vpop.f32.mrb[0].mxu0
        %1083 = vmatprep.mubr.f32.mxu0 0.0
        %1084 = vmatmul.mubr.f32.gmra.mrb[0].mxu0 %v935
        %v1085 = vpop.f32.mrb[0].mxu0
        %v1086 = vadd.f32 %v928, %v1085
        %v1087 = vpop.f32.mrb[0].mxu0
        %1088 = vdwg.mxu0
        %v1089 = vmax.f32 %v1004, 0.0
        %v1090 = vmax.f32 %v1006, 0.0
        %v1091 = vmax.f32 %v1081, 0.0
        %v1092 = vmax.f32 %v1010, 0.0
        %v1093 = vmax.f32 %v1012, 0.0
        %v1094 = vmax.f32 %v1086, 0.0
        %v1095 = vmul.f32 %v1089, %v794
        %v1096 = vmul.f32 %v1090, %v798
        %v1097 = vmul.f32 %v1091, %v802
        %v1098 = vmul.f32 %v1092, %v794
        %v1099 = vmul.f32 %v1093, %v798
        %v1100 = vmul.f32 %v1094, %v802
        %v1101 = vld [vmem:[#allocation13] sm:$0x1]
        %v1102 = vld [vmem:[#allocation11] sm:$0xff]
        %v1103 = vld [vmem:[#allocation11 + $0x8] sm:$0xff]
        %v1104 = vld [vmem:[#allocation11 + $0x10] sm:$0xff]
        %v1105 = vld [vmem:[#allocation11 + $0x18] sm:$0xff]
        %v1106 = vld [vmem:[#allocation11 + $0x20] sm:$0xff]
        %v1107 = vld [vmem:[#allocation11 + $0x28] sm:$0xff]
        %v1108 = vld [vmem:[#allocation11 + $0x30] sm:$0xff]
        %v1109 = vld [vmem:[#allocation11 + $0x38] sm:$0xff]
        %v1110 = vld [vmem:[#allocation11 + $0x40] sm:$0xff]
        %v1111 = vld [vmem:[#allocation11 + $0x48] sm:$0xff]
        %v1112 = vld [vmem:[#allocation11 + $0x50] sm:$0xff]
        %v1113 = vld [vmem:[#allocation11 + $0x58] sm:$0xff]
        %v1114 = vld [vmem:[#allocation11 + $0x60] sm:$0xff]
        %v1115 = vld [vmem:[#allocation11 + $0x68] sm:$0xff]
        %v1116 = vld [vmem:[#allocation11 + $0x70] sm:$0xff]
        %v1117 = vld [vmem:[#allocation11 + $0x78] sm:$0xff]
        %v1118 = vld [vmem:[#allocation11 + $0x80] sm:$0xff]
        %v1119 = vld [vmem:[#allocation11 + $0x88] sm:$0xff]
        %v1120 = vld [vmem:[#allocation11 + $0x90] sm:$0xff]
        %v1121 = vld [vmem:[#allocation11 + $0x98] sm:$0xff]
        %v1122 = vld [vmem:[#allocation11 + $0xa0] sm:$0xff]
        %v1123 = vld [vmem:[#allocation11 + $0xa8] sm:$0xff]
        %v1124 = vld [vmem:[#allocation11 + $0xb0] sm:$0xff]
        %v1125 = vld [vmem:[#allocation11 + $0xb8] sm:$0xff]
        %v1126 = vld [vmem:[#allocation11 + $0xc0] sm:$0xff]
        %v1127 = vld [vmem:[#allocation11 + $0xc8] sm:$0xff]
        %v1128 = vld [vmem:[#allocation11 + $0xd0] sm:$0xff]
        %v1129 = vld [vmem:[#allocation11 + $0xd8] sm:$0xff]
        %v1130 = vld [vmem:[#allocation11 + $0xe0] sm:$0xff]
        %v1131 = vld [vmem:[#allocation11 + $0xe8] sm:$0xff]
        %v1132 = vld [vmem:[#allocation11 + $0xf0] sm:$0xff]
        %v1133 = vld [vmem:[#allocation11 + $0xf8] sm:$0xff]
        %v1134 = vld [vmem:[#allocation11 + $0x100] sm:$0xff]
        %v1135 = vld [vmem:[#allocation11 + $0x108] sm:$0xff]
        %v1136 = vld [vmem:[#allocation11 + $0x110] sm:$0xff]
        %v1137 = vld [vmem:[#allocation11 + $0x118] sm:$0xff]
        %v1138 = vld [vmem:[#allocation11 + $0x120] sm:$0xff]
        %v1139 = vld [vmem:[#allocation11 + $0x128] sm:$0xff]
        %v1140 = vld [vmem:[#allocation11 + $0x130] sm:$0xff]
        %v1141 = vld [vmem:[#allocation11 + $0x138] sm:$0xff]
        %v1142 = vld [vmem:[#allocation11 + $0x140] sm:$0xff]
        %v1143 = vld [vmem:[#allocation11 + $0x148] sm:$0xff]
        %v1144 = vld [vmem:[#allocation11 + $0x150] sm:$0xff]
        %v1145 = vld [vmem:[#allocation11 + $0x158] sm:$0xff]
        %v1146 = vld [vmem:[#allocation11 + $0x160] sm:$0xff]
        %v1147 = vld [vmem:[#allocation11 + $0x168] sm:$0xff]
        %v1148 = vld [vmem:[#allocation11 + $0x170] sm:$0xff]
        %v1149 = vld [vmem:[#allocation11 + $0x178] sm:$0xff]
        %1150 = vmatprep.subr.mxu0 0.0
        %1151 = vmatpush1.msra.mxu0 %v1102
        %1152 = vmatprep.subr.mxu0 0.0
        %1153 = vmatpush1.msra.mxu0 %v1103
        %1154 = vmatprep.subr.mxu0 0.0
        %1155 = vmatpush1.msra.mxu0 %v1104
        %1156 = vmatprep.subr.mxu0 0.0
        %1157 = vmatpush1.msra.mxu0 %v1105
        %1158 = vmatprep.subr.mxu0 0.0
        %1159 = vmatpush1.msra.mxu0 %v1106
        %1160 = vmatprep.subr.mxu0 0.0
        %1161 = vmatpush1.msra.mxu0 %v1107
        %1162 = vmatprep.subr.mxu0 0.0
        %1163 = vmatpush1.msra.mxu0 %v1108
        %1164 = vmatprep.subr.mxu0 0.0
        %1165 = vmatpush1.msra.mxu0 %v1109
        %1166 = vmatprep.subr.mxu0 0.0
        %1167 = vmatpush1.msra.mxu0 %v1110
        %1168 = vmatprep.subr.mxu0 0.0
        %1169 = vmatpush1.msra.mxu0 %v1111
        %1170 = vmatprep.subr.mxu0 0.0
        %1171 = vmatpush1.msra.mxu0 %v1112
        %1172 = vmatprep.subr.mxu0 0.0
        %1173 = vmatpush1.msra.mxu0 %v1113
        %1174 = vmatprep.subr.mxu0 0.0
        %1175 = vmatpush1.msra.mxu0 %v1114
        %1176 = vmatprep.subr.mxu0 0.0
        %1177 = vmatpush1.msra.mxu0 %v1115
        %1178 = vmatprep.subr.mxu0 0.0
        %1179 = vmatpush1.msra.mxu0 %v1116
        %1180 = vmatprep.subr.mxu0 0.0
        %1181 = vmatpush1.msra.mxu0 %v1117
        %1182 = vmatprep.subr.mxu0 0.0
        %1183 = vmatpush1.msra.mxu0 %v1118
        %1184 = vmatprep.subr.mxu0 0.0
        %1185 = vmatpush1.msra.mxu0 %v1119
        %1186 = vmatprep.subr.mxu0 0.0
        %1187 = vmatpush1.msra.mxu0 %v1120
        %1188 = vmatprep.subr.mxu0 0.0
        %1189 = vmatpush1.msra.mxu0 %v1121
        %1190 = vmatprep.subr.mxu0 0.0
        %1191 = vmatpush1.msra.mxu0 %v1122
        %1192 = vmatprep.subr.mxu0 0.0
        %1193 = vmatpush1.msra.mxu0 %v1123
        %1194 = vmatprep.subr.mxu0 0.0
        %1195 = vmatpush1.msra.mxu0 %v1124
        %1196 = vmatprep.subr.mxu0 0.0
        %1197 = vmatpush1.msra.mxu0 %v1125
        %1198 = vmatprep.subr.mxu0 0.0
        %1199 = vmatpush1.msra.mxu0 %v1126
        %1200 = vmatprep.subr.mxu0 0.0
        %1201 = vmatpush1.msra.mxu0 %v1127
        %1202 = vmatprep.subr.mxu0 0.0
        %1203 = vmatpush1.msra.mxu0 %v1128
        %1204 = vmatprep.subr.mxu0 0.0
        %1205 = vmatpush1.msra.mxu0 %v1129
        %1206 = vmatprep.subr.mxu0 0.0
        %1207 = vmatpush1.msra.mxu0 %v1130
        %1208 = vmatprep.subr.mxu0 0.0
        %1209 = vmatpush1.msra.mxu0 %v1131
        %1210 = vmatprep.subr.mxu0 0.0
        %1211 = vmatpush1.msra.mxu0 %v1132
        %1212 = vmatprep.subr.mxu0 0.0
        %1213 = vmatpush1.msra.mxu0 %v1133
        %1214 = vmatprep.mubr.f32.mxu0 %v1096
        %1215 = vmatmul.mubr.f32.gmra.mrb[0].mxu0 %v1095
        %v1216 = vpop.f32.mrb[0].mxu0
        %v1217 = vadd.f32 0.0, %v1216
        %v1218 = vpop.f32.mrb[0].mxu0
        %1219 = vdwg.mxu0
        %1220 = vmatprep.subr.mxu0 0.0
        %1221 = vmatpush1.msra.mxu0 %v1134
        %1222 = vmatprep.subr.mxu0 0.0
        %1223 = vmatpush1.msra.mxu0 %v1135
        %1224 = vmatprep.subr.mxu0 0.0
        %1225 = vmatpush1.msra.mxu0 %v1136
        %1226 = vmatprep.subr.mxu0 0.0
        %1227 = vmatpush1.msra.mxu0 %v1137
        %1228 = vmatprep.subr.mxu0 0.0
        %1229 = vmatpush1.msra.mxu0 %v1138
        %1230 = vmatprep.subr.mxu0 0.0
        %1231 = vmatpush1.msra.mxu0 %v1139
        %1232 = vmatprep.subr.mxu0 0.0
        %1233 = vmatpush1.msra.mxu0 %v1140
        %1234 = vmatprep.subr.mxu0 0.0
        %1235 = vmatpush1.msra.mxu0 %v1141
        %1236 = vmatprep.subr.mxu0 0.0
        %1237 = vmatpush1.msra.mxu0 %v1142
        %1238 = vmatprep.subr.mxu0 0.0
        %1239 = vmatpush1.msra.mxu0 %v1143
        %1240 = vmatprep.subr.mxu0 0.0
        %1241 = vmatpush1.msra.mxu0 %v1144
        %1242 = vmatprep.subr.mxu0 0.0
        %1243 = vmatpush1.msra.mxu0 %v1145
        %1244 = vmatprep.subr.mxu0 0.0
        %1245 = vmatpush1.msra.mxu0 %v1146
        %1246 = vmatprep.subr.mxu0 0.0
        %1247 = vmatpush1.msra.mxu0 %v1147
        %1248 = vmatprep.subr.mxu0 0.0
        %1249 = vmatpush1.msra.mxu0 %v1148
        %1250 = vmatprep.subr.mxu0 0.0
        %1251 = vmatpush1.msra.mxu0 %v1149
        %1252 = vmatprep.subr.mxu0 0.0
        %1253 = vmatpush1.msra.mxu0 0.0
        %1254 = vmatprep.subr.mxu0 0.0
        %1255 = vmatpush1.msra.mxu0 0.0
        %1256 = vmatprep.subr.mxu0 0.0
        %1257 = vmatpush1.msra.mxu0 0.0
        %1258 = vmatprep.subr.mxu0 0.0
        %1259 = vmatpush1.msra.mxu0 0.0
        %1260 = vmatprep.subr.mxu0 0.0
        %1261 = vmatpush1.msra.mxu0 0.0
        %1262 = vmatprep.subr.mxu0 0.0
        %1263 = vmatpush1.msra.mxu0 0.0
        %1264 = vmatprep.subr.mxu0 0.0
        %1265 = vmatpush1.msra.mxu0 0.0
        %1266 = vmatprep.subr.mxu0 0.0
        %1267 = vmatpush1.msra.mxu0 0.0
        %1268 = vmatprep.subr.mxu0 0.0
        %1269 = vmatpush1.msra.mxu0 0.0
        %1270 = vmatprep.subr.mxu0 0.0
        %1271 = vmatpush1.msra.mxu0 0.0
        %1272 = vmatprep.subr.mxu0 0.0
        %1273 = vmatpush1.msra.mxu0 0.0
        %1274 = vmatprep.subr.mxu0 0.0
        %1275 = vmatpush1.msra.mxu0 0.0
        %1276 = vmatprep.subr.mxu0 0.0
        %1277 = vmatpush1.msra.mxu0 0.0
        %1278 = vmatprep.subr.mxu0 0.0
        %1279 = vmatpush1.msra.mxu0 0.0
        %1280 = vmatprep.subr.mxu0 0.0
        %1281 = vmatpush1.msra.mxu0 0.0
        %1282 = vmatprep.subr.mxu0 0.0
        %1283 = vmatpush1.msra.mxu0 0.0
        %1284 = vmatprep.mubr.f32.mxu0 0.0
        %1285 = vmatmul.mubr.f32.gmra.mrb[0].mxu0 %v1097
        %v1286 = vpop.f32.mrb[0].mxu0
        %v1287 = vadd.f32 %v1217, %v1286
        %v1288 = vpop.f32.mrb[0].mxu0
        %1289 = vdwg.mxu0
        %v1290 = vadd.f32 %v1101, %v1287
        %s1291 = scalar_lea.vmem [#allocation11], 384
        %v1292 = vld [vmem:[%s1291] sm:$0xff]
        %v1293 = vld [vmem:[%s1291 + $0x8] sm:$0xff]
        %v1294 = vld [vmem:[%s1291 + $0x10] sm:$0xff]
        %v1295 = vld [vmem:[%s1291 + $0x18] sm:$0xff]
        %v1296 = vld [vmem:[%s1291 + $0x20] sm:$0xff]
        %v1297 = vld [vmem:[%s1291 + $0x28] sm:$0xff]
        %v1298 = vld [vmem:[%s1291 + $0x30] sm:$0xff]
        %v1299 = vld [vmem:[%s1291 + $0x38] sm:$0xff]
        %v1300 = vld [vmem:[%s1291 + $0x40] sm:$0xff]
        %v1301 = vld [vmem:[%s1291 + $0x48] sm:$0xff]
        %v1302 = vld [vmem:[%s1291 + $0x50] sm:$0xff]
        %v1303 = vld [vmem:[%s1291 + $0x58] sm:$0xff]
        %v1304 = vld [vmem:[%s1291 + $0x60] sm:$0xff]
        %v1305 = vld [vmem:[%s1291 + $0x68] sm:$0xff]
        %v1306 = vld [vmem:[%s1291 + $0x70] sm:$0xff]
        %v1307 = vld [vmem:[%s1291 + $0x78] sm:$0xff]
        %v1308 = vld [vmem:[%s1291 + $0x80] sm:$0xff]
        %v1309 = vld [vmem:[%s1291 + $0x88] sm:$0xff]
        %v1310 = vld [vmem:[%s1291 + $0x90] sm:$0xff]
        %v1311 = vld [vmem:[%s1291 + $0x98] sm:$0xff]
        %v1312 = vld [vmem:[%s1291 + $0xa0] sm:$0xff]
        %v1313 = vld [vmem:[%s1291 + $0xa8] sm:$0xff]
        %v1314 = vld [vmem:[%s1291 + $0xb0] sm:$0xff]
        %v1315 = vld [vmem:[%s1291 + $0xb8] sm:$0xff]
        %v1316 = vld [vmem:[%s1291 + $0xc0] sm:$0xff]
        %v1317 = vld [vmem:[%s1291 + $0xc8] sm:$0xff]
        %v1318 = vld [vmem:[%s1291 + $0xd0] sm:$0xff]
        %v1319 = vld [vmem:[%s1291 + $0xd8] sm:$0xff]
        %v1320 = vld [vmem:[%s1291 + $0xe0] sm:$0xff]
        %v1321 = vld [vmem:[%s1291 + $0xe8] sm:$0xff]
        %v1322 = vld [vmem:[%s1291 + $0xf0] sm:$0xff]
        %v1323 = vld [vmem:[%s1291 + $0xf8] sm:$0xff]
        %v1324 = vld [vmem:[%s1291 + $0x100] sm:$0xff]
        %v1325 = vld [vmem:[%s1291 + $0x108] sm:$0xff]
        %v1326 = vld [vmem:[%s1291 + $0x110] sm:$0xff]
        %v1327 = vld [vmem:[%s1291 + $0x118] sm:$0xff]
        %v1328 = vld [vmem:[%s1291 + $0x120] sm:$0xff]
        %v1329 = vld [vmem:[%s1291 + $0x128] sm:$0xff]
        %v1330 = vld [vmem:[%s1291 + $0x130] sm:$0xff]
        %v1331 = vld [vmem:[%s1291 + $0x138] sm:$0xff]
        %v1332 = vld [vmem:[%s1291 + $0x140] sm:$0xff]
        %v1333 = vld [vmem:[%s1291 + $0x148] sm:$0xff]
        %v1334 = vld [vmem:[%s1291 + $0x150] sm:$0xff]
        %v1335 = vld [vmem:[%s1291 + $0x158] sm:$0xff]
        %v1336 = vld [vmem:[%s1291 + $0x160] sm:$0xff]
        %v1337 = vld [vmem:[%s1291 + $0x168] sm:$0xff]
        %v1338 = vld [vmem:[%s1291 + $0x170] sm:$0xff]
        %v1339 = vld [vmem:[%s1291 + $0x178] sm:$0xff]
        %v1343 = vrot.slane %v1095, 1
        %v1344 = vrot.slane %v1096, 1
        %v1345 = vrot.slane %v1097, 1
        %1349 = vmatprep.subr.mxu0 0.0
        %1350 = vmatpush1.msra.mxu0 %v1292
        %1351 = vmatprep.subr.mxu0 0.0
        %1352 = vmatpush1.msra.mxu0 %v1293
        %1353 = vmatprep.subr.mxu0 0.0
        %1354 = vmatpush1.msra.mxu0 %v1294
        %1355 = vmatprep.subr.mxu0 0.0
        %1356 = vmatpush1.msra.mxu0 %v1295
        %1357 = vmatprep.subr.mxu0 0.0
        %1358 = vmatpush1.msra.mxu0 %v1296
        %1359 = vmatprep.subr.mxu0 0.0
        %1360 = vmatpush1.msra.mxu0 %v1297
        %1361 = vmatprep.subr.mxu0 0.0
        %1362 = vmatpush1.msra.mxu0 %v1298
        %1363 = vmatprep.subr.mxu0 0.0
        %1364 = vmatpush1.msra.mxu0 %v1299
        %1365 = vmatprep.subr.mxu0 0.0
        %1366 = vmatpush1.msra.mxu0 %v1300
        %1367 = vmatprep.subr.mxu0 0.0
        %1368 = vmatpush1.msra.mxu0 %v1301
        %1369 = vmatprep.subr.mxu0 0.0
        %1370 = vmatpush1.msra.mxu0 %v1302
        %1371 = vmatprep.subr.mxu0 0.0
        %1372 = vmatpush1.msra.mxu0 %v1303
        %1373 = vmatprep.subr.mxu0 0.0
        %1374 = vmatpush1.msra.mxu0 %v1304
        %1375 = vmatprep.subr.mxu0 0.0
        %1376 = vmatpush1.msra.mxu0 %v1305
        %1377 = vmatprep.subr.mxu0 0.0
        %1378 = vmatpush1.msra.mxu0 %v1306
        %1379 = vmatprep.subr.mxu0 0.0
        %1380 = vmatpush1.msra.mxu0 %v1307
        %1381 = vmatprep.subr.mxu0 0.0
        %1382 = vmatpush1.msra.mxu0 %v1308
        %1383 = vmatprep.subr.mxu0 0.0
        %1384 = vmatpush1.msra.mxu0 %v1309
        %1385 = vmatprep.subr.mxu0 0.0
        %1386 = vmatpush1.msra.mxu0 %v1310
        %1387 = vmatprep.subr.mxu0 0.0
        %1388 = vmatpush1.msra.mxu0 %v1311
        %1389 = vmatprep.subr.mxu0 0.0
        %1390 = vmatpush1.msra.mxu0 %v1312
        %1391 = vmatprep.subr.mxu0 0.0
        %1392 = vmatpush1.msra.mxu0 %v1313
        %1393 = vmatprep.subr.mxu0 0.0
        %1394 = vmatpush1.msra.mxu0 %v1314
        %1395 = vmatprep.subr.mxu0 0.0
        %1396 = vmatpush1.msra.mxu0 %v1315
        %1397 = vmatprep.subr.mxu0 0.0
        %1398 = vmatpush1.msra.mxu0 %v1316
        %1399 = vmatprep.subr.mxu0 0.0
        %1400 = vmatpush1.msra.mxu0 %v1317
        %1401 = vmatprep.subr.mxu0 0.0
        %1402 = vmatpush1.msra.mxu0 %v1318
        %1403 = vmatprep.subr.mxu0 0.0
        %1404 = vmatpush1.msra.mxu0 %v1319
        %1405 = vmatprep.subr.mxu0 0.0
        %1406 = vmatpush1.msra.mxu0 %v1320
        %1407 = vmatprep.subr.mxu0 0.0
        %1408 = vmatpush1.msra.mxu0 %v1321
        %1409 = vmatprep.subr.mxu0 0.0
        %1410 = vmatpush1.msra.mxu0 %v1322
        %1411 = vmatprep.subr.mxu0 0.0
        %1412 = vmatpush1.msra.mxu0 %v1323
        %1413 = vmatprep.mubr.f32.mxu0 %v1344
        %1414 = vmatmul.mubr.f32.gmra.mrb[0].mxu0 %v1343
        %v1415 = vpop.f32.mrb[0].mxu0
        %v1416 = vadd.f32 0.0, %v1415
        %v1417 = vpop.f32.mrb[0].mxu0
        %1418 = vdwg.mxu0
        %1419 = vmatprep.subr.mxu0 0.0
        %1420 = vmatpush1.msra.mxu0 %v1324
        %1421 = vmatprep.subr.mxu0 0.0
        %1422 = vmatpush1.msra.mxu0 %v1325
        %1423 = vmatprep.subr.mxu0 0.0
        %1424 = vmatpush1.msra.mxu0 %v1326
        %1425 = vmatprep.subr.mxu0 0.0
        %1426 = vmatpush1.msra.mxu0 %v1327
        %1427 = vmatprep.subr.mxu0 0.0
        %1428 = vmatpush1.msra.mxu0 %v1328
        %1429 = vmatprep.subr.mxu0 0.0
        %1430 = vmatpush1.msra.mxu0 %v1329
        %1431 = vmatprep.subr.mxu0 0.0
        %1432 = vmatpush1.msra.mxu0 %v1330
        %1433 = vmatprep.subr.mxu0 0.0
        %1434 = vmatpush1.msra.mxu0 %v1331
        %1435 = vmatprep.subr.mxu0 0.0
        %1436 = vmatpush1.msra.mxu0 %v1332
        %1437 = vmatprep.subr.mxu0 0.0
        %1438 = vmatpush1.msra.mxu0 %v1333
        %1439 = vmatprep.subr.mxu0 0.0
        %1440 = vmatpush1.msra.mxu0 %v1334
        %1441 = vmatprep.subr.mxu0 0.0
        %1442 = vmatpush1.msra.mxu0 %v1335
        %1443 = vmatprep.subr.mxu0 0.0
        %1444 = vmatpush1.msra.mxu0 %v1336
        %1445 = vmatprep.subr.mxu0 0.0
        %1446 = vmatpush1.msra.mxu0 %v1337
        %1447 = vmatprep.subr.mxu0 0.0
        %1448 = vmatpush1.msra.mxu0 %v1338
        %1449 = vmatprep.subr.mxu0 0.0
        %1450 = vmatpush1.msra.mxu0 %v1339
        %1451 = vmatprep.subr.mxu0 0.0
        %1452 = vmatpush1.msra.mxu0 0.0
        %1453 = vmatprep.subr.mxu0 0.0
        %1454 = vmatpush1.msra.mxu0 0.0
        %1455 = vmatprep.subr.mxu0 0.0
        %1456 = vmatpush1.msra.mxu0 0.0
        %1457 = vmatprep.subr.mxu0 0.0
        %1458 = vmatpush1.msra.mxu0 0.0
        %1459 = vmatprep.subr.mxu0 0.0
        %1460 = vmatpush1.msra.mxu0 0.0
        %1461 = vmatprep.subr.mxu0 0.0
        %1462 = vmatpush1.msra.mxu0 0.0
        %1463 = vmatprep.subr.mxu0 0.0
        %1464 = vmatpush1.msra.mxu0 0.0
        %1465 = vmatprep.subr.mxu0 0.0
        %1466 = vmatpush1.msra.mxu0 0.0
        %1467 = vmatprep.subr.mxu0 0.0
        %1468 = vmatpush1.msra.mxu0 0.0
        %1469 = vmatprep.subr.mxu0 0.0
        %1470 = vmatpush1.msra.mxu0 0.0
        %1471 = vmatprep.subr.mxu0 0.0
        %1472 = vmatpush1.msra.mxu0 0.0
        %1473 = vmatprep.subr.mxu0 0.0
        %1474 = vmatpush1.msra.mxu0 0.0
        %1475 = vmatprep.subr.mxu0 0.0
        %1476 = vmatpush1.msra.mxu0 0.0
        %1477 = vmatprep.subr.mxu0 0.0
        %1478 = vmatpush1.msra.mxu0 0.0
        %1479 = vmatprep.subr.mxu0 0.0
        %1480 = vmatpush1.msra.mxu0 0.0
        %1481 = vmatprep.subr.mxu0 0.0
        %1482 = vmatpush1.msra.mxu0 0.0
        %1483 = vmatprep.mubr.f32.mxu0 0.0
        %1484 = vmatmul.mubr.f32.gmra.mrb[0].mxu0 %v1345
        %v1485 = vpop.f32.mrb[0].mxu0
        %v1486 = vadd.f32 %v1416, %v1485
        %v1487 = vpop.f32.mrb[0].mxu0
        %1488 = vdwg.mxu0
        %v1489 = vadd.f32 %v1290, %v1486
        %s1490 = scalar_lea.vmem [#allocation11], 768
        %v1491 = vld [vmem:[%s1490] sm:$0xff]
        %v1492 = vld [vmem:[%s1490 + $0x8] sm:$0xff]
        %v1493 = vld [vmem:[%s1490 + $0x10] sm:$0xff]
        %v1494 = vld [vmem:[%s1490 + $0x18] sm:$0xff]
        %v1495 = vld [vmem:[%s1490 + $0x20] sm:$0xff]
        %v1496 = vld [vmem:[%s1490 + $0x28] sm:$0xff]
        %v1497 = vld [vmem:[%s1490 + $0x30] sm:$0xff]
        %v1498 = vld [vmem:[%s1490 + $0x38] sm:$0xff]
        %v1499 = vld [vmem:[%s1490 + $0x40] sm:$0xff]
        %v1500 = vld [vmem:[%s1490 + $0x48] sm:$0xff]
        %v1501 = vld [vmem:[%s1490 + $0x50] sm:$0xff]
        %v1502 = vld [vmem:[%s1490 + $0x58] sm:$0xff]
        %v1503 = vld [vmem:[%s1490 + $0x60] sm:$0xff]
        %v1504 = vld [vmem:[%s1490 + $0x68] sm:$0xff]
        %v1505 = vld [vmem:[%s1490 + $0x70] sm:$0xff]
        %v1506 = vld [vmem:[%s1490 + $0x78] sm:$0xff]
        %v1507 = vld [vmem:[%s1490 + $0x80] sm:$0xff]
        %v1508 = vld [vmem:[%s1490 + $0x88] sm:$0xff]
        %v1509 = vld [vmem:[%s1490 + $0x90] sm:$0xff]
        %v1510 = vld [vmem:[%s1490 + $0x98] sm:$0xff]
        %v1511 = vld [vmem:[%s1490 + $0xa0] sm:$0xff]
        %v1512 = vld [vmem:[%s1490 + $0xa8] sm:$0xff]
        %v1513 = vld [vmem:[%s1490 + $0xb0] sm:$0xff]
        %v1514 = vld [vmem:[%s1490 + $0xb8] sm:$0xff]
        %v1515 = vld [vmem:[%s1490 + $0xc0] sm:$0xff]
        %v1516 = vld [vmem:[%s1490 + $0xc8] sm:$0xff]
        %v1517 = vld [vmem:[%s1490 + $0xd0] sm:$0xff]
        %v1518 = vld [vmem:[%s1490 + $0xd8] sm:$0xff]
        %v1519 = vld [vmem:[%s1490 + $0xe0] sm:$0xff]
        %v1520 = vld [vmem:[%s1490 + $0xe8] sm:$0xff]
        %v1521 = vld [vmem:[%s1490 + $0xf0] sm:$0xff]
        %v1522 = vld [vmem:[%s1490 + $0xf8] sm:$0xff]
        %v1523 = vld [vmem:[%s1490 + $0x100] sm:$0xff]
        %v1524 = vld [vmem:[%s1490 + $0x108] sm:$0xff]
        %v1525 = vld [vmem:[%s1490 + $0x110] sm:$0xff]
        %v1526 = vld [vmem:[%s1490 + $0x118] sm:$0xff]
        %v1527 = vld [vmem:[%s1490 + $0x120] sm:$0xff]
        %v1528 = vld [vmem:[%s1490 + $0x128] sm:$0xff]
        %v1529 = vld [vmem:[%s1490 + $0x130] sm:$0xff]
        %v1530 = vld [vmem:[%s1490 + $0x138] sm:$0xff]
        %v1531 = vld [vmem:[%s1490 + $0x140] sm:$0xff]
        %v1532 = vld [vmem:[%s1490 + $0x148] sm:$0xff]
        %v1533 = vld [vmem:[%s1490 + $0x150] sm:$0xff]
        %v1534 = vld [vmem:[%s1490 + $0x158] sm:$0xff]
        %v1535 = vld [vmem:[%s1490 + $0x160] sm:$0xff]
        %v1536 = vld [vmem:[%s1490 + $0x168] sm:$0xff]
        %v1537 = vld [vmem:[%s1490 + $0x170] sm:$0xff]
        %v1538 = vld [vmem:[%s1490 + $0x178] sm:$0xff]
        %v1539 = vrot.slane %v1095, 2
        %v1540 = vrot.slane %v1096, 2
        %v1541 = vrot.slane %v1097, 2
        %1545 = vmatprep.subr.mxu0 0.0
        %1546 = vmatpush1.msra.mxu0 %v1491
        %1547 = vmatprep.subr.mxu0 0.0
        %1548 = vmatpush1.msra.mxu0 %v1492
        %1549 = vmatprep.subr.mxu0 0.0
        %1550 = vmatpush1.msra.mxu0 %v1493
        %1551 = vmatprep.subr.mxu0 0.0
        %1552 = vmatpush1.msra.mxu0 %v1494
        %1553 = vmatprep.subr.mxu0 0.0
        %1554 = vmatpush1.msra.mxu0 %v1495
        %1555 = vmatprep.subr.mxu0 0.0
        %1556 = vmatpush1.msra.mxu0 %v1496
        %1557 = vmatprep.subr.mxu0 0.0
        %1558 = vmatpush1.msra.mxu0 %v1497
        %1559 = vmatprep.subr.mxu0 0.0
        %1560 = vmatpush1.msra.mxu0 %v1498
        %1561 = vmatprep.subr.mxu0 0.0
        %1562 = vmatpush1.msra.mxu0 %v1499
        %1563 = vmatprep.subr.mxu0 0.0
        %1564 = vmatpush1.msra.mxu0 %v1500
        %1565 = vmatprep.subr.mxu0 0.0
        %1566 = vmatpush1.msra.mxu0 %v1501
        %1567 = vmatprep.subr.mxu0 0.0
        %1568 = vmatpush1.msra.mxu0 %v1502
        %1569 = vmatprep.subr.mxu0 0.0
        %1570 = vmatpush1.msra.mxu0 %v1503
        %1571 = vmatprep.subr.mxu0 0.0
        %1572 = vmatpush1.msra.mxu0 %v1504
        %1573 = vmatprep.subr.mxu0 0.0
        %1574 = vmatpush1.msra.mxu0 %v1505
        %1575 = vmatprep.subr.mxu0 0.0
        %1576 = vmatpush1.msra.mxu0 %v1506
        %1577 = vmatprep.subr.mxu0 0.0
        %1578 = vmatpush1.msra.mxu0 %v1507
        %1579 = vmatprep.subr.mxu0 0.0
        %1580 = vmatpush1.msra.mxu0 %v1508
        %1581 = vmatprep.subr.mxu0 0.0
        %1582 = vmatpush1.msra.mxu0 %v1509
        %1583 = vmatprep.subr.mxu0 0.0
        %1584 = vmatpush1.msra.mxu0 %v1510
        %1585 = vmatprep.subr.mxu0 0.0
        %1586 = vmatpush1.msra.mxu0 %v1511
        %1587 = vmatprep.subr.mxu0 0.0
        %1588 = vmatpush1.msra.mxu0 %v1512
        %1589 = vmatprep.subr.mxu0 0.0
        %1590 = vmatpush1.msra.mxu0 %v1513
        %1591 = vmatprep.subr.mxu0 0.0
        %1592 = vmatpush1.msra.mxu0 %v1514
        %1593 = vmatprep.subr.mxu0 0.0
        %1594 = vmatpush1.msra.mxu0 %v1515
        %1595 = vmatprep.subr.mxu0 0.0
        %1596 = vmatpush1.msra.mxu0 %v1516
        %1597 = vmatprep.subr.mxu0 0.0
        %1598 = vmatpush1.msra.mxu0 %v1517
        %1599 = vmatprep.subr.mxu0 0.0
        %1600 = vmatpush1.msra.mxu0 %v1518
        %1601 = vmatprep.subr.mxu0 0.0
        %1602 = vmatpush1.msra.mxu0 %v1519
        %1603 = vmatprep.subr.mxu0 0.0
        %1604 = vmatpush1.msra.mxu0 %v1520
        %1605 = vmatprep.subr.mxu0 0.0
        %1606 = vmatpush1.msra.mxu0 %v1521
        %1607 = vmatprep.subr.mxu0 0.0
        %1608 = vmatpush1.msra.mxu0 %v1522
        %1609 = vmatprep.mubr.f32.mxu0 %v1540
        %1610 = vmatmul.mubr.f32.gmra.mrb[0].mxu0 %v1539
        %v1611 = vpop.f32.mrb[0].mxu0
        %v1612 = vadd.f32 0.0, %v1611
        %v1613 = vpop.f32.mrb[0].mxu0
        %1614 = vdwg.mxu0
        %1615 = vmatprep.subr.mxu0 0.0
        %1616 = vmatpush1.msra.mxu0 %v1523
        %1617 = vmatprep.subr.mxu0 0.0
        %1618 = vmatpush1.msra.mxu0 %v1524
        %1619 = vmatprep.subr.mxu0 0.0
        %1620 = vmatpush1.msra.mxu0 %v1525
        %1621 = vmatprep.subr.mxu0 0.0
        %1622 = vmatpush1.msra.mxu0 %v1526
        %1623 = vmatprep.subr.mxu0 0.0
        %1624 = vmatpush1.msra.mxu0 %v1527
        %1625 = vmatprep.subr.mxu0 0.0
        %1626 = vmatpush1.msra.mxu0 %v1528
        %1627 = vmatprep.subr.mxu0 0.0
        %1628 = vmatpush1.msra.mxu0 %v1529
        %1629 = vmatprep.subr.mxu0 0.0
        %1630 = vmatpush1.msra.mxu0 %v1530
        %1631 = vmatprep.subr.mxu0 0.0
        %1632 = vmatpush1.msra.mxu0 %v1531
        %1633 = vmatprep.subr.mxu0 0.0
        %1634 = vmatpush1.msra.mxu0 %v1532
        %1635 = vmatprep.subr.mxu0 0.0
        %1636 = vmatpush1.msra.mxu0 %v1533
        %1637 = vmatprep.subr.mxu0 0.0
        %1638 = vmatpush1.msra.mxu0 %v1534
        %1639 = vmatprep.subr.mxu0 0.0
        %1640 = vmatpush1.msra.mxu0 %v1535
        %1641 = vmatprep.subr.mxu0 0.0
        %1642 = vmatpush1.msra.mxu0 %v1536
        %1643 = vmatprep.subr.mxu0 0.0
        %1644 = vmatpush1.msra.mxu0 %v1537
        %1645 = vmatprep.subr.mxu0 0.0
        %1646 = vmatpush1.msra.mxu0 %v1538
        %1647 = vmatprep.subr.mxu0 0.0
        %1648 = vmatpush1.msra.mxu0 0.0
        %1649 = vmatprep.subr.mxu0 0.0
        %1650 = vmatpush1.msra.mxu0 0.0
        %1651 = vmatprep.subr.mxu0 0.0
        %1652 = vmatpush1.msra.mxu0 0.0
        %1653 = vmatprep.subr.mxu0 0.0
        %1654 = vmatpush1.msra.mxu0 0.0
        %1655 = vmatprep.subr.mxu0 0.0
        %1656 = vmatpush1.msra.mxu0 0.0
        %1657 = vmatprep.subr.mxu0 0.0
        %1658 = vmatpush1.msra.mxu0 0.0
        %1659 = vmatprep.subr.mxu0 0.0
        %1660 = vmatpush1.msra.mxu0 0.0
        %1661 = vmatprep.subr.mxu0 0.0
        %1662 = vmatpush1.msra.mxu0 0.0
        %1663 = vmatprep.subr.mxu0 0.0
        %1664 = vmatpush1.msra.mxu0 0.0
        %1665 = vmatprep.subr.mxu0 0.0
        %1666 = vmatpush1.msra.mxu0 0.0
        %1667 = vmatprep.subr.mxu0 0.0
        %1668 = vmatpush1.msra.mxu0 0.0
        %1669 = vmatprep.subr.mxu0 0.0
        %1670 = vmatpush1.msra.mxu0 0.0
        %1671 = vmatprep.subr.mxu0 0.0
        %1672 = vmatpush1.msra.mxu0 0.0
        %1673 = vmatprep.subr.mxu0 0.0
        %1674 = vmatpush1.msra.mxu0 0.0
        %1675 = vmatprep.subr.mxu0 0.0
        %1676 = vmatpush1.msra.mxu0 0.0
        %1677 = vmatprep.subr.mxu0 0.0
        %1678 = vmatpush1.msra.mxu0 0.0
        %1679 = vmatprep.mubr.f32.mxu0 0.0
        %1680 = vmatmul.mubr.f32.gmra.mrb[0].mxu0 %v1541
        %v1681 = vpop.f32.mrb[0].mxu0
        %v1682 = vadd.f32 %v1612, %v1681
        %v1683 = vpop.f32.mrb[0].mxu0
        %1684 = vdwg.mxu0
        %v1685 = vadd.f32 %v1489, %v1682
        %s1686 = scalar_lea.vmem [#allocation11], 1152
        %v1687 = vld [vmem:[%s1686] sm:$0xff]
        %v1688 = vld [vmem:[%s1686 + $0x8] sm:$0xff]
        %v1689 = vld [vmem:[%s1686 + $0x10] sm:$0xff]
        %v1690 = vld [vmem:[%s1686 + $0x18] sm:$0xff]
        %v1691 = vld [vmem:[%s1686 + $0x20] sm:$0xff]
        %v1692 = vld [vmem:[%s1686 + $0x28] sm:$0xff]
        %v1693 = vld [vmem:[%s1686 + $0x30] sm:$0xff]
        %v1694 = vld [vmem:[%s1686 + $0x38] sm:$0xff]
        %v1695 = vld [vmem:[%s1686 + $0x40] sm:$0xff]
        %v1696 = vld [vmem:[%s1686 + $0x48] sm:$0xff]
        %v1697 = vld [vmem:[%s1686 + $0x50] sm:$0xff]
        %v1698 = vld [vmem:[%s1686 + $0x58] sm:$0xff]
        %v1699 = vld [vmem:[%s1686 + $0x60] sm:$0xff]
        %v1700 = vld [vmem:[%s1686 + $0x68] sm:$0xff]
        %v1701 = vld [vmem:[%s1686 + $0x70] sm:$0xff]
        %v1702 = vld [vmem:[%s1686 + $0x78] sm:$0xff]
        %v1703 = vld [vmem:[%s1686 + $0x80] sm:$0xff]
        %v1704 = vld [vmem:[%s1686 + $0x88] sm:$0xff]
        %v1705 = vld [vmem:[%s1686 + $0x90] sm:$0xff]
        %v1706 = vld [vmem:[%s1686 + $0x98] sm:$0xff]
        %v1707 = vld [vmem:[%s1686 + $0xa0] sm:$0xff]
        %v1708 = vld [vmem:[%s1686 + $0xa8] sm:$0xff]
        %v1709 = vld [vmem:[%s1686 + $0xb0] sm:$0xff]
        %v1710 = vld [vmem:[%s1686 + $0xb8] sm:$0xff]
        %v1711 = vld [vmem:[%s1686 + $0xc0] sm:$0xff]
        %v1712 = vld [vmem:[%s1686 + $0xc8] sm:$0xff]
        %v1713 = vld [vmem:[%s1686 + $0xd0] sm:$0xff]
        %v1714 = vld [vmem:[%s1686 + $0xd8] sm:$0xff]
        %v1715 = vld [vmem:[%s1686 + $0xe0] sm:$0xff]
        %v1716 = vld [vmem:[%s1686 + $0xe8] sm:$0xff]
        %v1717 = vld [vmem:[%s1686 + $0xf0] sm:$0xff]
        %v1718 = vld [vmem:[%s1686 + $0xf8] sm:$0xff]
        %v1719 = vld [vmem:[%s1686 + $0x100] sm:$0xff]
        %v1720 = vld [vmem:[%s1686 + $0x108] sm:$0xff]
        %v1721 = vld [vmem:[%s1686 + $0x110] sm:$0xff]
        %v1722 = vld [vmem:[%s1686 + $0x118] sm:$0xff]
        %v1723 = vld [vmem:[%s1686 + $0x120] sm:$0xff]
        %v1724 = vld [vmem:[%s1686 + $0x128] sm:$0xff]
        %v1725 = vld [vmem:[%s1686 + $0x130] sm:$0xff]
        %v1726 = vld [vmem:[%s1686 + $0x138] sm:$0xff]
        %v1727 = vld [vmem:[%s1686 + $0x140] sm:$0xff]
        %v1728 = vld [vmem:[%s1686 + $0x148] sm:$0xff]
        %v1729 = vld [vmem:[%s1686 + $0x150] sm:$0xff]
        %v1730 = vld [vmem:[%s1686 + $0x158] sm:$0xff]
        %v1731 = vld [vmem:[%s1686 + $0x160] sm:$0xff]
        %v1732 = vld [vmem:[%s1686 + $0x168] sm:$0xff]
        %v1733 = vld [vmem:[%s1686 + $0x170] sm:$0xff]
        %v1734 = vld [vmem:[%s1686 + $0x178] sm:$0xff]
        %v1735 = vrot.slane %v1095, 3
        %v1736 = vrot.slane %v1096, 3
        %v1737 = vrot.slane %v1097, 3
        %1741 = vmatprep.subr.mxu0 0.0
        %1742 = vmatpush1.msra.mxu0 %v1687
        %1743 = vmatprep.subr.mxu0 0.0
        %1744 = vmatpush1.msra.mxu0 %v1688
        %1745 = vmatprep.subr.mxu0 0.0
        %1746 = vmatpush1.msra.mxu0 %v1689
        %1747 = vmatprep.subr.mxu0 0.0
        %1748 = vmatpush1.msra.mxu0 %v1690
        %1749 = vmatprep.subr.mxu0 0.0
        %1750 = vmatpush1.msra.mxu0 %v1691
        %1751 = vmatprep.subr.mxu0 0.0
        %1752 = vmatpush1.msra.mxu0 %v1692
        %1753 = vmatprep.subr.mxu0 0.0
        %1754 = vmatpush1.msra.mxu0 %v1693
        %1755 = vmatprep.subr.mxu0 0.0
        %1756 = vmatpush1.msra.mxu0 %v1694
        %1757 = vmatprep.subr.mxu0 0.0
        %1758 = vmatpush1.msra.mxu0 %v1695
        %1759 = vmatprep.subr.mxu0 0.0
        %1760 = vmatpush1.msra.mxu0 %v1696
        %1761 = vmatprep.subr.mxu0 0.0
        %1762 = vmatpush1.msra.mxu0 %v1697
        %1763 = vmatprep.subr.mxu0 0.0
        %1764 = vmatpush1.msra.mxu0 %v1698
        %1765 = vmatprep.subr.mxu0 0.0
        %1766 = vmatpush1.msra.mxu0 %v1699
        %1767 = vmatprep.subr.mxu0 0.0
        %1768 = vmatpush1.msra.mxu0 %v1700
        %1769 = vmatprep.subr.mxu0 0.0
        %1770 = vmatpush1.msra.mxu0 %v1701
        %1771 = vmatprep.subr.mxu0 0.0
        %1772 = vmatpush1.msra.mxu0 %v1702
        %1773 = vmatprep.subr.mxu0 0.0
        %1774 = vmatpush1.msra.mxu0 %v1703
        %1775 = vmatprep.subr.mxu0 0.0
        %1776 = vmatpush1.msra.mxu0 %v1704
        %1777 = vmatprep.subr.mxu0 0.0
        %1778 = vmatpush1.msra.mxu0 %v1705
        %1779 = vmatprep.subr.mxu0 0.0
        %1780 = vmatpush1.msra.mxu0 %v1706
        %1781 = vmatprep.subr.mxu0 0.0
        %1782 = vmatpush1.msra.mxu0 %v1707
        %1783 = vmatprep.subr.mxu0 0.0
        %1784 = vmatpush1.msra.mxu0 %v1708
        %1785 = vmatprep.subr.mxu0 0.0
        %1786 = vmatpush1.msra.mxu0 %v1709
        %1787 = vmatprep.subr.mxu0 0.0
        %1788 = vmatpush1.msra.mxu0 %v1710
        %1789 = vmatprep.subr.mxu0 0.0
        %1790 = vmatpush1.msra.mxu0 %v1711
        %1791 = vmatprep.subr.mxu0 0.0
        %1792 = vmatpush1.msra.mxu0 %v1712
        %1793 = vmatprep.subr.mxu0 0.0
        %1794 = vmatpush1.msra.mxu0 %v1713
        %1795 = vmatprep.subr.mxu0 0.0
        %1796 = vmatpush1.msra.mxu0 %v1714
        %1797 = vmatprep.subr.mxu0 0.0
        %1798 = vmatpush1.msra.mxu0 %v1715
        %1799 = vmatprep.subr.mxu0 0.0
        %1800 = vmatpush1.msra.mxu0 %v1716
        %1801 = vmatprep.subr.mxu0 0.0
        %1802 = vmatpush1.msra.mxu0 %v1717
        %1803 = vmatprep.subr.mxu0 0.0
        %1804 = vmatpush1.msra.mxu0 %v1718
        %1805 = vmatprep.mubr.f32.mxu0 %v1736
        %1806 = vmatmul.mubr.f32.gmra.mrb[0].mxu0 %v1735
        %v1807 = vpop.f32.mrb[0].mxu0
        %v1808 = vadd.f32 0.0, %v1807
        %v1809 = vpop.f32.mrb[0].mxu0
        %1810 = vdwg.mxu0
        %1811 = vmatprep.subr.mxu0 0.0
        %1812 = vmatpush1.msra.mxu0 %v1719
        %1813 = vmatprep.subr.mxu0 0.0
        %1814 = vmatpush1.msra.mxu0 %v1720
        %1815 = vmatprep.subr.mxu0 0.0
        %1816 = vmatpush1.msra.mxu0 %v1721
        %1817 = vmatprep.subr.mxu0 0.0
        %1818 = vmatpush1.msra.mxu0 %v1722
        %1819 = vmatprep.subr.mxu0 0.0
        %1820 = vmatpush1.msra.mxu0 %v1723
        %1821 = vmatprep.subr.mxu0 0.0
        %1822 = vmatpush1.msra.mxu0 %v1724
        %1823 = vmatprep.subr.mxu0 0.0
        %1824 = vmatpush1.msra.mxu0 %v1725
        %1825 = vmatprep.subr.mxu0 0.0
        %1826 = vmatpush1.msra.mxu0 %v1726
        %1827 = vmatprep.subr.mxu0 0.0
        %1828 = vmatpush1.msra.mxu0 %v1727
        %1829 = vmatprep.subr.mxu0 0.0
        %1830 = vmatpush1.msra.mxu0 %v1728
        %1831 = vmatprep.subr.mxu0 0.0
        %1832 = vmatpush1.msra.mxu0 %v1729
        %1833 = vmatprep.subr.mxu0 0.0
        %1834 = vmatpush1.msra.mxu0 %v1730
        %1835 = vmatprep.subr.mxu0 0.0
        %1836 = vmatpush1.msra.mxu0 %v1731
        %1837 = vmatprep.subr.mxu0 0.0
        %1838 = vmatpush1.msra.mxu0 %v1732
        %1839 = vmatprep.subr.mxu0 0.0
        %1840 = vmatpush1.msra.mxu0 %v1733
        %1841 = vmatprep.subr.mxu0 0.0
        %1842 = vmatpush1.msra.mxu0 %v1734
        %1843 = vmatprep.subr.mxu0 0.0
        %1844 = vmatpush1.msra.mxu0 0.0
        %1845 = vmatprep.subr.mxu0 0.0
        %1846 = vmatpush1.msra.mxu0 0.0
        %1847 = vmatprep.subr.mxu0 0.0
        %1848 = vmatpush1.msra.mxu0 0.0
        %1849 = vmatprep.subr.mxu0 0.0
        %1850 = vmatpush1.msra.mxu0 0.0
        %1851 = vmatprep.subr.mxu0 0.0
        %1852 = vmatpush1.msra.mxu0 0.0
        %1853 = vmatprep.subr.mxu0 0.0
        %1854 = vmatpush1.msra.mxu0 0.0
        %1855 = vmatprep.subr.mxu0 0.0
        %1856 = vmatpush1.msra.mxu0 0.0
        %1857 = vmatprep.subr.mxu0 0.0
        %1858 = vmatpush1.msra.mxu0 0.0
        %1859 = vmatprep.subr.mxu0 0.0
        %1860 = vmatpush1.msra.mxu0 0.0
        %1861 = vmatprep.subr.mxu0 0.0
        %1862 = vmatpush1.msra.mxu0 0.0
        %1863 = vmatprep.subr.mxu0 0.0
        %1864 = vmatpush1.msra.mxu0 0.0
        %1865 = vmatprep.subr.mxu0 0.0
        %1866 = vmatpush1.msra.mxu0 0.0
        %1867 = vmatprep.subr.mxu0 0.0
        %1868 = vmatpush1.msra.mxu0 0.0
        %1869 = vmatprep.subr.mxu0 0.0
        %1870 = vmatpush1.msra.mxu0 0.0
        %1871 = vmatprep.subr.mxu0 0.0
        %1872 = vmatpush1.msra.mxu0 0.0
        %1873 = vmatprep.subr.mxu0 0.0
        %1874 = vmatpush1.msra.mxu0 0.0
        %1875 = vmatprep.mubr.f32.mxu0 0.0
        %1876 = vmatmul.mubr.f32.gmra.mrb[0].mxu0 %v1737
        %v1877 = vpop.f32.mrb[0].mxu0
        %v1878 = vadd.f32 %v1808, %v1877
        %v1879 = vpop.f32.mrb[0].mxu0
        %1880 = vdwg.mxu0
        %v1881 = vadd.f32 %v1685, %v1878
        %s1882 = scalar_lea.vmem [#allocation11], 1536
        %v1883 = vld [vmem:[%s1882] sm:$0xff]
        %v1884 = vld [vmem:[%s1882 + $0x8] sm:$0xff]
        %v1885 = vld [vmem:[%s1882 + $0x10] sm:$0xff]
        %v1886 = vld [vmem:[%s1882 + $0x18] sm:$0xff]
        %v1887 = vld [vmem:[%s1882 + $0x20] sm:$0xff]
        %v1888 = vld [vmem:[%s1882 + $0x28] sm:$0xff]
        %v1889 = vld [vmem:[%s1882 + $0x30] sm:$0xff]
        %v1890 = vld [vmem:[%s1882 + $0x38] sm:$0xff]
        %v1891 = vld [vmem:[%s1882 + $0x40] sm:$0xff]
        %v1892 = vld [vmem:[%s1882 + $0x48] sm:$0xff]
        %v1893 = vld [vmem:[%s1882 + $0x50] sm:$0xff]
        %v1894 = vld [vmem:[%s1882 + $0x58] sm:$0xff]
        %v1895 = vld [vmem:[%s1882 + $0x60] sm:$0xff]
        %v1896 = vld [vmem:[%s1882 + $0x68] sm:$0xff]
        %v1897 = vld [vmem:[%s1882 + $0x70] sm:$0xff]
        %v1898 = vld [vmem:[%s1882 + $0x78] sm:$0xff]
        %v1899 = vld [vmem:[%s1882 + $0x80] sm:$0xff]
        %v1900 = vld [vmem:[%s1882 + $0x88] sm:$0xff]
        %v1901 = vld [vmem:[%s1882 + $0x90] sm:$0xff]
        %v1902 = vld [vmem:[%s1882 + $0x98] sm:$0xff]
        %v1903 = vld [vmem:[%s1882 + $0xa0] sm:$0xff]
        %v1904 = vld [vmem:[%s1882 + $0xa8] sm:$0xff]
        %v1905 = vld [vmem:[%s1882 + $0xb0] sm:$0xff]
        %v1906 = vld [vmem:[%s1882 + $0xb8] sm:$0xff]
        %v1907 = vld [vmem:[%s1882 + $0xc0] sm:$0xff]
        %v1908 = vld [vmem:[%s1882 + $0xc8] sm:$0xff]
        %v1909 = vld [vmem:[%s1882 + $0xd0] sm:$0xff]
        %v1910 = vld [vmem:[%s1882 + $0xd8] sm:$0xff]
        %v1911 = vld [vmem:[%s1882 + $0xe0] sm:$0xff]
        %v1912 = vld [vmem:[%s1882 + $0xe8] sm:$0xff]
        %v1913 = vld [vmem:[%s1882 + $0xf0] sm:$0xff]
        %v1914 = vld [vmem:[%s1882 + $0xf8] sm:$0xff]
        %v1915 = vld [vmem:[%s1882 + $0x100] sm:$0xff]
        %v1916 = vld [vmem:[%s1882 + $0x108] sm:$0xff]
        %v1917 = vld [vmem:[%s1882 + $0x110] sm:$0xff]
        %v1918 = vld [vmem:[%s1882 + $0x118] sm:$0xff]
        %v1919 = vld [vmem:[%s1882 + $0x120] sm:$0xff]
        %v1920 = vld [vmem:[%s1882 + $0x128] sm:$0xff]
        %v1921 = vld [vmem:[%s1882 + $0x130] sm:$0xff]
        %v1922 = vld [vmem:[%s1882 + $0x138] sm:$0xff]
        %v1923 = vld [vmem:[%s1882 + $0x140] sm:$0xff]
        %v1924 = vld [vmem:[%s1882 + $0x148] sm:$0xff]
        %v1925 = vld [vmem:[%s1882 + $0x150] sm:$0xff]
        %v1926 = vld [vmem:[%s1882 + $0x158] sm:$0xff]
        %v1927 = vld [vmem:[%s1882 + $0x160] sm:$0xff]
        %v1928 = vld [vmem:[%s1882 + $0x168] sm:$0xff]
        %v1929 = vld [vmem:[%s1882 + $0x170] sm:$0xff]
        %v1930 = vld [vmem:[%s1882 + $0x178] sm:$0xff]
        %v1931 = vrot.slane %v1095, 4
        %v1932 = vrot.slane %v1096, 4
        %v1933 = vrot.slane %v1097, 4
        %1937 = vmatprep.subr.mxu0 0.0
        %1938 = vmatpush1.msra.mxu0 %v1883
        %1939 = vmatprep.subr.mxu0 0.0
        %1940 = vmatpush1.msra.mxu0 %v1884
        %1941 = vmatprep.subr.mxu0 0.0
        %1942 = vmatpush1.msra.mxu0 %v1885
        %1943 = vmatprep.subr.mxu0 0.0
        %1944 = vmatpush1.msra.mxu0 %v1886
        %1945 = vmatprep.subr.mxu0 0.0
        %1946 = vmatpush1.msra.mxu0 %v1887
        %1947 = vmatprep.subr.mxu0 0.0
        %1948 = vmatpush1.msra.mxu0 %v1888
        %1949 = vmatprep.subr.mxu0 0.0
        %1950 = vmatpush1.msra.mxu0 %v1889
        %1951 = vmatprep.subr.mxu0 0.0
        %1952 = vmatpush1.msra.mxu0 %v1890
        %1953 = vmatprep.subr.mxu0 0.0
        %1954 = vmatpush1.msra.mxu0 %v1891
        %1955 = vmatprep.subr.mxu0 0.0
        %1956 = vmatpush1.msra.mxu0 %v1892
        %1957 = vmatprep.subr.mxu0 0.0
        %1958 = vmatpush1.msra.mxu0 %v1893
        %1959 = vmatprep.subr.mxu0 0.0
        %1960 = vmatpush1.msra.mxu0 %v1894
        %1961 = vmatprep.subr.mxu0 0.0
        %1962 = vmatpush1.msra.mxu0 %v1895
        %1963 = vmatprep.subr.mxu0 0.0
        %1964 = vmatpush1.msra.mxu0 %v1896
        %1965 = vmatprep.subr.mxu0 0.0
        %1966 = vmatpush1.msra.mxu0 %v1897
        %1967 = vmatprep.subr.mxu0 0.0
        %1968 = vmatpush1.msra.mxu0 %v1898
        %1969 = vmatprep.subr.mxu0 0.0
        %1970 = vmatpush1.msra.mxu0 %v1899
        %1971 = vmatprep.subr.mxu0 0.0
        %1972 = vmatpush1.msra.mxu0 %v1900
        %1973 = vmatprep.subr.mxu0 0.0
        %1974 = vmatpush1.msra.mxu0 %v1901
        %1975 = vmatprep.subr.mxu0 0.0
        %1976 = vmatpush1.msra.mxu0 %v1902
        %1977 = vmatprep.subr.mxu0 0.0
        %1978 = vmatpush1.msra.mxu0 %v1903
        %1979 = vmatprep.subr.mxu0 0.0
        %1980 = vmatpush1.msra.mxu0 %v1904
        %1981 = vmatprep.subr.mxu0 0.0
        %1982 = vmatpush1.msra.mxu0 %v1905
        %1983 = vmatprep.subr.mxu0 0.0
        %1984 = vmatpush1.msra.mxu0 %v1906
        %1985 = vmatprep.subr.mxu0 0.0
        %1986 = vmatpush1.msra.mxu0 %v1907
        %1987 = vmatprep.subr.mxu0 0.0
        %1988 = vmatpush1.msra.mxu0 %v1908
        %1989 = vmatprep.subr.mxu0 0.0
        %1990 = vmatpush1.msra.mxu0 %v1909
        %1991 = vmatprep.subr.mxu0 0.0
        %1992 = vmatpush1.msra.mxu0 %v1910
        %1993 = vmatprep.subr.mxu0 0.0
        %1994 = vmatpush1.msra.mxu0 %v1911
        %1995 = vmatprep.subr.mxu0 0.0
        %1996 = vmatpush1.msra.mxu0 %v1912
        %1997 = vmatprep.subr.mxu0 0.0
        %1998 = vmatpush1.msra.mxu0 %v1913
        %1999 = vmatprep.subr.mxu0 0.0
        %2000 = vmatpush1.msra.mxu0 %v1914
        %2001 = vmatprep.mubr.f32.mxu0 %v1932
        %2002 = vmatmul.mubr.f32.gmra.mrb[0].mxu0 %v1931
        %v2003 = vpop.f32.mrb[0].mxu0
        %v2004 = vadd.f32 0.0, %v2003
        %v2005 = vpop.f32.mrb[0].mxu0
        %2006 = vdwg.mxu0
        %2007 = vmatprep.subr.mxu0 0.0
        %2008 = vmatpush1.msra.mxu0 %v1915
        %2009 = vmatprep.subr.mxu0 0.0
        %2010 = vmatpush1.msra.mxu0 %v1916
        %2011 = vmatprep.subr.mxu0 0.0
        %2012 = vmatpush1.msra.mxu0 %v1917
        %2013 = vmatprep.subr.mxu0 0.0
        %2014 = vmatpush1.msra.mxu0 %v1918
        %2015 = vmatprep.subr.mxu0 0.0
        %2016 = vmatpush1.msra.mxu0 %v1919
        %2017 = vmatprep.subr.mxu0 0.0
        %2018 = vmatpush1.msra.mxu0 %v1920
        %2019 = vmatprep.subr.mxu0 0.0
        %2020 = vmatpush1.msra.mxu0 %v1921
        %2021 = vmatprep.subr.mxu0 0.0
        %2022 = vmatpush1.msra.mxu0 %v1922
        %2023 = vmatprep.subr.mxu0 0.0
        %2024 = vmatpush1.msra.mxu0 %v1923
        %2025 = vmatprep.subr.mxu0 0.0
        %2026 = vmatpush1.msra.mxu0 %v1924
        %2027 = vmatprep.subr.mxu0 0.0
        %2028 = vmatpush1.msra.mxu0 %v1925
        %2029 = vmatprep.subr.mxu0 0.0
        %2030 = vmatpush1.msra.mxu0 %v1926
        %2031 = vmatprep.subr.mxu0 0.0
        %2032 = vmatpush1.msra.mxu0 %v1927
        %2033 = vmatprep.subr.mxu0 0.0
        %2034 = vmatpush1.msra.mxu0 %v1928
        %2035 = vmatprep.subr.mxu0 0.0
        %2036 = vmatpush1.msra.mxu0 %v1929
        %2037 = vmatprep.subr.mxu0 0.0
        %2038 = vmatpush1.msra.mxu0 %v1930
        %2039 = vmatprep.subr.mxu0 0.0
        %2040 = vmatpush1.msra.mxu0 0.0
        %2041 = vmatprep.subr.mxu0 0.0
        %2042 = vmatpush1.msra.mxu0 0.0
        %2043 = vmatprep.subr.mxu0 0.0
        %2044 = vmatpush1.msra.mxu0 0.0
        %2045 = vmatprep.subr.mxu0 0.0
        %2046 = vmatpush1.msra.mxu0 0.0
        %2047 = vmatprep.subr.mxu0 0.0
        %2048 = vmatpush1.msra.mxu0 0.0
        %2049 = vmatprep.subr.mxu0 0.0
        %2050 = vmatpush1.msra.mxu0 0.0
        %2051 = vmatprep.subr.mxu0 0.0
        %2052 = vmatpush1.msra.mxu0 0.0
        %2053 = vmatprep.subr.mxu0 0.0
        %2054 = vmatpush1.msra.mxu0 0.0
        %2055 = vmatprep.subr.mxu0 0.0
        %2056 = vmatpush1.msra.mxu0 0.0
        %2057 = vmatprep.subr.mxu0 0.0
        %2058 = vmatpush1.msra.mxu0 0.0
        %2059 = vmatprep.subr.mxu0 0.0
        %2060 = vmatpush1.msra.mxu0 0.0
        %2061 = vmatprep.subr.mxu0 0.0
        %2062 = vmatpush1.msra.mxu0 0.0
        %2063 = vmatprep.subr.mxu0 0.0
        %2064 = vmatpush1.msra.mxu0 0.0
        %2065 = vmatprep.subr.mxu0 0.0
        %2066 = vmatpush1.msra.mxu0 0.0
        %2067 = vmatprep.subr.mxu0 0.0
        %2068 = vmatpush1.msra.mxu0 0.0
        %2069 = vmatprep.subr.mxu0 0.0
        %2070 = vmatpush1.msra.mxu0 0.0
        %2071 = vmatprep.mubr.f32.mxu0 0.0
        %2072 = vmatmul.mubr.f32.gmra.mrb[0].mxu0 %v1933
        %v2073 = vpop.f32.mrb[0].mxu0
        %v2074 = vadd.f32 %v2004, %v2073
        %v2075 = vpop.f32.mrb[0].mxu0
        %2076 = vdwg.mxu0
        %v2077 = vadd.f32 %v1881, %v2074
        %s2078 = scalar_lea.vmem [#allocation11], 1920
        %v2079 = vld [vmem:[%s2078] sm:$0xff]
        %v2080 = vld [vmem:[%s2078 + $0x8] sm:$0xff]
        %v2081 = vld [vmem:[%s2078 + $0x10] sm:$0xff]
        %v2082 = vld [vmem:[%s2078 + $0x18] sm:$0xff]
        %v2083 = vld [vmem:[%s2078 + $0x20] sm:$0xff]
        %v2084 = vld [vmem:[%s2078 + $0x28] sm:$0xff]
        %v2085 = vld [vmem:[%s2078 + $0x30] sm:$0xff]
        %v2086 = vld [vmem:[%s2078 + $0x38] sm:$0xff]
        %v2087 = vld [vmem:[%s2078 + $0x40] sm:$0xff]
        %v2088 = vld [vmem:[%s2078 + $0x48] sm:$0xff]
        %v2089 = vld [vmem:[%s2078 + $0x50] sm:$0xff]
        %v2090 = vld [vmem:[%s2078 + $0x58] sm:$0xff]
        %v2091 = vld [vmem:[%s2078 + $0x60] sm:$0xff]
        %v2092 = vld [vmem:[%s2078 + $0x68] sm:$0xff]
        %v2093 = vld [vmem:[%s2078 + $0x70] sm:$0xff]
        %v2094 = vld [vmem:[%s2078 + $0x78] sm:$0xff]
        %v2095 = vld [vmem:[%s2078 + $0x80] sm:$0xff]
        %v2096 = vld [vmem:[%s2078 + $0x88] sm:$0xff]
        %v2097 = vld [vmem:[%s2078 + $0x90] sm:$0xff]
        %v2098 = vld [vmem:[%s2078 + $0x98] sm:$0xff]
        %v2099 = vld [vmem:[%s2078 + $0xa0] sm:$0xff]
        %v2100 = vld [vmem:[%s2078 + $0xa8] sm:$0xff]
        %v2101 = vld [vmem:[%s2078 + $0xb0] sm:$0xff]
        %v2102 = vld [vmem:[%s2078 + $0xb8] sm:$0xff]
        %v2103 = vld [vmem:[%s2078 + $0xc0] sm:$0xff]
        %v2104 = vld [vmem:[%s2078 + $0xc8] sm:$0xff]
        %v2105 = vld [vmem:[%s2078 + $0xd0] sm:$0xff]
        %v2106 = vld [vmem:[%s2078 + $0xd8] sm:$0xff]
        %v2107 = vld [vmem:[%s2078 + $0xe0] sm:$0xff]
        %v2108 = vld [vmem:[%s2078 + $0xe8] sm:$0xff]
        %v2109 = vld [vmem:[%s2078 + $0xf0] sm:$0xff]
        %v2110 = vld [vmem:[%s2078 + $0xf8] sm:$0xff]
        %v2111 = vld [vmem:[%s2078 + $0x100] sm:$0xff]
        %v2112 = vld [vmem:[%s2078 + $0x108] sm:$0xff]
        %v2113 = vld [vmem:[%s2078 + $0x110] sm:$0xff]
        %v2114 = vld [vmem:[%s2078 + $0x118] sm:$0xff]
        %v2115 = vld [vmem:[%s2078 + $0x120] sm:$0xff]
        %v2116 = vld [vmem:[%s2078 + $0x128] sm:$0xff]
        %v2117 = vld [vmem:[%s2078 + $0x130] sm:$0xff]
        %v2118 = vld [vmem:[%s2078 + $0x138] sm:$0xff]
        %v2119 = vld [vmem:[%s2078 + $0x140] sm:$0xff]
        %v2120 = vld [vmem:[%s2078 + $0x148] sm:$0xff]
        %v2121 = vld [vmem:[%s2078 + $0x150] sm:$0xff]
        %v2122 = vld [vmem:[%s2078 + $0x158] sm:$0xff]
        %v2123 = vld [vmem:[%s2078 + $0x160] sm:$0xff]
        %v2124 = vld [vmem:[%s2078 + $0x168] sm:$0xff]
        %v2125 = vld [vmem:[%s2078 + $0x170] sm:$0xff]
        %v2126 = vld [vmem:[%s2078 + $0x178] sm:$0xff]
        %v2127 = vrot.slane %v1095, 5
        %v2128 = vrot.slane %v1096, 5
        %v2129 = vrot.slane %v1097, 5
        %2133 = vmatprep.subr.mxu0 0.0
        %2134 = vmatpush1.msra.mxu0 %v2079
        %2135 = vmatprep.subr.mxu0 0.0
        %2136 = vmatpush1.msra.mxu0 %v2080
        %2137 = vmatprep.subr.mxu0 0.0
        %2138 = vmatpush1.msra.mxu0 %v2081
        %2139 = vmatprep.subr.mxu0 0.0
        %2140 = vmatpush1.msra.mxu0 %v2082
        %2141 = vmatprep.subr.mxu0 0.0
        %2142 = vmatpush1.msra.mxu0 %v2083
        %2143 = vmatprep.subr.mxu0 0.0
        %2144 = vmatpush1.msra.mxu0 %v2084
        %2145 = vmatprep.subr.mxu0 0.0
        %2146 = vmatpush1.msra.mxu0 %v2085
        %2147 = vmatprep.subr.mxu0 0.0
        %2148 = vmatpush1.msra.mxu0 %v2086
        %2149 = vmatprep.subr.mxu0 0.0
        %2150 = vmatpush1.msra.mxu0 %v2087
        %2151 = vmatprep.subr.mxu0 0.0
        %2152 = vmatpush1.msra.mxu0 %v2088
        %2153 = vmatprep.subr.mxu0 0.0
        %2154 = vmatpush1.msra.mxu0 %v2089
        %2155 = vmatprep.subr.mxu0 0.0
        %2156 = vmatpush1.msra.mxu0 %v2090
        %2157 = vmatprep.subr.mxu0 0.0
        %2158 = vmatpush1.msra.mxu0 %v2091
        %2159 = vmatprep.subr.mxu0 0.0
        %2160 = vmatpush1.msra.mxu0 %v2092
        %2161 = vmatprep.subr.mxu0 0.0
        %2162 = vmatpush1.msra.mxu0 %v2093
        %2163 = vmatprep.subr.mxu0 0.0
        %2164 = vmatpush1.msra.mxu0 %v2094
        %2165 = vmatprep.subr.mxu0 0.0
        %2166 = vmatpush1.msra.mxu0 %v2095
        %2167 = vmatprep.subr.mxu0 0.0
        %2168 = vmatpush1.msra.mxu0 %v2096
        %2169 = vmatprep.subr.mxu0 0.0
        %2170 = vmatpush1.msra.mxu0 %v2097
        %2171 = vmatprep.subr.mxu0 0.0
        %2172 = vmatpush1.msra.mxu0 %v2098
        %2173 = vmatprep.subr.mxu0 0.0
        %2174 = vmatpush1.msra.mxu0 %v2099
        %2175 = vmatprep.subr.mxu0 0.0
        %2176 = vmatpush1.msra.mxu0 %v2100
        %2177 = vmatprep.subr.mxu0 0.0
        %2178 = vmatpush1.msra.mxu0 %v2101
        %2179 = vmatprep.subr.mxu0 0.0
        %2180 = vmatpush1.msra.mxu0 %v2102
        %2181 = vmatprep.subr.mxu0 0.0
        %2182 = vmatpush1.msra.mxu0 %v2103
        %2183 = vmatprep.subr.mxu0 0.0
        %2184 = vmatpush1.msra.mxu0 %v2104
        %2185 = vmatprep.subr.mxu0 0.0
        %2186 = vmatpush1.msra.mxu0 %v2105
        %2187 = vmatprep.subr.mxu0 0.0
        %2188 = vmatpush1.msra.mxu0 %v2106
        %2189 = vmatprep.subr.mxu0 0.0
        %2190 = vmatpush1.msra.mxu0 %v2107
        %2191 = vmatprep.subr.mxu0 0.0
        %2192 = vmatpush1.msra.mxu0 %v2108
        %2193 = vmatprep.subr.mxu0 0.0
        %2194 = vmatpush1.msra.mxu0 %v2109
        %2195 = vmatprep.subr.mxu0 0.0
        %2196 = vmatpush1.msra.mxu0 %v2110
        %2197 = vmatprep.mubr.f32.mxu0 %v2128
        %2198 = vmatmul.mubr.f32.gmra.mrb[0].mxu0 %v2127
        %v2199 = vpop.f32.mrb[0].mxu0
        %v2200 = vadd.f32 0.0, %v2199
        %v2201 = vpop.f32.mrb[0].mxu0
        %2202 = vdwg.mxu0
        %2203 = vmatprep.subr.mxu0 0.0
        %2204 = vmatpush1.msra.mxu0 %v2111
        %2205 = vmatprep.subr.mxu0 0.0
        %2206 = vmatpush1.msra.mxu0 %v2112
        %2207 = vmatprep.subr.mxu0 0.0
        %2208 = vmatpush1.msra.mxu0 %v2113
        %2209 = vmatprep.subr.mxu0 0.0
        %2210 = vmatpush1.msra.mxu0 %v2114
        %2211 = vmatprep.subr.mxu0 0.0
        %2212 = vmatpush1.msra.mxu0 %v2115
        %2213 = vmatprep.subr.mxu0 0.0
        %2214 = vmatpush1.msra.mxu0 %v2116
        %2215 = vmatprep.subr.mxu0 0.0
        %2216 = vmatpush1.msra.mxu0 %v2117
        %2217 = vmatprep.subr.mxu0 0.0
        %2218 = vmatpush1.msra.mxu0 %v2118
        %2219 = vmatprep.subr.mxu0 0.0
        %2220 = vmatpush1.msra.mxu0 %v2119
        %2221 = vmatprep.subr.mxu0 0.0
        %2222 = vmatpush1.msra.mxu0 %v2120
        %2223 = vmatprep.subr.mxu0 0.0
        %2224 = vmatpush1.msra.mxu0 %v2121
        %2225 = vmatprep.subr.mxu0 0.0
        %2226 = vmatpush1.msra.mxu0 %v2122
        %2227 = vmatprep.subr.mxu0 0.0
        %2228 = vmatpush1.msra.mxu0 %v2123
        %2229 = vmatprep.subr.mxu0 0.0
        %2230 = vmatpush1.msra.mxu0 %v2124
        %2231 = vmatprep.subr.mxu0 0.0
        %2232 = vmatpush1.msra.mxu0 %v2125
        %2233 = vmatprep.subr.mxu0 0.0
        %2234 = vmatpush1.msra.mxu0 %v2126
        %2235 = vmatprep.subr.mxu0 0.0
        %2236 = vmatpush1.msra.mxu0 0.0
        %2237 = vmatprep.subr.mxu0 0.0
        %2238 = vmatpush1.msra.mxu0 0.0
        %2239 = vmatprep.subr.mxu0 0.0
        %2240 = vmatpush1.msra.mxu0 0.0
        %2241 = vmatprep.subr.mxu0 0.0
        %2242 = vmatpush1.msra.mxu0 0.0
        %2243 = vmatprep.subr.mxu0 0.0
        %2244 = vmatpush1.msra.mxu0 0.0
        %2245 = vmatprep.subr.mxu0 0.0
        %2246 = vmatpush1.msra.mxu0 0.0
        %2247 = vmatprep.subr.mxu0 0.0
        %2248 = vmatpush1.msra.mxu0 0.0
        %2249 = vmatprep.subr.mxu0 0.0
        %2250 = vmatpush1.msra.mxu0 0.0
        %2251 = vmatprep.subr.mxu0 0.0
        %2252 = vmatpush1.msra.mxu0 0.0
        %2253 = vmatprep.subr.mxu0 0.0
        %2254 = vmatpush1.msra.mxu0 0.0
        %2255 = vmatprep.subr.mxu0 0.0
        %2256 = vmatpush1.msra.mxu0 0.0
        %2257 = vmatprep.subr.mxu0 0.0
        %2258 = vmatpush1.msra.mxu0 0.0
        %2259 = vmatprep.subr.mxu0 0.0
        %2260 = vmatpush1.msra.mxu0 0.0
        %2261 = vmatprep.subr.mxu0 0.0
        %2262 = vmatpush1.msra.mxu0 0.0
        %2263 = vmatprep.subr.mxu0 0.0
        %2264 = vmatpush1.msra.mxu0 0.0
        %2265 = vmatprep.subr.mxu0 0.0
        %2266 = vmatpush1.msra.mxu0 0.0
        %2267 = vmatprep.mubr.f32.mxu0 0.0
        %2268 = vmatmul.mubr.f32.gmra.mrb[0].mxu0 %v2129
        %v2269 = vpop.f32.mrb[0].mxu0
        %v2270 = vadd.f32 %v2200, %v2269
        %v2271 = vpop.f32.mrb[0].mxu0
        %2272 = vdwg.mxu0
        %v2273 = vadd.f32 %v2077, %v2270
        %s2274 = scalar_lea.vmem [#allocation11], 2304
        %v2275 = vld [vmem:[%s2274] sm:$0xff]
        %v2276 = vld [vmem:[%s2274 + $0x8] sm:$0xff]
        %v2277 = vld [vmem:[%s2274 + $0x10] sm:$0xff]
        %v2278 = vld [vmem:[%s2274 + $0x18] sm:$0xff]
        %v2279 = vld [vmem:[%s2274 + $0x20] sm:$0xff]
        %v2280 = vld [vmem:[%s2274 + $0x28] sm:$0xff]
        %v2281 = vld [vmem:[%s2274 + $0x30] sm:$0xff]
        %v2282 = vld [vmem:[%s2274 + $0x38] sm:$0xff]
        %v2283 = vld [vmem:[%s2274 + $0x40] sm:$0xff]
        %v2284 = vld [vmem:[%s2274 + $0x48] sm:$0xff]
        %v2285 = vld [vmem:[%s2274 + $0x50] sm:$0xff]
        %v2286 = vld [vmem:[%s2274 + $0x58] sm:$0xff]
        %v2287 = vld [vmem:[%s2274 + $0x60] sm:$0xff]
        %v2288 = vld [vmem:[%s2274 + $0x68] sm:$0xff]
        %v2289 = vld [vmem:[%s2274 + $0x70] sm:$0xff]
        %v2290 = vld [vmem:[%s2274 + $0x78] sm:$0xff]
        %v2291 = vld [vmem:[%s2274 + $0x80] sm:$0xff]
        %v2292 = vld [vmem:[%s2274 + $0x88] sm:$0xff]
        %v2293 = vld [vmem:[%s2274 + $0x90] sm:$0xff]
        %v2294 = vld [vmem:[%s2274 + $0x98] sm:$0xff]
        %v2295 = vld [vmem:[%s2274 + $0xa0] sm:$0xff]
        %v2296 = vld [vmem:[%s2274 + $0xa8] sm:$0xff]
        %v2297 = vld [vmem:[%s2274 + $0xb0] sm:$0xff]
        %v2298 = vld [vmem:[%s2274 + $0xb8] sm:$0xff]
        %v2299 = vld [vmem:[%s2274 + $0xc0] sm:$0xff]
        %v2300 = vld [vmem:[%s2274 + $0xc8] sm:$0xff]
        %v2301 = vld [vmem:[%s2274 + $0xd0] sm:$0xff]
        %v2302 = vld [vmem:[%s2274 + $0xd8] sm:$0xff]
        %v2303 = vld [vmem:[%s2274 + $0xe0] sm:$0xff]
        %v2304 = vld [vmem:[%s2274 + $0xe8] sm:$0xff]
        %v2305 = vld [vmem:[%s2274 + $0xf0] sm:$0xff]
        %v2306 = vld [vmem:[%s2274 + $0xf8] sm:$0xff]
        %v2307 = vld [vmem:[%s2274 + $0x100] sm:$0xff]
        %v2308 = vld [vmem:[%s2274 + $0x108] sm:$0xff]
        %v2309 = vld [vmem:[%s2274 + $0x110] sm:$0xff]
        %v2310 = vld [vmem:[%s2274 + $0x118] sm:$0xff]
        %v2311 = vld [vmem:[%s2274 + $0x120] sm:$0xff]
        %v2312 = vld [vmem:[%s2274 + $0x128] sm:$0xff]
        %v2313 = vld [vmem:[%s2274 + $0x130] sm:$0xff]
        %v2314 = vld [vmem:[%s2274 + $0x138] sm:$0xff]
        %v2315 = vld [vmem:[%s2274 + $0x140] sm:$0xff]
        %v2316 = vld [vmem:[%s2274 + $0x148] sm:$0xff]
        %v2317 = vld [vmem:[%s2274 + $0x150] sm:$0xff]
        %v2318 = vld [vmem:[%s2274 + $0x158] sm:$0xff]
        %v2319 = vld [vmem:[%s2274 + $0x160] sm:$0xff]
        %v2320 = vld [vmem:[%s2274 + $0x168] sm:$0xff]
        %v2321 = vld [vmem:[%s2274 + $0x170] sm:$0xff]
        %v2322 = vld [vmem:[%s2274 + $0x178] sm:$0xff]
        %v2323 = vrot.slane %v1095, 6
        %v2324 = vrot.slane %v1096, 6
        %v2325 = vrot.slane %v1097, 6
        %2329 = vmatprep.subr.mxu0 0.0
        %2330 = vmatpush1.msra.mxu0 %v2275
        %2331 = vmatprep.subr.mxu0 0.0
        %2332 = vmatpush1.msra.mxu0 %v2276
        %2333 = vmatprep.subr.mxu0 0.0
        %2334 = vmatpush1.msra.mxu0 %v2277
        %2335 = vmatprep.subr.mxu0 0.0
        %2336 = vmatpush1.msra.mxu0 %v2278
        %2337 = vmatprep.subr.mxu0 0.0
        %2338 = vmatpush1.msra.mxu0 %v2279
        %2339 = vmatprep.subr.mxu0 0.0
        %2340 = vmatpush1.msra.mxu0 %v2280
        %2341 = vmatprep.subr.mxu0 0.0
        %2342 = vmatpush1.msra.mxu0 %v2281
        %2343 = vmatprep.subr.mxu0 0.0
        %2344 = vmatpush1.msra.mxu0 %v2282
        %2345 = vmatprep.subr.mxu0 0.0
        %2346 = vmatpush1.msra.mxu0 %v2283
        %2347 = vmatprep.subr.mxu0 0.0
        %2348 = vmatpush1.msra.mxu0 %v2284
        %2349 = vmatprep.subr.mxu0 0.0
        %2350 = vmatpush1.msra.mxu0 %v2285
        %2351 = vmatprep.subr.mxu0 0.0
        %2352 = vmatpush1.msra.mxu0 %v2286
        %2353 = vmatprep.subr.mxu0 0.0
        %2354 = vmatpush1.msra.mxu0 %v2287
        %2355 = vmatprep.subr.mxu0 0.0
        %2356 = vmatpush1.msra.mxu0 %v2288
        %2357 = vmatprep.subr.mxu0 0.0
        %2358 = vmatpush1.msra.mxu0 %v2289
        %2359 = vmatprep.subr.mxu0 0.0
        %2360 = vmatpush1.msra.mxu0 %v2290
        %2361 = vmatprep.subr.mxu0 0.0
        %2362 = vmatpush1.msra.mxu0 %v2291
        %2363 = vmatprep.subr.mxu0 0.0
        %2364 = vmatpush1.msra.mxu0 %v2292
        %2365 = vmatprep.subr.mxu0 0.0
        %2366 = vmatpush1.msra.mxu0 %v2293
        %2367 = vmatprep.subr.mxu0 0.0
        %2368 = vmatpush1.msra.mxu0 %v2294
        %2369 = vmatprep.subr.mxu0 0.0
        %2370 = vmatpush1.msra.mxu0 %v2295
        %2371 = vmatprep.subr.mxu0 0.0
        %2372 = vmatpush1.msra.mxu0 %v2296
        %2373 = vmatprep.subr.mxu0 0.0
        %2374 = vmatpush1.msra.mxu0 %v2297
        %2375 = vmatprep.subr.mxu0 0.0
        %2376 = vmatpush1.msra.mxu0 %v2298
        %2377 = vmatprep.subr.mxu0 0.0
        %2378 = vmatpush1.msra.mxu0 %v2299
        %2379 = vmatprep.subr.mxu0 0.0
        %2380 = vmatpush1.msra.mxu0 %v2300
        %2381 = vmatprep.subr.mxu0 0.0
        %2382 = vmatpush1.msra.mxu0 %v2301
        %2383 = vmatprep.subr.mxu0 0.0
        %2384 = vmatpush1.msra.mxu0 %v2302
        %2385 = vmatprep.subr.mxu0 0.0
        %2386 = vmatpush1.msra.mxu0 %v2303
        %2387 = vmatprep.subr.mxu0 0.0
        %2388 = vmatpush1.msra.mxu0 %v2304
        %2389 = vmatprep.subr.mxu0 0.0
        %2390 = vmatpush1.msra.mxu0 %v2305
        %2391 = vmatprep.subr.mxu0 0.0
        %2392 = vmatpush1.msra.mxu0 %v2306
        %2393 = vmatprep.mubr.f32.mxu0 %v2324
        %2394 = vmatmul.mubr.f32.gmra.mrb[0].mxu0 %v2323
        %v2395 = vpop.f32.mrb[0].mxu0
        %v2396 = vadd.f32 0.0, %v2395
        %v2397 = vpop.f32.mrb[0].mxu0
        %2398 = vdwg.mxu0
        %2399 = vmatprep.subr.mxu0 0.0
        %2400 = vmatpush1.msra.mxu0 %v2307
        %2401 = vmatprep.subr.mxu0 0.0
        %2402 = vmatpush1.msra.mxu0 %v2308
        %2403 = vmatprep.subr.mxu0 0.0
        %2404 = vmatpush1.msra.mxu0 %v2309
        %2405 = vmatprep.subr.mxu0 0.0
        %2406 = vmatpush1.msra.mxu0 %v2310
        %2407 = vmatprep.subr.mxu0 0.0
        %2408 = vmatpush1.msra.mxu0 %v2311
        %2409 = vmatprep.subr.mxu0 0.0
        %2410 = vmatpush1.msra.mxu0 %v2312
        %2411 = vmatprep.subr.mxu0 0.0
        %2412 = vmatpush1.msra.mxu0 %v2313
        %2413 = vmatprep.subr.mxu0 0.0
        %2414 = vmatpush1.msra.mxu0 %v2314
        %2415 = vmatprep.subr.mxu0 0.0
        %2416 = vmatpush1.msra.mxu0 %v2315
        %2417 = vmatprep.subr.mxu0 0.0
        %2418 = vmatpush1.msra.mxu0 %v2316
        %2419 = vmatprep.subr.mxu0 0.0
        %2420 = vmatpush1.msra.mxu0 %v2317
        %2421 = vmatprep.subr.mxu0 0.0
        %2422 = vmatpush1.msra.mxu0 %v2318
        %2423 = vmatprep.subr.mxu0 0.0
        %2424 = vmatpush1.msra.mxu0 %v2319
        %2425 = vmatprep.subr.mxu0 0.0
        %2426 = vmatpush1.msra.mxu0 %v2320
        %2427 = vmatprep.subr.mxu0 0.0
        %2428 = vmatpush1.msra.mxu0 %v2321
        %2429 = vmatprep.subr.mxu0 0.0
        %2430 = vmatpush1.msra.mxu0 %v2322
        %2431 = vmatprep.subr.mxu0 0.0
        %2432 = vmatpush1.msra.mxu0 0.0
        %2433 = vmatprep.subr.mxu0 0.0
        %2434 = vmatpush1.msra.mxu0 0.0
        %2435 = vmatprep.subr.mxu0 0.0
        %2436 = vmatpush1.msra.mxu0 0.0
        %2437 = vmatprep.subr.mxu0 0.0
        %2438 = vmatpush1.msra.mxu0 0.0
        %2439 = vmatprep.subr.mxu0 0.0
        %2440 = vmatpush1.msra.mxu0 0.0
        %2441 = vmatprep.subr.mxu0 0.0
        %2442 = vmatpush1.msra.mxu0 0.0
        %2443 = vmatprep.subr.mxu0 0.0
        %2444 = vmatpush1.msra.mxu0 0.0
        %2445 = vmatprep.subr.mxu0 0.0
        %2446 = vmatpush1.msra.mxu0 0.0
        %2447 = vmatprep.subr.mxu0 0.0
        %2448 = vmatpush1.msra.mxu0 0.0
        %2449 = vmatprep.subr.mxu0 0.0
        %2450 = vmatpush1.msra.mxu0 0.0
        %2451 = vmatprep.subr.mxu0 0.0
        %2452 = vmatpush1.msra.mxu0 0.0
        %2453 = vmatprep.subr.mxu0 0.0
        %2454 = vmatpush1.msra.mxu0 0.0
        %2455 = vmatprep.subr.mxu0 0.0
        %2456 = vmatpush1.msra.mxu0 0.0
        %2457 = vmatprep.subr.mxu0 0.0
        %2458 = vmatpush1.msra.mxu0 0.0
        %2459 = vmatprep.subr.mxu0 0.0
        %2460 = vmatpush1.msra.mxu0 0.0
        %2461 = vmatprep.subr.mxu0 0.0
        %2462 = vmatpush1.msra.mxu0 0.0
        %2463 = vmatprep.mubr.f32.mxu0 0.0
        %2464 = vmatmul.mubr.f32.gmra.mrb[0].mxu0 %v2325
        %v2465 = vpop.f32.mrb[0].mxu0
        %v2466 = vadd.f32 %v2396, %v2465
        %v2467 = vpop.f32.mrb[0].mxu0
        %2468 = vdwg.mxu0
        %v2469 = vadd.f32 %v2273, %v2466
        %s2470 = scalar_lea.vmem [#allocation11], 2688
        %v2471 = vld [vmem:[%s2470] sm:$0xff]
        %v2472 = vld [vmem:[%s2470 + $0x8] sm:$0xff]
        %v2473 = vld [vmem:[%s2470 + $0x10] sm:$0xff]
        %v2474 = vld [vmem:[%s2470 + $0x18] sm:$0xff]
        %v2475 = vld [vmem:[%s2470 + $0x20] sm:$0xff]
        %v2476 = vld [vmem:[%s2470 + $0x28] sm:$0xff]
        %v2477 = vld [vmem:[%s2470 + $0x30] sm:$0xff]
        %v2478 = vld [vmem:[%s2470 + $0x38] sm:$0xff]
        %v2479 = vld [vmem:[%s2470 + $0x40] sm:$0xff]
        %v2480 = vld [vmem:[%s2470 + $0x48] sm:$0xff]
        %v2481 = vld [vmem:[%s2470 + $0x50] sm:$0xff]
        %v2482 = vld [vmem:[%s2470 + $0x58] sm:$0xff]
        %v2483 = vld [vmem:[%s2470 + $0x60] sm:$0xff]
        %v2484 = vld [vmem:[%s2470 + $0x68] sm:$0xff]
        %v2485 = vld [vmem:[%s2470 + $0x70] sm:$0xff]
        %v2486 = vld [vmem:[%s2470 + $0x78] sm:$0xff]
        %v2487 = vld [vmem:[%s2470 + $0x80] sm:$0xff]
        %v2488 = vld [vmem:[%s2470 + $0x88] sm:$0xff]
        %v2489 = vld [vmem:[%s2470 + $0x90] sm:$0xff]
        %v2490 = vld [vmem:[%s2470 + $0x98] sm:$0xff]
        %v2491 = vld [vmem:[%s2470 + $0xa0] sm:$0xff]
        %v2492 = vld [vmem:[%s2470 + $0xa8] sm:$0xff]
        %v2493 = vld [vmem:[%s2470 + $0xb0] sm:$0xff]
        %v2494 = vld [vmem:[%s2470 + $0xb8] sm:$0xff]
        %v2495 = vld [vmem:[%s2470 + $0xc0] sm:$0xff]
        %v2496 = vld [vmem:[%s2470 + $0xc8] sm:$0xff]
        %v2497 = vld [vmem:[%s2470 + $0xd0] sm:$0xff]
        %v2498 = vld [vmem:[%s2470 + $0xd8] sm:$0xff]
        %v2499 = vld [vmem:[%s2470 + $0xe0] sm:$0xff]
        %v2500 = vld [vmem:[%s2470 + $0xe8] sm:$0xff]
        %v2501 = vld [vmem:[%s2470 + $0xf0] sm:$0xff]
        %v2502 = vld [vmem:[%s2470 + $0xf8] sm:$0xff]
        %v2503 = vld [vmem:[%s2470 + $0x100] sm:$0xff]
        %v2504 = vld [vmem:[%s2470 + $0x108] sm:$0xff]
        %v2505 = vld [vmem:[%s2470 + $0x110] sm:$0xff]
        %v2506 = vld [vmem:[%s2470 + $0x118] sm:$0xff]
        %v2507 = vld [vmem:[%s2470 + $0x120] sm:$0xff]
        %v2508 = vld [vmem:[%s2470 + $0x128] sm:$0xff]
        %v2509 = vld [vmem:[%s2470 + $0x130] sm:$0xff]
        %v2510 = vld [vmem:[%s2470 + $0x138] sm:$0xff]
        %v2511 = vld [vmem:[%s2470 + $0x140] sm:$0xff]
        %v2512 = vld [vmem:[%s2470 + $0x148] sm:$0xff]
        %v2513 = vld [vmem:[%s2470 + $0x150] sm:$0xff]
        %v2514 = vld [vmem:[%s2470 + $0x158] sm:$0xff]
        %v2515 = vld [vmem:[%s2470 + $0x160] sm:$0xff]
        %v2516 = vld [vmem:[%s2470 + $0x168] sm:$0xff]
        %v2517 = vld [vmem:[%s2470 + $0x170] sm:$0xff]
        %v2518 = vld [vmem:[%s2470 + $0x178] sm:$0xff]
        %v2519 = vrot.slane %v1095, 7
        %v2520 = vrot.slane %v1096, 7
        %v2521 = vrot.slane %v1097, 7
        %2525 = vmatprep.subr.mxu0 0.0
        %2526 = vmatpush1.msra.mxu0 %v2471
        %2527 = vmatprep.subr.mxu0 0.0
        %2528 = vmatpush1.msra.mxu0 %v2472
        %2529 = vmatprep.subr.mxu0 0.0
        %2530 = vmatpush1.msra.mxu0 %v2473
        %2531 = vmatprep.subr.mxu0 0.0
        %2532 = vmatpush1.msra.mxu0 %v2474
        %2533 = vmatprep.subr.mxu0 0.0
        %2534 = vmatpush1.msra.mxu0 %v2475
        %2535 = vmatprep.subr.mxu0 0.0
        %2536 = vmatpush1.msra.mxu0 %v2476
        %2537 = vmatprep.subr.mxu0 0.0
        %2538 = vmatpush1.msra.mxu0 %v2477
        %2539 = vmatprep.subr.mxu0 0.0
        %2540 = vmatpush1.msra.mxu0 %v2478
        %2541 = vmatprep.subr.mxu0 0.0
        %2542 = vmatpush1.msra.mxu0 %v2479
        %2543 = vmatprep.subr.mxu0 0.0
        %2544 = vmatpush1.msra.mxu0 %v2480
        %2545 = vmatprep.subr.mxu0 0.0
        %2546 = vmatpush1.msra.mxu0 %v2481
        %2547 = vmatprep.subr.mxu0 0.0
        %2548 = vmatpush1.msra.mxu0 %v2482
        %2549 = vmatprep.subr.mxu0 0.0
        %2550 = vmatpush1.msra.mxu0 %v2483
        %2551 = vmatprep.subr.mxu0 0.0
        %2552 = vmatpush1.msra.mxu0 %v2484
        %2553 = vmatprep.subr.mxu0 0.0
        %2554 = vmatpush1.msra.mxu0 %v2485
        %2555 = vmatprep.subr.mxu0 0.0
        %2556 = vmatpush1.msra.mxu0 %v2486
        %2557 = vmatprep.subr.mxu0 0.0
        %2558 = vmatpush1.msra.mxu0 %v2487
        %2559 = vmatprep.subr.mxu0 0.0
        %2560 = vmatpush1.msra.mxu0 %v2488
        %2561 = vmatprep.subr.mxu0 0.0
        %2562 = vmatpush1.msra.mxu0 %v2489
        %2563 = vmatprep.subr.mxu0 0.0
        %2564 = vmatpush1.msra.mxu0 %v2490
        %2565 = vmatprep.subr.mxu0 0.0
        %2566 = vmatpush1.msra.mxu0 %v2491
        %2567 = vmatprep.subr.mxu0 0.0
        %2568 = vmatpush1.msra.mxu0 %v2492
        %2569 = vmatprep.subr.mxu0 0.0
        %2570 = vmatpush1.msra.mxu0 %v2493
        %2571 = vmatprep.subr.mxu0 0.0
        %2572 = vmatpush1.msra.mxu0 %v2494
        %2573 = vmatprep.subr.mxu0 0.0
        %2574 = vmatpush1.msra.mxu0 %v2495
        %2575 = vmatprep.subr.mxu0 0.0
        %2576 = vmatpush1.msra.mxu0 %v2496
        %2577 = vmatprep.subr.mxu0 0.0
        %2578 = vmatpush1.msra.mxu0 %v2497
        %2579 = vmatprep.subr.mxu0 0.0
        %2580 = vmatpush1.msra.mxu0 %v2498
        %2581 = vmatprep.subr.mxu0 0.0
        %2582 = vmatpush1.msra.mxu0 %v2499
        %2583 = vmatprep.subr.mxu0 0.0
        %2584 = vmatpush1.msra.mxu0 %v2500
        %2585 = vmatprep.subr.mxu0 0.0
        %2586 = vmatpush1.msra.mxu0 %v2501
        %2587 = vmatprep.subr.mxu0 0.0
        %2588 = vmatpush1.msra.mxu0 %v2502
        %2589 = vmatprep.mubr.f32.mxu0 %v2520
        %2590 = vmatmul.mubr.f32.gmra.mrb[0].mxu0 %v2519
        %v2591 = vpop.f32.mrb[0].mxu0
        %v2592 = vadd.f32 0.0, %v2591
        %v2593 = vpop.f32.mrb[0].mxu0
        %2594 = vdwg.mxu0
        %2595 = vmatprep.subr.mxu0 0.0
        %2596 = vmatpush1.msra.mxu0 %v2503
        %2597 = vmatprep.subr.mxu0 0.0
        %2598 = vmatpush1.msra.mxu0 %v2504
        %2599 = vmatprep.subr.mxu0 0.0
        %2600 = vmatpush1.msra.mxu0 %v2505
        %2601 = vmatprep.subr.mxu0 0.0
        %2602 = vmatpush1.msra.mxu0 %v2506
        %2603 = vmatprep.subr.mxu0 0.0
        %2604 = vmatpush1.msra.mxu0 %v2507
        %2605 = vmatprep.subr.mxu0 0.0
        %2606 = vmatpush1.msra.mxu0 %v2508
        %2607 = vmatprep.subr.mxu0 0.0
        %2608 = vmatpush1.msra.mxu0 %v2509
        %2609 = vmatprep.subr.mxu0 0.0
        %2610 = vmatpush1.msra.mxu0 %v2510
        %2611 = vmatprep.subr.mxu0 0.0
        %2612 = vmatpush1.msra.mxu0 %v2511
        %2613 = vmatprep.subr.mxu0 0.0
        %2614 = vmatpush1.msra.mxu0 %v2512
        %2615 = vmatprep.subr.mxu0 0.0
        %2616 = vmatpush1.msra.mxu0 %v2513
        %2617 = vmatprep.subr.mxu0 0.0
        %2618 = vmatpush1.msra.mxu0 %v2514
        %2619 = vmatprep.subr.mxu0 0.0
        %2620 = vmatpush1.msra.mxu0 %v2515
        %2621 = vmatprep.subr.mxu0 0.0
        %2622 = vmatpush1.msra.mxu0 %v2516
        %2623 = vmatprep.subr.mxu0 0.0
        %2624 = vmatpush1.msra.mxu0 %v2517
        %2625 = vmatprep.subr.mxu0 0.0
        %2626 = vmatpush1.msra.mxu0 %v2518
        %2627 = vmatprep.subr.mxu0 0.0
        %2628 = vmatpush1.msra.mxu0 0.0
        %2629 = vmatprep.subr.mxu0 0.0
        %2630 = vmatpush1.msra.mxu0 0.0
        %2631 = vmatprep.subr.mxu0 0.0
        %2632 = vmatpush1.msra.mxu0 0.0
        %2633 = vmatprep.subr.mxu0 0.0
        %2634 = vmatpush1.msra.mxu0 0.0
        %2635 = vmatprep.subr.mxu0 0.0
        %2636 = vmatpush1.msra.mxu0 0.0
        %2637 = vmatprep.subr.mxu0 0.0
        %2638 = vmatpush1.msra.mxu0 0.0
        %2639 = vmatprep.subr.mxu0 0.0
        %2640 = vmatpush1.msra.mxu0 0.0
        %2641 = vmatprep.subr.mxu0 0.0
        %2642 = vmatpush1.msra.mxu0 0.0
        %2643 = vmatprep.subr.mxu0 0.0
        %2644 = vmatpush1.msra.mxu0 0.0
        %2645 = vmatprep.subr.mxu0 0.0
        %2646 = vmatpush1.msra.mxu0 0.0
        %2647 = vmatprep.subr.mxu0 0.0
        %2648 = vmatpush1.msra.mxu0 0.0
        %2649 = vmatprep.subr.mxu0 0.0
        %2650 = vmatpush1.msra.mxu0 0.0
        %2651 = vmatprep.subr.mxu0 0.0
        %2652 = vmatpush1.msra.mxu0 0.0
        %2653 = vmatprep.subr.mxu0 0.0
        %2654 = vmatpush1.msra.mxu0 0.0
        %2655 = vmatprep.subr.mxu0 0.0
        %2656 = vmatpush1.msra.mxu0 0.0
        %2657 = vmatprep.subr.mxu0 0.0
        %2658 = vmatpush1.msra.mxu0 0.0
        %2659 = vmatprep.mubr.f32.mxu0 0.0
        %2660 = vmatmul.mubr.f32.gmra.mrb[0].mxu0 %v2521
        %v2661 = vpop.f32.mrb[0].mxu0
        %v2662 = vadd.f32 %v2592, %v2661
        %v2663 = vpop.f32.mrb[0].mxu0
        %2664 = vdwg.mxu0
        %v2665 = vadd.f32 %v2469, %v2662
        %s2666 = scalar_lea.vmem [#allocation11], 3072
        %v2667 = vld [vmem:[%s2666] sm:$0xff]
        %v2668 = vld [vmem:[%s2666 + $0x8] sm:$0xff]
        %v2669 = vld [vmem:[%s2666 + $0x10] sm:$0xff]
        %v2670 = vld [vmem:[%s2666 + $0x18] sm:$0xff]
        %v2671 = vld [vmem:[%s2666 + $0x20] sm:$0xff]
        %v2672 = vld [vmem:[%s2666 + $0x28] sm:$0xff]
        %v2673 = vld [vmem:[%s2666 + $0x30] sm:$0xff]
        %v2674 = vld [vmem:[%s2666 + $0x38] sm:$0xff]
        %v2675 = vld [vmem:[%s2666 + $0x40] sm:$0xff]
        %v2676 = vld [vmem:[%s2666 + $0x48] sm:$0xff]
        %v2677 = vld [vmem:[%s2666 + $0x50] sm:$0xff]
        %v2678 = vld [vmem:[%s2666 + $0x58] sm:$0xff]
        %v2679 = vld [vmem:[%s2666 + $0x60] sm:$0xff]
        %v2680 = vld [vmem:[%s2666 + $0x68] sm:$0xff]
        %v2681 = vld [vmem:[%s2666 + $0x70] sm:$0xff]
        %v2682 = vld [vmem:[%s2666 + $0x78] sm:$0xff]
        %v2683 = vld [vmem:[%s2666 + $0x80] sm:$0xff]
        %v2684 = vld [vmem:[%s2666 + $0x88] sm:$0xff]
        %v2685 = vld [vmem:[%s2666 + $0x90] sm:$0xff]
        %v2686 = vld [vmem:[%s2666 + $0x98] sm:$0xff]
        %v2687 = vld [vmem:[%s2666 + $0xa0] sm:$0xff]
        %v2688 = vld [vmem:[%s2666 + $0xa8] sm:$0xff]
        %v2689 = vld [vmem:[%s2666 + $0xb0] sm:$0xff]
        %v2690 = vld [vmem:[%s2666 + $0xb8] sm:$0xff]
        %v2691 = vld [vmem:[%s2666 + $0xc0] sm:$0xff]
        %v2692 = vld [vmem:[%s2666 + $0xc8] sm:$0xff]
        %v2693 = vld [vmem:[%s2666 + $0xd0] sm:$0xff]
        %v2694 = vld [vmem:[%s2666 + $0xd8] sm:$0xff]
        %v2695 = vld [vmem:[%s2666 + $0xe0] sm:$0xff]
        %v2696 = vld [vmem:[%s2666 + $0xe8] sm:$0xff]
        %v2697 = vld [vmem:[%s2666 + $0xf0] sm:$0xff]
        %v2698 = vld [vmem:[%s2666 + $0xf8] sm:$0xff]
        %v2699 = vld [vmem:[%s2666 + $0x100] sm:$0xff]
        %v2700 = vld [vmem:[%s2666 + $0x108] sm:$0xff]
        %v2701 = vld [vmem:[%s2666 + $0x110] sm:$0xff]
        %v2702 = vld [vmem:[%s2666 + $0x118] sm:$0xff]
        %v2703 = vld [vmem:[%s2666 + $0x120] sm:$0xff]
        %v2704 = vld [vmem:[%s2666 + $0x128] sm:$0xff]
        %v2705 = vld [vmem:[%s2666 + $0x130] sm:$0xff]
        %v2706 = vld [vmem:[%s2666 + $0x138] sm:$0xff]
        %v2707 = vld [vmem:[%s2666 + $0x140] sm:$0xff]
        %v2708 = vld [vmem:[%s2666 + $0x148] sm:$0xff]
        %v2709 = vld [vmem:[%s2666 + $0x150] sm:$0xff]
        %v2710 = vld [vmem:[%s2666 + $0x158] sm:$0xff]
        %v2711 = vld [vmem:[%s2666 + $0x160] sm:$0xff]
        %v2712 = vld [vmem:[%s2666 + $0x168] sm:$0xff]
        %v2713 = vld [vmem:[%s2666 + $0x170] sm:$0xff]
        %v2714 = vld [vmem:[%s2666 + $0x178] sm:$0xff]
        %2715 = vmatprep.subr.mxu0 0.0
        %2716 = vmatpush1.msra.mxu0 %v2667
        %2717 = vmatprep.subr.mxu0 0.0
        %2718 = vmatpush1.msra.mxu0 %v2668
        %2719 = vmatprep.subr.mxu0 0.0
        %2720 = vmatpush1.msra.mxu0 %v2669
        %2721 = vmatprep.subr.mxu0 0.0
        %2722 = vmatpush1.msra.mxu0 %v2670
        %2723 = vmatprep.subr.mxu0 0.0
        %2724 = vmatpush1.msra.mxu0 %v2671
        %2725 = vmatprep.subr.mxu0 0.0
        %2726 = vmatpush1.msra.mxu0 %v2672
        %2727 = vmatprep.subr.mxu0 0.0
        %2728 = vmatpush1.msra.mxu0 %v2673
        %2729 = vmatprep.subr.mxu0 0.0
        %2730 = vmatpush1.msra.mxu0 %v2674
        %2731 = vmatprep.subr.mxu0 0.0
        %2732 = vmatpush1.msra.mxu0 %v2675
        %2733 = vmatprep.subr.mxu0 0.0
        %2734 = vmatpush1.msra.mxu0 %v2676
        %2735 = vmatprep.subr.mxu0 0.0
        %2736 = vmatpush1.msra.mxu0 %v2677
        %2737 = vmatprep.subr.mxu0 0.0
        %2738 = vmatpush1.msra.mxu0 %v2678
        %2739 = vmatprep.subr.mxu0 0.0
        %2740 = vmatpush1.msra.mxu0 %v2679
        %2741 = vmatprep.subr.mxu0 0.0
        %2742 = vmatpush1.msra.mxu0 %v2680
        %2743 = vmatprep.subr.mxu0 0.0
        %2744 = vmatpush1.msra.mxu0 %v2681
        %2745 = vmatprep.subr.mxu0 0.0
        %2746 = vmatpush1.msra.mxu0 %v2682
        %2747 = vmatprep.subr.mxu0 0.0
        %2748 = vmatpush1.msra.mxu0 %v2683
        %2749 = vmatprep.subr.mxu0 0.0
        %2750 = vmatpush1.msra.mxu0 %v2684
        %2751 = vmatprep.subr.mxu0 0.0
        %2752 = vmatpush1.msra.mxu0 %v2685
        %2753 = vmatprep.subr.mxu0 0.0
        %2754 = vmatpush1.msra.mxu0 %v2686
        %2755 = vmatprep.subr.mxu0 0.0
        %2756 = vmatpush1.msra.mxu0 %v2687
        %2757 = vmatprep.subr.mxu0 0.0
        %2758 = vmatpush1.msra.mxu0 %v2688
        %2759 = vmatprep.subr.mxu0 0.0
        %2760 = vmatpush1.msra.mxu0 %v2689
        %2761 = vmatprep.subr.mxu0 0.0
        %2762 = vmatpush1.msra.mxu0 %v2690
        %2763 = vmatprep.subr.mxu0 0.0
        %2764 = vmatpush1.msra.mxu0 %v2691
        %2765 = vmatprep.subr.mxu0 0.0
        %2766 = vmatpush1.msra.mxu0 %v2692
        %2767 = vmatprep.subr.mxu0 0.0
        %2768 = vmatpush1.msra.mxu0 %v2693
        %2769 = vmatprep.subr.mxu0 0.0
        %2770 = vmatpush1.msra.mxu0 %v2694
        %2771 = vmatprep.subr.mxu0 0.0
        %2772 = vmatpush1.msra.mxu0 %v2695
        %2773 = vmatprep.subr.mxu0 0.0
        %2774 = vmatpush1.msra.mxu0 %v2696
        %2775 = vmatprep.subr.mxu0 0.0
        %2776 = vmatpush1.msra.mxu0 %v2697
        %2777 = vmatprep.subr.mxu0 0.0
        %2778 = vmatpush1.msra.mxu0 %v2698
        %2779 = vmatprep.mubr.f32.mxu0 %v1099
        %2780 = vmatmul.mubr.f32.gmra.mrb[0].mxu0 %v1098
        %v2781 = vpop.f32.mrb[0].mxu0
        %v2782 = vadd.f32 0.0, %v2781
        %v2783 = vpop.f32.mrb[0].mxu0
        %2784 = vdwg.mxu0
        %2785 = vmatprep.subr.mxu0 0.0
        %2786 = vmatpush1.msra.mxu0 %v2699
        %2787 = vmatprep.subr.mxu0 0.0
        %2788 = vmatpush1.msra.mxu0 %v2700
        %2789 = vmatprep.subr.mxu0 0.0
        %2790 = vmatpush1.msra.mxu0 %v2701
        %2791 = vmatprep.subr.mxu0 0.0
        %2792 = vmatpush1.msra.mxu0 %v2702
        %2793 = vmatprep.subr.mxu0 0.0
        %2794 = vmatpush1.msra.mxu0 %v2703
        %2795 = vmatprep.subr.mxu0 0.0
        %2796 = vmatpush1.msra.mxu0 %v2704
        %2797 = vmatprep.subr.mxu0 0.0
        %2798 = vmatpush1.msra.mxu0 %v2705
        %2799 = vmatprep.subr.mxu0 0.0
        %2800 = vmatpush1.msra.mxu0 %v2706
        %2801 = vmatprep.subr.mxu0 0.0
        %2802 = vmatpush1.msra.mxu0 %v2707
        %2803 = vmatprep.subr.mxu0 0.0
        %2804 = vmatpush1.msra.mxu0 %v2708
        %2805 = vmatprep.subr.mxu0 0.0
        %2806 = vmatpush1.msra.mxu0 %v2709
        %2807 = vmatprep.subr.mxu0 0.0
        %2808 = vmatpush1.msra.mxu0 %v2710
        %2809 = vmatprep.subr.mxu0 0.0
        %2810 = vmatpush1.msra.mxu0 %v2711
        %2811 = vmatprep.subr.mxu0 0.0
        %2812 = vmatpush1.msra.mxu0 %v2712
        %2813 = vmatprep.subr.mxu0 0.0
        %2814 = vmatpush1.msra.mxu0 %v2713
        %2815 = vmatprep.subr.mxu0 0.0
        %2816 = vmatpush1.msra.mxu0 %v2714
        %2817 = vmatprep.subr.mxu0 0.0
        %2818 = vmatpush1.msra.mxu0 0.0
        %2819 = vmatprep.subr.mxu0 0.0
        %2820 = vmatpush1.msra.mxu0 0.0
        %2821 = vmatprep.subr.mxu0 0.0
        %2822 = vmatpush1.msra.mxu0 0.0
        %2823 = vmatprep.subr.mxu0 0.0
        %2824 = vmatpush1.msra.mxu0 0.0
        %2825 = vmatprep.subr.mxu0 0.0
        %2826 = vmatpush1.msra.mxu0 0.0
        %2827 = vmatprep.subr.mxu0 0.0
        %2828 = vmatpush1.msra.mxu0 0.0
        %2829 = vmatprep.subr.mxu0 0.0
        %2830 = vmatpush1.msra.mxu0 0.0
        %2831 = vmatprep.subr.mxu0 0.0
        %2832 = vmatpush1.msra.mxu0 0.0
        %2833 = vmatprep.subr.mxu0 0.0
        %2834 = vmatpush1.msra.mxu0 0.0
        %2835 = vmatprep.subr.mxu0 0.0
        %2836 = vmatpush1.msra.mxu0 0.0
        %2837 = vmatprep.subr.mxu0 0.0
        %2838 = vmatpush1.msra.mxu0 0.0
        %2839 = vmatprep.subr.mxu0 0.0
        %2840 = vmatpush1.msra.mxu0 0.0
        %2841 = vmatprep.subr.mxu0 0.0
        %2842 = vmatpush1.msra.mxu0 0.0
        %2843 = vmatprep.subr.mxu0 0.0
        %2844 = vmatpush1.msra.mxu0 0.0
        %2845 = vmatprep.subr.mxu0 0.0
        %2846 = vmatpush1.msra.mxu0 0.0
        %2847 = vmatprep.subr.mxu0 0.0
        %2848 = vmatpush1.msra.mxu0 0.0
        %2849 = vmatprep.mubr.f32.mxu0 0.0
        %2850 = vmatmul.mubr.f32.gmra.mrb[0].mxu0 %v1100
        %v2851 = vpop.f32.mrb[0].mxu0
        %v2852 = vadd.f32 %v2782, %v2851
        %v2853 = vpop.f32.mrb[0].mxu0
        %2854 = vdwg.mxu0
        %v2855 = vadd.f32 %v2665, %v2852
        %s2856 = scalar_lea.vmem [#allocation11], 3456
        %v2857 = vld [vmem:[%s2856] sm:$0xff]
        %v2858 = vld [vmem:[%s2856 + $0x8] sm:$0xff]
        %v2859 = vld [vmem:[%s2856 + $0x10] sm:$0xff]
        %v2860 = vld [vmem:[%s2856 + $0x18] sm:$0xff]
        %v2861 = vld [vmem:[%s2856 + $0x20] sm:$0xff]
        %v2862 = vld [vmem:[%s2856 + $0x28] sm:$0xff]
        %v2863 = vld [vmem:[%s2856 + $0x30] sm:$0xff]
        %v2864 = vld [vmem:[%s2856 + $0x38] sm:$0xff]
        %v2865 = vld [vmem:[%s2856 + $0x40] sm:$0xff]
        %v2866 = vld [vmem:[%s2856 + $0x48] sm:$0xff]
        %v2867 = vld [vmem:[%s2856 + $0x50] sm:$0xff]
        %v2868 = vld [vmem:[%s2856 + $0x58] sm:$0xff]
        %v2869 = vld [vmem:[%s2856 + $0x60] sm:$0xff]
        %v2870 = vld [vmem:[%s2856 + $0x68] sm:$0xff]
        %v2871 = vld [vmem:[%s2856 + $0x70] sm:$0xff]
        %v2872 = vld [vmem:[%s2856 + $0x78] sm:$0xff]
        %v2873 = vld [vmem:[%s2856 + $0x80] sm:$0xff]
        %v2874 = vld [vmem:[%s2856 + $0x88] sm:$0xff]
        %v2875 = vld [vmem:[%s2856 + $0x90] sm:$0xff]
        %v2876 = vld [vmem:[%s2856 + $0x98] sm:$0xff]
        %v2877 = vld [vmem:[%s2856 + $0xa0] sm:$0xff]
        %v2878 = vld [vmem:[%s2856 + $0xa8] sm:$0xff]
        %v2879 = vld [vmem:[%s2856 + $0xb0] sm:$0xff]
        %v2880 = vld [vmem:[%s2856 + $0xb8] sm:$0xff]
        %v2881 = vld [vmem:[%s2856 + $0xc0] sm:$0xff]
        %v2882 = vld [vmem:[%s2856 + $0xc8] sm:$0xff]
        %v2883 = vld [vmem:[%s2856 + $0xd0] sm:$0xff]
        %v2884 = vld [vmem:[%s2856 + $0xd8] sm:$0xff]
        %v2885 = vld [vmem:[%s2856 + $0xe0] sm:$0xff]
        %v2886 = vld [vmem:[%s2856 + $0xe8] sm:$0xff]
        %v2887 = vld [vmem:[%s2856 + $0xf0] sm:$0xff]
        %v2888 = vld [vmem:[%s2856 + $0xf8] sm:$0xff]
        %v2889 = vld [vmem:[%s2856 + $0x100] sm:$0xff]
        %v2890 = vld [vmem:[%s2856 + $0x108] sm:$0xff]
        %v2891 = vld [vmem:[%s2856 + $0x110] sm:$0xff]
        %v2892 = vld [vmem:[%s2856 + $0x118] sm:$0xff]
        %v2893 = vld [vmem:[%s2856 + $0x120] sm:$0xff]
        %v2894 = vld [vmem:[%s2856 + $0x128] sm:$0xff]
        %v2895 = vld [vmem:[%s2856 + $0x130] sm:$0xff]
        %v2896 = vld [vmem:[%s2856 + $0x138] sm:$0xff]
        %v2897 = vld [vmem:[%s2856 + $0x140] sm:$0xff]
        %v2898 = vld [vmem:[%s2856 + $0x148] sm:$0xff]
        %v2899 = vld [vmem:[%s2856 + $0x150] sm:$0xff]
        %v2900 = vld [vmem:[%s2856 + $0x158] sm:$0xff]
        %v2901 = vld [vmem:[%s2856 + $0x160] sm:$0xff]
        %v2902 = vld [vmem:[%s2856 + $0x168] sm:$0xff]
        %v2903 = vld [vmem:[%s2856 + $0x170] sm:$0xff]
        %v2904 = vld [vmem:[%s2856 + $0x178] sm:$0xff]
        %v2908 = vrot.slane %v1098, 1
        %v2909 = vrot.slane %v1099, 1
        %v2910 = vrot.slane %v1100, 1
        %2914 = vmatprep.subr.mxu0 0.0
        %2915 = vmatpush1.msra.mxu0 %v2857
        %2916 = vmatprep.subr.mxu0 0.0
        %2917 = vmatpush1.msra.mxu0 %v2858
        %2918 = vmatprep.subr.mxu0 0.0
        %2919 = vmatpush1.msra.mxu0 %v2859
        %2920 = vmatprep.subr.mxu0 0.0
        %2921 = vmatpush1.msra.mxu0 %v2860
        %2922 = vmatprep.subr.mxu0 0.0
        %2923 = vmatpush1.msra.mxu0 %v2861
        %2924 = vmatprep.subr.mxu0 0.0
        %2925 = vmatpush1.msra.mxu0 %v2862
        %2926 = vmatprep.subr.mxu0 0.0
        %2927 = vmatpush1.msra.mxu0 %v2863
        %2928 = vmatprep.subr.mxu0 0.0
        %2929 = vmatpush1.msra.mxu0 %v2864
        %2930 = vmatprep.subr.mxu0 0.0
        %2931 = vmatpush1.msra.mxu0 %v2865
        %2932 = vmatprep.subr.mxu0 0.0
        %2933 = vmatpush1.msra.mxu0 %v2866
        %2934 = vmatprep.subr.mxu0 0.0
        %2935 = vmatpush1.msra.mxu0 %v2867
        %2936 = vmatprep.subr.mxu0 0.0
        %2937 = vmatpush1.msra.mxu0 %v2868
        %2938 = vmatprep.subr.mxu0 0.0
        %2939 = vmatpush1.msra.mxu0 %v2869
        %2940 = vmatprep.subr.mxu0 0.0
        %2941 = vmatpush1.msra.mxu0 %v2870
        %2942 = vmatprep.subr.mxu0 0.0
        %2943 = vmatpush1.msra.mxu0 %v2871
        %2944 = vmatprep.subr.mxu0 0.0
        %2945 = vmatpush1.msra.mxu0 %v2872
        %2946 = vmatprep.subr.mxu0 0.0
        %2947 = vmatpush1.msra.mxu0 %v2873
        %2948 = vmatprep.subr.mxu0 0.0
        %2949 = vmatpush1.msra.mxu0 %v2874
        %2950 = vmatprep.subr.mxu0 0.0
        %2951 = vmatpush1.msra.mxu0 %v2875
        %2952 = vmatprep.subr.mxu0 0.0
        %2953 = vmatpush1.msra.mxu0 %v2876
        %2954 = vmatprep.subr.mxu0 0.0
        %2955 = vmatpush1.msra.mxu0 %v2877
        %2956 = vmatprep.subr.mxu0 0.0
        %2957 = vmatpush1.msra.mxu0 %v2878
        %2958 = vmatprep.subr.mxu0 0.0
        %2959 = vmatpush1.msra.mxu0 %v2879
        %2960 = vmatprep.subr.mxu0 0.0
        %2961 = vmatpush1.msra.mxu0 %v2880
        %2962 = vmatprep.subr.mxu0 0.0
        %2963 = vmatpush1.msra.mxu0 %v2881
        %2964 = vmatprep.subr.mxu0 0.0
        %2965 = vmatpush1.msra.mxu0 %v2882
        %2966 = vmatprep.subr.mxu0 0.0
        %2967 = vmatpush1.msra.mxu0 %v2883
        %2968 = vmatprep.subr.mxu0 0.0
        %2969 = vmatpush1.msra.mxu0 %v2884
        %2970 = vmatprep.subr.mxu0 0.0
        %2971 = vmatpush1.msra.mxu0 %v2885
        %2972 = vmatprep.subr.mxu0 0.0
        %2973 = vmatpush1.msra.mxu0 %v2886
        %2974 = vmatprep.subr.mxu0 0.0
        %2975 = vmatpush1.msra.mxu0 %v2887
        %2976 = vmatprep.subr.mxu0 0.0
        %2977 = vmatpush1.msra.mxu0 %v2888
        %2978 = vmatprep.mubr.f32.mxu0 %v2909
        %2979 = vmatmul.mubr.f32.gmra.mrb[0].mxu0 %v2908
        %v2980 = vpop.f32.mrb[0].mxu0
        %v2981 = vadd.f32 0.0, %v2980
        %v2982 = vpop.f32.mrb[0].mxu0
        %2983 = vdwg.mxu0
        %2984 = vmatprep.subr.mxu0 0.0
        %2985 = vmatpush1.msra.mxu0 %v2889
        %2986 = vmatprep.subr.mxu0 0.0
        %2987 = vmatpush1.msra.mxu0 %v2890
        %2988 = vmatprep.subr.mxu0 0.0
        %2989 = vmatpush1.msra.mxu0 %v2891
        %2990 = vmatprep.subr.mxu0 0.0
        %2991 = vmatpush1.msra.mxu0 %v2892
        %2992 = vmatprep.subr.mxu0 0.0
        %2993 = vmatpush1.msra.mxu0 %v2893
        %2994 = vmatprep.subr.mxu0 0.0
        %2995 = vmatpush1.msra.mxu0 %v2894
        %2996 = vmatprep.subr.mxu0 0.0
        %2997 = vmatpush1.msra.mxu0 %v2895
        %2998 = vmatprep.subr.mxu0 0.0
        %2999 = vmatpush1.msra.mxu0 %v2896
        %3000 = vmatprep.subr.mxu0 0.0
        %3001 = vmatpush1.msra.mxu0 %v2897
        %3002 = vmatprep.subr.mxu0 0.0
        %3003 = vmatpush1.msra.mxu0 %v2898
        %3004 = vmatprep.subr.mxu0 0.0
        %3005 = vmatpush1.msra.mxu0 %v2899
        %3006 = vmatprep.subr.mxu0 0.0
        %3007 = vmatpush1.msra.mxu0 %v2900
        %3008 = vmatprep.subr.mxu0 0.0
        %3009 = vmatpush1.msra.mxu0 %v2901
        %3010 = vmatprep.subr.mxu0 0.0
        %3011 = vmatpush1.msra.mxu0 %v2902
        %3012 = vmatprep.subr.mxu0 0.0
        %3013 = vmatpush1.msra.mxu0 %v2903
        %3014 = vmatprep.subr.mxu0 0.0
        %3015 = vmatpush1.msra.mxu0 %v2904
        %3016 = vmatprep.subr.mxu0 0.0
        %3017 = vmatpush1.msra.mxu0 0.0
        %3018 = vmatprep.subr.mxu0 0.0
        %3019 = vmatpush1.msra.mxu0 0.0
        %3020 = vmatprep.subr.mxu0 0.0
        %3021 = vmatpush1.msra.mxu0 0.0
        %3022 = vmatprep.subr.mxu0 0.0
        %3023 = vmatpush1.msra.mxu0 0.0
        %3024 = vmatprep.subr.mxu0 0.0
        %3025 = vmatpush1.msra.mxu0 0.0
        %3026 = vmatprep.subr.mxu0 0.0
        %3027 = vmatpush1.msra.mxu0 0.0
        %3028 = vmatprep.subr.mxu0 0.0
        %3029 = vmatpush1.msra.mxu0 0.0
        %3030 = vmatprep.subr.mxu0 0.0
        %3031 = vmatpush1.msra.mxu0 0.0
        %3032 = vmatprep.subr.mxu0 0.0
        %3033 = vmatpush1.msra.mxu0 0.0
        %3034 = vmatprep.subr.mxu0 0.0
        %3035 = vmatpush1.msra.mxu0 0.0
        %3036 = vmatprep.subr.mxu0 0.0
        %3037 = vmatpush1.msra.mxu0 0.0
        %3038 = vmatprep.subr.mxu0 0.0
        %3039 = vmatpush1.msra.mxu0 0.0
        %3040 = vmatprep.subr.mxu0 0.0
        %3041 = vmatpush1.msra.mxu0 0.0
        %3042 = vmatprep.subr.mxu0 0.0
        %3043 = vmatpush1.msra.mxu0 0.0
        %3044 = vmatprep.subr.mxu0 0.0
        %3045 = vmatpush1.msra.mxu0 0.0
        %3046 = vmatprep.subr.mxu0 0.0
        %3047 = vmatpush1.msra.mxu0 0.0
        %3048 = vmatprep.mubr.f32.mxu0 0.0
        %3049 = vmatmul.mubr.f32.gmra.mrb[0].mxu0 %v2910
        %v3050 = vpop.f32.mrb[0].mxu0
        %v3051 = vadd.f32 %v2981, %v3050
        %v3052 = vpop.f32.mrb[0].mxu0
        %3053 = vdwg.mxu0
        %v3054 = vadd.f32 %v2855, %v3051
        %s3055 = scalar_lea.vmem [#allocation11], 3840
        %v3056 = vld [vmem:[%s3055] sm:$0xff]
        %v3057 = vld [vmem:[%s3055 + $0x8] sm:$0xff]
        %v3058 = vld [vmem:[%s3055 + $0x10] sm:$0xff]
        %v3059 = vld [vmem:[%s3055 + $0x18] sm:$0xff]
        %v3060 = vld [vmem:[%s3055 + $0x20] sm:$0xff]
        %v3061 = vld [vmem:[%s3055 + $0x28] sm:$0xff]
        %v3062 = vld [vmem:[%s3055 + $0x30] sm:$0xff]
        %v3063 = vld [vmem:[%s3055 + $0x38] sm:$0xff]
        %v3064 = vld [vmem:[%s3055 + $0x40] sm:$0xff]
        %v3065 = vld [vmem:[%s3055 + $0x48] sm:$0xff]
        %v3066 = vld [vmem:[%s3055 + $0x50] sm:$0xff]
        %v3067 = vld [vmem:[%s3055 + $0x58] sm:$0xff]
        %v3068 = vld [vmem:[%s3055 + $0x60] sm:$0xff]
        %v3069 = vld [vmem:[%s3055 + $0x68] sm:$0xff]
        %v3070 = vld [vmem:[%s3055 + $0x70] sm:$0xff]
        %v3071 = vld [vmem:[%s3055 + $0x78] sm:$0xff]
        %v3072 = vld [vmem:[%s3055 + $0x80] sm:$0xff]
        %v3073 = vld [vmem:[%s3055 + $0x88] sm:$0xff]
        %v3074 = vld [vmem:[%s3055 + $0x90] sm:$0xff]
        %v3075 = vld [vmem:[%s3055 + $0x98] sm:$0xff]
        %v3076 = vld [vmem:[%s3055 + $0xa0] sm:$0xff]
        %v3077 = vld [vmem:[%s3055 + $0xa8] sm:$0xff]
        %v3078 = vld [vmem:[%s3055 + $0xb0] sm:$0xff]
        %v3079 = vld [vmem:[%s3055 + $0xb8] sm:$0xff]
        %v3080 = vld [vmem:[%s3055 + $0xc0] sm:$0xff]
        %v3081 = vld [vmem:[%s3055 + $0xc8] sm:$0xff]
        %v3082 = vld [vmem:[%s3055 + $0xd0] sm:$0xff]
        %v3083 = vld [vmem:[%s3055 + $0xd8] sm:$0xff]
        %v3084 = vld [vmem:[%s3055 + $0xe0] sm:$0xff]
        %v3085 = vld [vmem:[%s3055 + $0xe8] sm:$0xff]
        %v3086 = vld [vmem:[%s3055 + $0xf0] sm:$0xff]
        %v3087 = vld [vmem:[%s3055 + $0xf8] sm:$0xff]
        %v3088 = vld [vmem:[%s3055 + $0x100] sm:$0xff]
        %v3089 = vld [vmem:[%s3055 + $0x108] sm:$0xff]
        %v3090 = vld [vmem:[%s3055 + $0x110] sm:$0xff]
        %v3091 = vld [vmem:[%s3055 + $0x118] sm:$0xff]
        %v3092 = vld [vmem:[%s3055 + $0x120] sm:$0xff]
        %v3093 = vld [vmem:[%s3055 + $0x128] sm:$0xff]
        %v3094 = vld [vmem:[%s3055 + $0x130] sm:$0xff]
        %v3095 = vld [vmem:[%s3055 + $0x138] sm:$0xff]
        %v3096 = vld [vmem:[%s3055 + $0x140] sm:$0xff]
        %v3097 = vld [vmem:[%s3055 + $0x148] sm:$0xff]
        %v3098 = vld [vmem:[%s3055 + $0x150] sm:$0xff]
        %v3099 = vld [vmem:[%s3055 + $0x158] sm:$0xff]
        %v3100 = vld [vmem:[%s3055 + $0x160] sm:$0xff]
        %v3101 = vld [vmem:[%s3055 + $0x168] sm:$0xff]
        %v3102 = vld [vmem:[%s3055 + $0x170] sm:$0xff]
        %v3103 = vld [vmem:[%s3055 + $0x178] sm:$0xff]
        %v3104 = vrot.slane %v1098, 2
        %v3105 = vrot.slane %v1099, 2
        %v3106 = vrot.slane %v1100, 2
        %3110 = vmatprep.subr.mxu0 0.0
        %3111 = vmatpush1.msra.mxu0 %v3056
        %3112 = vmatprep.subr.mxu0 0.0
        %3113 = vmatpush1.msra.mxu0 %v3057
        %3114 = vmatprep.subr.mxu0 0.0
        %3115 = vmatpush1.msra.mxu0 %v3058
        %3116 = vmatprep.subr.mxu0 0.0
        %3117 = vmatpush1.msra.mxu0 %v3059
        %3118 = vmatprep.subr.mxu0 0.0
        %3119 = vmatpush1.msra.mxu0 %v3060
        %3120 = vmatprep.subr.mxu0 0.0
        %3121 = vmatpush1.msra.mxu0 %v3061
        %3122 = vmatprep.subr.mxu0 0.0
        %3123 = vmatpush1.msra.mxu0 %v3062
        %3124 = vmatprep.subr.mxu0 0.0
        %3125 = vmatpush1.msra.mxu0 %v3063
        %3126 = vmatprep.subr.mxu0 0.0
        %3127 = vmatpush1.msra.mxu0 %v3064
        %3128 = vmatprep.subr.mxu0 0.0
        %3129 = vmatpush1.msra.mxu0 %v3065
        %3130 = vmatprep.subr.mxu0 0.0
        %3131 = vmatpush1.msra.mxu0 %v3066
        %3132 = vmatprep.subr.mxu0 0.0
        %3133 = vmatpush1.msra.mxu0 %v3067
        %3134 = vmatprep.subr.mxu0 0.0
        %3135 = vmatpush1.msra.mxu0 %v3068
        %3136 = vmatprep.subr.mxu0 0.0
        %3137 = vmatpush1.msra.mxu0 %v3069
        %3138 = vmatprep.subr.mxu0 0.0
        %3139 = vmatpush1.msra.mxu0 %v3070
        %3140 = vmatprep.subr.mxu0 0.0
        %3141 = vmatpush1.msra.mxu0 %v3071
        %3142 = vmatprep.subr.mxu0 0.0
        %3143 = vmatpush1.msra.mxu0 %v3072
        %3144 = vmatprep.subr.mxu0 0.0
        %3145 = vmatpush1.msra.mxu0 %v3073
        %3146 = vmatprep.subr.mxu0 0.0
        %3147 = vmatpush1.msra.mxu0 %v3074
        %3148 = vmatprep.subr.mxu0 0.0
        %3149 = vmatpush1.msra.mxu0 %v3075
        %3150 = vmatprep.subr.mxu0 0.0
        %3151 = vmatpush1.msra.mxu0 %v3076
        %3152 = vmatprep.subr.mxu0 0.0
        %3153 = vmatpush1.msra.mxu0 %v3077
        %3154 = vmatprep.subr.mxu0 0.0
        %3155 = vmatpush1.msra.mxu0 %v3078
        %3156 = vmatprep.subr.mxu0 0.0
        %3157 = vmatpush1.msra.mxu0 %v3079
        %3158 = vmatprep.subr.mxu0 0.0
        %3159 = vmatpush1.msra.mxu0 %v3080
        %3160 = vmatprep.subr.mxu0 0.0
        %3161 = vmatpush1.msra.mxu0 %v3081
        %3162 = vmatprep.subr.mxu0 0.0
        %3163 = vmatpush1.msra.mxu0 %v3082
        %3164 = vmatprep.subr.mxu0 0.0
        %3165 = vmatpush1.msra.mxu0 %v3083
        %3166 = vmatprep.subr.mxu0 0.0
        %3167 = vmatpush1.msra.mxu0 %v3084
        %3168 = vmatprep.subr.mxu0 0.0
        %3169 = vmatpush1.msra.mxu0 %v3085
        %3170 = vmatprep.subr.mxu0 0.0
        %3171 = vmatpush1.msra.mxu0 %v3086
        %3172 = vmatprep.subr.mxu0 0.0
        %3173 = vmatpush1.msra.mxu0 %v3087
        %3174 = vmatprep.mubr.f32.mxu0 %v3105
        %3175 = vmatmul.mubr.f32.gmra.mrb[0].mxu0 %v3104
        %v3176 = vpop.f32.mrb[0].mxu0
        %v3177 = vadd.f32 0.0, %v3176
        %v3178 = vpop.f32.mrb[0].mxu0
        %3179 = vdwg.mxu0
        %3180 = vmatprep.subr.mxu0 0.0
        %3181 = vmatpush1.msra.mxu0 %v3088
        %3182 = vmatprep.subr.mxu0 0.0
        %3183 = vmatpush1.msra.mxu0 %v3089
        %3184 = vmatprep.subr.mxu0 0.0
        %3185 = vmatpush1.msra.mxu0 %v3090
        %3186 = vmatprep.subr.mxu0 0.0
        %3187 = vmatpush1.msra.mxu0 %v3091
        %3188 = vmatprep.subr.mxu0 0.0
        %3189 = vmatpush1.msra.mxu0 %v3092
        %3190 = vmatprep.subr.mxu0 0.0
        %3191 = vmatpush1.msra.mxu0 %v3093
        %3192 = vmatprep.subr.mxu0 0.0
        %3193 = vmatpush1.msra.mxu0 %v3094
        %3194 = vmatprep.subr.mxu0 0.0
        %3195 = vmatpush1.msra.mxu0 %v3095
        %3196 = vmatprep.subr.mxu0 0.0
        %3197 = vmatpush1.msra.mxu0 %v3096
        %3198 = vmatprep.subr.mxu0 0.0
        %3199 = vmatpush1.msra.mxu0 %v3097
        %3200 = vmatprep.subr.mxu0 0.0
        %3201 = vmatpush1.msra.mxu0 %v3098
        %3202 = vmatprep.subr.mxu0 0.0
        %3203 = vmatpush1.msra.mxu0 %v3099
        %3204 = vmatprep.subr.mxu0 0.0
        %3205 = vmatpush1.msra.mxu0 %v3100
        %3206 = vmatprep.subr.mxu0 0.0
        %3207 = vmatpush1.msra.mxu0 %v3101
        %3208 = vmatprep.subr.mxu0 0.0
        %3209 = vmatpush1.msra.mxu0 %v3102
        %3210 = vmatprep.subr.mxu0 0.0
        %3211 = vmatpush1.msra.mxu0 %v3103
        %3212 = vmatprep.subr.mxu0 0.0
        %3213 = vmatpush1.msra.mxu0 0.0
        %3214 = vmatprep.subr.mxu0 0.0
        %3215 = vmatpush1.msra.mxu0 0.0
        %3216 = vmatprep.subr.mxu0 0.0
        %3217 = vmatpush1.msra.mxu0 0.0
        %3218 = vmatprep.subr.mxu0 0.0
        %3219 = vmatpush1.msra.mxu0 0.0
        %3220 = vmatprep.subr.mxu0 0.0
        %3221 = vmatpush1.msra.mxu0 0.0
        %3222 = vmatprep.subr.mxu0 0.0
        %3223 = vmatpush1.msra.mxu0 0.0
        %3224 = vmatprep.subr.mxu0 0.0
        %3225 = vmatpush1.msra.mxu0 0.0
        %3226 = vmatprep.subr.mxu0 0.0
        %3227 = vmatpush1.msra.mxu0 0.0
        %3228 = vmatprep.subr.mxu0 0.0
        %3229 = vmatpush1.msra.mxu0 0.0
        %3230 = vmatprep.subr.mxu0 0.0
        %3231 = vmatpush1.msra.mxu0 0.0
        %3232 = vmatprep.subr.mxu0 0.0
        %3233 = vmatpush1.msra.mxu0 0.0
        %3234 = vmatprep.subr.mxu0 0.0
        %3235 = vmatpush1.msra.mxu0 0.0
        %3236 = vmatprep.subr.mxu0 0.0
        %3237 = vmatpush1.msra.mxu0 0.0
        %3238 = vmatprep.subr.mxu0 0.0
        %3239 = vmatpush1.msra.mxu0 0.0
        %3240 = vmatprep.subr.mxu0 0.0
        %3241 = vmatpush1.msra.mxu0 0.0
        %3242 = vmatprep.subr.mxu0 0.0
        %3243 = vmatpush1.msra.mxu0 0.0
        %3244 = vmatprep.mubr.f32.mxu0 0.0
        %3245 = vmatmul.mubr.f32.gmra.mrb[0].mxu0 %v3106
        %v3246 = vpop.f32.mrb[0].mxu0
        %v3247 = vadd.f32 %v3177, %v3246
        %v3248 = vpop.f32.mrb[0].mxu0
        %3249 = vdwg.mxu0
        %v3250 = vadd.f32 %v3054, %v3247
        %s3251 = scalar_lea.vmem [#allocation11], 4224
        %v3252 = vld [vmem:[%s3251] sm:$0xff]
        %v3253 = vld [vmem:[%s3251 + $0x8] sm:$0xff]
        %v3254 = vld [vmem:[%s3251 + $0x10] sm:$0xff]
        %v3255 = vld [vmem:[%s3251 + $0x18] sm:$0xff]
        %v3256 = vld [vmem:[%s3251 + $0x20] sm:$0xff]
        %v3257 = vld [vmem:[%s3251 + $0x28] sm:$0xff]
        %v3258 = vld [vmem:[%s3251 + $0x30] sm:$0xff]
        %v3259 = vld [vmem:[%s3251 + $0x38] sm:$0xff]
        %v3260 = vld [vmem:[%s3251 + $0x40] sm:$0xff]
        %v3261 = vld [vmem:[%s3251 + $0x48] sm:$0xff]
        %v3262 = vld [vmem:[%s3251 + $0x50] sm:$0xff]
        %v3263 = vld [vmem:[%s3251 + $0x58] sm:$0xff]
        %v3264 = vld [vmem:[%s3251 + $0x60] sm:$0xff]
        %v3265 = vld [vmem:[%s3251 + $0x68] sm:$0xff]
        %v3266 = vld [vmem:[%s3251 + $0x70] sm:$0xff]
        %v3267 = vld [vmem:[%s3251 + $0x78] sm:$0xff]
        %v3268 = vld [vmem:[%s3251 + $0x80] sm:$0xff]
        %v3269 = vld [vmem:[%s3251 + $0x88] sm:$0xff]
        %v3270 = vld [vmem:[%s3251 + $0x90] sm:$0xff]
        %v3271 = vld [vmem:[%s3251 + $0x98] sm:$0xff]
        %v3272 = vld [vmem:[%s3251 + $0xa0] sm:$0xff]
        %v3273 = vld [vmem:[%s3251 + $0xa8] sm:$0xff]
        %v3274 = vld [vmem:[%s3251 + $0xb0] sm:$0xff]
        %v3275 = vld [vmem:[%s3251 + $0xb8] sm:$0xff]
        %v3276 = vld [vmem:[%s3251 + $0xc0] sm:$0xff]
        %v3277 = vld [vmem:[%s3251 + $0xc8] sm:$0xff]
        %v3278 = vld [vmem:[%s3251 + $0xd0] sm:$0xff]
        %v3279 = vld [vmem:[%s3251 + $0xd8] sm:$0xff]
        %v3280 = vld [vmem:[%s3251 + $0xe0] sm:$0xff]
        %v3281 = vld [vmem:[%s3251 + $0xe8] sm:$0xff]
        %v3282 = vld [vmem:[%s3251 + $0xf0] sm:$0xff]
        %v3283 = vld [vmem:[%s3251 + $0xf8] sm:$0xff]
        %v3284 = vld [vmem:[%s3251 + $0x100] sm:$0xff]
        %v3285 = vld [vmem:[%s3251 + $0x108] sm:$0xff]
        %v3286 = vld [vmem:[%s3251 + $0x110] sm:$0xff]
        %v3287 = vld [vmem:[%s3251 + $0x118] sm:$0xff]
        %v3288 = vld [vmem:[%s3251 + $0x120] sm:$0xff]
        %v3289 = vld [vmem:[%s3251 + $0x128] sm:$0xff]
        %v3290 = vld [vmem:[%s3251 + $0x130] sm:$0xff]
        %v3291 = vld [vmem:[%s3251 + $0x138] sm:$0xff]
        %v3292 = vld [vmem:[%s3251 + $0x140] sm:$0xff]
        %v3293 = vld [vmem:[%s3251 + $0x148] sm:$0xff]
        %v3294 = vld [vmem:[%s3251 + $0x150] sm:$0xff]
        %v3295 = vld [vmem:[%s3251 + $0x158] sm:$0xff]
        %v3296 = vld [vmem:[%s3251 + $0x160] sm:$0xff]
        %v3297 = vld [vmem:[%s3251 + $0x168] sm:$0xff]
        %v3298 = vld [vmem:[%s3251 + $0x170] sm:$0xff]
        %v3299 = vld [vmem:[%s3251 + $0x178] sm:$0xff]
        %v3300 = vrot.slane %v1098, 3
        %v3301 = vrot.slane %v1099, 3
        %v3302 = vrot.slane %v1100, 3
        %3306 = vmatprep.subr.mxu0 0.0
        %3307 = vmatpush1.msra.mxu0 %v3252
        %3308 = vmatprep.subr.mxu0 0.0
        %3309 = vmatpush1.msra.mxu0 %v3253
        %3310 = vmatprep.subr.mxu0 0.0
        %3311 = vmatpush1.msra.mxu0 %v3254
        %3312 = vmatprep.subr.mxu0 0.0
        %3313 = vmatpush1.msra.mxu0 %v3255
        %3314 = vmatprep.subr.mxu0 0.0
        %3315 = vmatpush1.msra.mxu0 %v3256
        %3316 = vmatprep.subr.mxu0 0.0
        %3317 = vmatpush1.msra.mxu0 %v3257
        %3318 = vmatprep.subr.mxu0 0.0
        %3319 = vmatpush1.msra.mxu0 %v3258
        %3320 = vmatprep.subr.mxu0 0.0
        %3321 = vmatpush1.msra.mxu0 %v3259
        %3322 = vmatprep.subr.mxu0 0.0
        %3323 = vmatpush1.msra.mxu0 %v3260
        %3324 = vmatprep.subr.mxu0 0.0
        %3325 = vmatpush1.msra.mxu0 %v3261
        %3326 = vmatprep.subr.mxu0 0.0
        %3327 = vmatpush1.msra.mxu0 %v3262
        %3328 = vmatprep.subr.mxu0 0.0
        %3329 = vmatpush1.msra.mxu0 %v3263
        %3330 = vmatprep.subr.mxu0 0.0
        %3331 = vmatpush1.msra.mxu0 %v3264
        %3332 = vmatprep.subr.mxu0 0.0
        %3333 = vmatpush1.msra.mxu0 %v3265
        %3334 = vmatprep.subr.mxu0 0.0
        %3335 = vmatpush1.msra.mxu0 %v3266
        %3336 = vmatprep.subr.mxu0 0.0
        %3337 = vmatpush1.msra.mxu0 %v3267
        %3338 = vmatprep.subr.mxu0 0.0
        %3339 = vmatpush1.msra.mxu0 %v3268
        %3340 = vmatprep.subr.mxu0 0.0
        %3341 = vmatpush1.msra.mxu0 %v3269
        %3342 = vmatprep.subr.mxu0 0.0
        %3343 = vmatpush1.msra.mxu0 %v3270
        %3344 = vmatprep.subr.mxu0 0.0
        %3345 = vmatpush1.msra.mxu0 %v3271
        %3346 = vmatprep.subr.mxu0 0.0
        %3347 = vmatpush1.msra.mxu0 %v3272
        %3348 = vmatprep.subr.mxu0 0.0
        %3349 = vmatpush1.msra.mxu0 %v3273
        %3350 = vmatprep.subr.mxu0 0.0
        %3351 = vmatpush1.msra.mxu0 %v3274
        %3352 = vmatprep.subr.mxu0 0.0
        %3353 = vmatpush1.msra.mxu0 %v3275
        %3354 = vmatprep.subr.mxu0 0.0
        %3355 = vmatpush1.msra.mxu0 %v3276
        %3356 = vmatprep.subr.mxu0 0.0
        %3357 = vmatpush1.msra.mxu0 %v3277
        %3358 = vmatprep.subr.mxu0 0.0
        %3359 = vmatpush1.msra.mxu0 %v3278
        %3360 = vmatprep.subr.mxu0 0.0
        %3361 = vmatpush1.msra.mxu0 %v3279
        %3362 = vmatprep.subr.mxu0 0.0
        %3363 = vmatpush1.msra.mxu0 %v3280
        %3364 = vmatprep.subr.mxu0 0.0
        %3365 = vmatpush1.msra.mxu0 %v3281
        %3366 = vmatprep.subr.mxu0 0.0
        %3367 = vmatpush1.msra.mxu0 %v3282
        %3368 = vmatprep.subr.mxu0 0.0
        %3369 = vmatpush1.msra.mxu0 %v3283
        %3370 = vmatprep.mubr.f32.mxu0 %v3301
        %3371 = vmatmul.mubr.f32.gmra.mrb[0].mxu0 %v3300
        %v3372 = vpop.f32.mrb[0].mxu0
        %v3373 = vadd.f32 0.0, %v3372
        %v3374 = vpop.f32.mrb[0].mxu0
        %3375 = vdwg.mxu0
        %3376 = vmatprep.subr.mxu0 0.0
        %3377 = vmatpush1.msra.mxu0 %v3284
        %3378 = vmatprep.subr.mxu0 0.0
        %3379 = vmatpush1.msra.mxu0 %v3285
        %3380 = vmatprep.subr.mxu0 0.0
        %3381 = vmatpush1.msra.mxu0 %v3286
        %3382 = vmatprep.subr.mxu0 0.0
        %3383 = vmatpush1.msra.mxu0 %v3287
        %3384 = vmatprep.subr.mxu0 0.0
        %3385 = vmatpush1.msra.mxu0 %v3288
        %3386 = vmatprep.subr.mxu0 0.0
        %3387 = vmatpush1.msra.mxu0 %v3289
        %3388 = vmatprep.subr.mxu0 0.0
        %3389 = vmatpush1.msra.mxu0 %v3290
        %3390 = vmatprep.subr.mxu0 0.0
        %3391 = vmatpush1.msra.mxu0 %v3291
        %3392 = vmatprep.subr.mxu0 0.0
        %3393 = vmatpush1.msra.mxu0 %v3292
        %3394 = vmatprep.subr.mxu0 0.0
        %3395 = vmatpush1.msra.mxu0 %v3293
        %3396 = vmatprep.subr.mxu0 0.0
        %3397 = vmatpush1.msra.mxu0 %v3294
        %3398 = vmatprep.subr.mxu0 0.0
        %3399 = vmatpush1.msra.mxu0 %v3295
        %3400 = vmatprep.subr.mxu0 0.0
        %3401 = vmatpush1.msra.mxu0 %v3296
        %3402 = vmatprep.subr.mxu0 0.0
        %3403 = vmatpush1.msra.mxu0 %v3297
        %3404 = vmatprep.subr.mxu0 0.0
        %3405 = vmatpush1.msra.mxu0 %v3298
        %3406 = vmatprep.subr.mxu0 0.0
        %3407 = vmatpush1.msra.mxu0 %v3299
        %3408 = vmatprep.subr.mxu0 0.0
        %3409 = vmatpush1.msra.mxu0 0.0
        %3410 = vmatprep.subr.mxu0 0.0
        %3411 = vmatpush1.msra.mxu0 0.0
        %3412 = vmatprep.subr.mxu0 0.0
        %3413 = vmatpush1.msra.mxu0 0.0
        %3414 = vmatprep.subr.mxu0 0.0
        %3415 = vmatpush1.msra.mxu0 0.0
        %3416 = vmatprep.subr.mxu0 0.0
        %3417 = vmatpush1.msra.mxu0 0.0
        %3418 = vmatprep.subr.mxu0 0.0
        %3419 = vmatpush1.msra.mxu0 0.0
        %3420 = vmatprep.subr.mxu0 0.0
        %3421 = vmatpush1.msra.mxu0 0.0
        %3422 = vmatprep.subr.mxu0 0.0
        %3423 = vmatpush1.msra.mxu0 0.0
        %3424 = vmatprep.subr.mxu0 0.0
        %3425 = vmatpush1.msra.mxu0 0.0
        %3426 = vmatprep.subr.mxu0 0.0
        %3427 = vmatpush1.msra.mxu0 0.0
        %3428 = vmatprep.subr.mxu0 0.0
        %3429 = vmatpush1.msra.mxu0 0.0
        %3430 = vmatprep.subr.mxu0 0.0
        %3431 = vmatpush1.msra.mxu0 0.0
        %3432 = vmatprep.subr.mxu0 0.0
        %3433 = vmatpush1.msra.mxu0 0.0
        %3434 = vmatprep.subr.mxu0 0.0
        %3435 = vmatpush1.msra.mxu0 0.0
        %3436 = vmatprep.subr.mxu0 0.0
        %3437 = vmatpush1.msra.mxu0 0.0
        %3438 = vmatprep.subr.mxu0 0.0
        %3439 = vmatpush1.msra.mxu0 0.0
        %3440 = vmatprep.mubr.f32.mxu0 0.0
        %3441 = vmatmul.mubr.f32.gmra.mrb[0].mxu0 %v3302
        %v3442 = vpop.f32.mrb[0].mxu0
        %v3443 = vadd.f32 %v3373, %v3442
        %v3444 = vpop.f32.mrb[0].mxu0
        %3445 = vdwg.mxu0
        %v3446 = vadd.f32 %v3250, %v3443
        %s3447 = scalar_lea.vmem [#allocation11], 4608
        %v3448 = vld [vmem:[%s3447] sm:$0xff]
        %v3449 = vld [vmem:[%s3447 + $0x8] sm:$0xff]
        %v3450 = vld [vmem:[%s3447 + $0x10] sm:$0xff]
        %v3451 = vld [vmem:[%s3447 + $0x18] sm:$0xff]
        %v3452 = vld [vmem:[%s3447 + $0x20] sm:$0xff]
        %v3453 = vld [vmem:[%s3447 + $0x28] sm:$0xff]
        %v3454 = vld [vmem:[%s3447 + $0x30] sm:$0xff]
        %v3455 = vld [vmem:[%s3447 + $0x38] sm:$0xff]
        %v3456 = vld [vmem:[%s3447 + $0x40] sm:$0xff]
        %v3457 = vld [vmem:[%s3447 + $0x48] sm:$0xff]
        %v3458 = vld [vmem:[%s3447 + $0x50] sm:$0xff]
        %v3459 = vld [vmem:[%s3447 + $0x58] sm:$0xff]
        %v3460 = vld [vmem:[%s3447 + $0x60] sm:$0xff]
        %v3461 = vld [vmem:[%s3447 + $0x68] sm:$0xff]
        %v3462 = vld [vmem:[%s3447 + $0x70] sm:$0xff]
        %v3463 = vld [vmem:[%s3447 + $0x78] sm:$0xff]
        %v3464 = vld [vmem:[%s3447 + $0x80] sm:$0xff]
        %v3465 = vld [vmem:[%s3447 + $0x88] sm:$0xff]
        %v3466 = vld [vmem:[%s3447 + $0x90] sm:$0xff]
        %v3467 = vld [vmem:[%s3447 + $0x98] sm:$0xff]
        %v3468 = vld [vmem:[%s3447 + $0xa0] sm:$0xff]
        %v3469 = vld [vmem:[%s3447 + $0xa8] sm:$0xff]
        %v3470 = vld [vmem:[%s3447 + $0xb0] sm:$0xff]
        %v3471 = vld [vmem:[%s3447 + $0xb8] sm:$0xff]
        %v3472 = vld [vmem:[%s3447 + $0xc0] sm:$0xff]
        %v3473 = vld [vmem:[%s3447 + $0xc8] sm:$0xff]
        %v3474 = vld [vmem:[%s3447 + $0xd0] sm:$0xff]
        %v3475 = vld [vmem:[%s3447 + $0xd8] sm:$0xff]
        %v3476 = vld [vmem:[%s3447 + $0xe0] sm:$0xff]
        %v3477 = vld [vmem:[%s3447 + $0xe8] sm:$0xff]
        %v3478 = vld [vmem:[%s3447 + $0xf0] sm:$0xff]
        %v3479 = vld [vmem:[%s3447 + $0xf8] sm:$0xff]
        %v3480 = vld [vmem:[%s3447 + $0x100] sm:$0xff]
        %v3481 = vld [vmem:[%s3447 + $0x108] sm:$0xff]
        %v3482 = vld [vmem:[%s3447 + $0x110] sm:$0xff]
        %v3483 = vld [vmem:[%s3447 + $0x118] sm:$0xff]
        %v3484 = vld [vmem:[%s3447 + $0x120] sm:$0xff]
        %v3485 = vld [vmem:[%s3447 + $0x128] sm:$0xff]
        %v3486 = vld [vmem:[%s3447 + $0x130] sm:$0xff]
        %v3487 = vld [vmem:[%s3447 + $0x138] sm:$0xff]
        %v3488 = vld [vmem:[%s3447 + $0x140] sm:$0xff]
        %v3489 = vld [vmem:[%s3447 + $0x148] sm:$0xff]
        %v3490 = vld [vmem:[%s3447 + $0x150] sm:$0xff]
        %v3491 = vld [vmem:[%s3447 + $0x158] sm:$0xff]
        %v3492 = vld [vmem:[%s3447 + $0x160] sm:$0xff]
        %v3493 = vld [vmem:[%s3447 + $0x168] sm:$0xff]
        %v3494 = vld [vmem:[%s3447 + $0x170] sm:$0xff]
        %v3495 = vld [vmem:[%s3447 + $0x178] sm:$0xff]
        %v3496 = vrot.slane %v1098, 4
        %v3497 = vrot.slane %v1099, 4
        %v3498 = vrot.slane %v1100, 4
        %3502 = vmatprep.subr.mxu0 0.0
        %3503 = vmatpush1.msra.mxu0 %v3448
        %3504 = vmatprep.subr.mxu0 0.0
        %3505 = vmatpush1.msra.mxu0 %v3449
        %3506 = vmatprep.subr.mxu0 0.0
        %3507 = vmatpush1.msra.mxu0 %v3450
        %3508 = vmatprep.subr.mxu0 0.0
        %3509 = vmatpush1.msra.mxu0 %v3451
        %3510 = vmatprep.subr.mxu0 0.0
        %3511 = vmatpush1.msra.mxu0 %v3452
        %3512 = vmatprep.subr.mxu0 0.0
        %3513 = vmatpush1.msra.mxu0 %v3453
        %3514 = vmatprep.subr.mxu0 0.0
        %3515 = vmatpush1.msra.mxu0 %v3454
        %3516 = vmatprep.subr.mxu0 0.0
        %3517 = vmatpush1.msra.mxu0 %v3455
        %3518 = vmatprep.subr.mxu0 0.0
        %3519 = vmatpush1.msra.mxu0 %v3456
        %3520 = vmatprep.subr.mxu0 0.0
        %3521 = vmatpush1.msra.mxu0 %v3457
        %3522 = vmatprep.subr.mxu0 0.0
        %3523 = vmatpush1.msra.mxu0 %v3458
        %3524 = vmatprep.subr.mxu0 0.0
        %3525 = vmatpush1.msra.mxu0 %v3459
        %3526 = vmatprep.subr.mxu0 0.0
        %3527 = vmatpush1.msra.mxu0 %v3460
        %3528 = vmatprep.subr.mxu0 0.0
        %3529 = vmatpush1.msra.mxu0 %v3461
        %3530 = vmatprep.subr.mxu0 0.0
        %3531 = vmatpush1.msra.mxu0 %v3462
        %3532 = vmatprep.subr.mxu0 0.0
        %3533 = vmatpush1.msra.mxu0 %v3463
        %3534 = vmatprep.subr.mxu0 0.0
        %3535 = vmatpush1.msra.mxu0 %v3464
        %3536 = vmatprep.subr.mxu0 0.0
        %3537 = vmatpush1.msra.mxu0 %v3465
        %3538 = vmatprep.subr.mxu0 0.0
        %3539 = vmatpush1.msra.mxu0 %v3466
        %3540 = vmatprep.subr.mxu0 0.0
        %3541 = vmatpush1.msra.mxu0 %v3467
        %3542 = vmatprep.subr.mxu0 0.0
        %3543 = vmatpush1.msra.mxu0 %v3468
        %3544 = vmatprep.subr.mxu0 0.0
        %3545 = vmatpush1.msra.mxu0 %v3469
        %3546 = vmatprep.subr.mxu0 0.0
        %3547 = vmatpush1.msra.mxu0 %v3470
        %3548 = vmatprep.subr.mxu0 0.0
        %3549 = vmatpush1.msra.mxu0 %v3471
        %3550 = vmatprep.subr.mxu0 0.0
        %3551 = vmatpush1.msra.mxu0 %v3472
        %3552 = vmatprep.subr.mxu0 0.0
        %3553 = vmatpush1.msra.mxu0 %v3473
        %3554 = vmatprep.subr.mxu0 0.0
        %3555 = vmatpush1.msra.mxu0 %v3474
        %3556 = vmatprep.subr.mxu0 0.0
        %3557 = vmatpush1.msra.mxu0 %v3475
        %3558 = vmatprep.subr.mxu0 0.0
        %3559 = vmatpush1.msra.mxu0 %v3476
        %3560 = vmatprep.subr.mxu0 0.0
        %3561 = vmatpush1.msra.mxu0 %v3477
        %3562 = vmatprep.subr.mxu0 0.0
        %3563 = vmatpush1.msra.mxu0 %v3478
        %3564 = vmatprep.subr.mxu0 0.0
        %3565 = vmatpush1.msra.mxu0 %v3479
        %3566 = vmatprep.mubr.f32.mxu0 %v3497
        %3567 = vmatmul.mubr.f32.gmra.mrb[0].mxu0 %v3496
        %v3568 = vpop.f32.mrb[0].mxu0
        %v3569 = vadd.f32 0.0, %v3568
        %v3570 = vpop.f32.mrb[0].mxu0
        %3571 = vdwg.mxu0
        %3572 = vmatprep.subr.mxu0 0.0
        %3573 = vmatpush1.msra.mxu0 %v3480
        %3574 = vmatprep.subr.mxu0 0.0
        %3575 = vmatpush1.msra.mxu0 %v3481
        %3576 = vmatprep.subr.mxu0 0.0
        %3577 = vmatpush1.msra.mxu0 %v3482
        %3578 = vmatprep.subr.mxu0 0.0
        %3579 = vmatpush1.msra.mxu0 %v3483
        %3580 = vmatprep.subr.mxu0 0.0
        %3581 = vmatpush1.msra.mxu0 %v3484
        %3582 = vmatprep.subr.mxu0 0.0
        %3583 = vmatpush1.msra.mxu0 %v3485
        %3584 = vmatprep.subr.mxu0 0.0
        %3585 = vmatpush1.msra.mxu0 %v3486
        %3586 = vmatprep.subr.mxu0 0.0
        %3587 = vmatpush1.msra.mxu0 %v3487
        %3588 = vmatprep.subr.mxu0 0.0
        %3589 = vmatpush1.msra.mxu0 %v3488
        %3590 = vmatprep.subr.mxu0 0.0
        %3591 = vmatpush1.msra.mxu0 %v3489
        %3592 = vmatprep.subr.mxu0 0.0
        %3593 = vmatpush1.msra.mxu0 %v3490
        %3594 = vmatprep.subr.mxu0 0.0
        %3595 = vmatpush1.msra.mxu0 %v3491
        %3596 = vmatprep.subr.mxu0 0.0
        %3597 = vmatpush1.msra.mxu0 %v3492
        %3598 = vmatprep.subr.mxu0 0.0
        %3599 = vmatpush1.msra.mxu0 %v3493
        %3600 = vmatprep.subr.mxu0 0.0
        %3601 = vmatpush1.msra.mxu0 %v3494
        %3602 = vmatprep.subr.mxu0 0.0
        %3603 = vmatpush1.msra.mxu0 %v3495
        %3604 = vmatprep.subr.mxu0 0.0
        %3605 = vmatpush1.msra.mxu0 0.0
        %3606 = vmatprep.subr.mxu0 0.0
        %3607 = vmatpush1.msra.mxu0 0.0
        %3608 = vmatprep.subr.mxu0 0.0
        %3609 = vmatpush1.msra.mxu0 0.0
        %3610 = vmatprep.subr.mxu0 0.0
        %3611 = vmatpush1.msra.mxu0 0.0
        %3612 = vmatprep.subr.mxu0 0.0
        %3613 = vmatpush1.msra.mxu0 0.0
        %3614 = vmatprep.subr.mxu0 0.0
        %3615 = vmatpush1.msra.mxu0 0.0
        %3616 = vmatprep.subr.mxu0 0.0
        %3617 = vmatpush1.msra.mxu0 0.0
        %3618 = vmatprep.subr.mxu0 0.0
        %3619 = vmatpush1.msra.mxu0 0.0
        %3620 = vmatprep.subr.mxu0 0.0
        %3621 = vmatpush1.msra.mxu0 0.0
        %3622 = vmatprep.subr.mxu0 0.0
        %3623 = vmatpush1.msra.mxu0 0.0
        %3624 = vmatprep.subr.mxu0 0.0
        %3625 = vmatpush1.msra.mxu0 0.0
        %3626 = vmatprep.subr.mxu0 0.0
        %3627 = vmatpush1.msra.mxu0 0.0
        %3628 = vmatprep.subr.mxu0 0.0
        %3629 = vmatpush1.msra.mxu0 0.0
        %3630 = vmatprep.subr.mxu0 0.0
        %3631 = vmatpush1.msra.mxu0 0.0
        %3632 = vmatprep.subr.mxu0 0.0
        %3633 = vmatpush1.msra.mxu0 0.0
        %3634 = vmatprep.subr.mxu0 0.0
        %3635 = vmatpush1.msra.mxu0 0.0
        %3636 = vmatprep.mubr.f32.mxu0 0.0
        %3637 = vmatmul.mubr.f32.gmra.mrb[0].mxu0 %v3498
        %v3638 = vpop.f32.mrb[0].mxu0
        %v3639 = vadd.f32 %v3569, %v3638
        %v3640 = vpop.f32.mrb[0].mxu0
        %3641 = vdwg.mxu0
        %v3642 = vadd.f32 %v3446, %v3639
        %s3643 = scalar_lea.vmem [#allocation11], 4992
        %v3644 = vld [vmem:[%s3643] sm:$0xff]
        %v3645 = vld [vmem:[%s3643 + $0x8] sm:$0xff]
        %v3646 = vld [vmem:[%s3643 + $0x10] sm:$0xff]
        %v3647 = vld [vmem:[%s3643 + $0x18] sm:$0xff]
        %v3648 = vld [vmem:[%s3643 + $0x20] sm:$0xff]
        %v3649 = vld [vmem:[%s3643 + $0x28] sm:$0xff]
        %v3650 = vld [vmem:[%s3643 + $0x30] sm:$0xff]
        %v3651 = vld [vmem:[%s3643 + $0x38] sm:$0xff]
        %v3652 = vld [vmem:[%s3643 + $0x40] sm:$0xff]
        %v3653 = vld [vmem:[%s3643 + $0x48] sm:$0xff]
        %v3654 = vld [vmem:[%s3643 + $0x50] sm:$0xff]
        %v3655 = vld [vmem:[%s3643 + $0x58] sm:$0xff]
        %v3656 = vld [vmem:[%s3643 + $0x60] sm:$0xff]
        %v3657 = vld [vmem:[%s3643 + $0x68] sm:$0xff]
        %v3658 = vld [vmem:[%s3643 + $0x70] sm:$0xff]
        %v3659 = vld [vmem:[%s3643 + $0x78] sm:$0xff]
        %v3660 = vld [vmem:[%s3643 + $0x80] sm:$0xff]
        %v3661 = vld [vmem:[%s3643 + $0x88] sm:$0xff]
        %v3662 = vld [vmem:[%s3643 + $0x90] sm:$0xff]
        %v3663 = vld [vmem:[%s3643 + $0x98] sm:$0xff]
        %v3664 = vld [vmem:[%s3643 + $0xa0] sm:$0xff]
        %v3665 = vld [vmem:[%s3643 + $0xa8] sm:$0xff]
        %v3666 = vld [vmem:[%s3643 + $0xb0] sm:$0xff]
        %v3667 = vld [vmem:[%s3643 + $0xb8] sm:$0xff]
        %v3668 = vld [vmem:[%s3643 + $0xc0] sm:$0xff]
        %v3669 = vld [vmem:[%s3643 + $0xc8] sm:$0xff]
        %v3670 = vld [vmem:[%s3643 + $0xd0] sm:$0xff]
        %v3671 = vld [vmem:[%s3643 + $0xd8] sm:$0xff]
        %v3672 = vld [vmem:[%s3643 + $0xe0] sm:$0xff]
        %v3673 = vld [vmem:[%s3643 + $0xe8] sm:$0xff]
        %v3674 = vld [vmem:[%s3643 + $0xf0] sm:$0xff]
        %v3675 = vld [vmem:[%s3643 + $0xf8] sm:$0xff]
        %v3676 = vld [vmem:[%s3643 + $0x100] sm:$0xff]
        %v3677 = vld [vmem:[%s3643 + $0x108] sm:$0xff]
        %v3678 = vld [vmem:[%s3643 + $0x110] sm:$0xff]
        %v3679 = vld [vmem:[%s3643 + $0x118] sm:$0xff]
        %v3680 = vld [vmem:[%s3643 + $0x120] sm:$0xff]
        %v3681 = vld [vmem:[%s3643 + $0x128] sm:$0xff]
        %v3682 = vld [vmem:[%s3643 + $0x130] sm:$0xff]
        %v3683 = vld [vmem:[%s3643 + $0x138] sm:$0xff]
        %v3684 = vld [vmem:[%s3643 + $0x140] sm:$0xff]
        %v3685 = vld [vmem:[%s3643 + $0x148] sm:$0xff]
        %v3686 = vld [vmem:[%s3643 + $0x150] sm:$0xff]
        %v3687 = vld [vmem:[%s3643 + $0x158] sm:$0xff]
        %v3688 = vld [vmem:[%s3643 + $0x160] sm:$0xff]
        %v3689 = vld [vmem:[%s3643 + $0x168] sm:$0xff]
        %v3690 = vld [vmem:[%s3643 + $0x170] sm:$0xff]
        %v3691 = vld [vmem:[%s3643 + $0x178] sm:$0xff]
        %v3692 = vrot.slane %v1098, 5
        %v3693 = vrot.slane %v1099, 5
        %v3694 = vrot.slane %v1100, 5
        %3698 = vmatprep.subr.mxu0 0.0
        %3699 = vmatpush1.msra.mxu0 %v3644
        %3700 = vmatprep.subr.mxu0 0.0
        %3701 = vmatpush1.msra.mxu0 %v3645
        %3702 = vmatprep.subr.mxu0 0.0
        %3703 = vmatpush1.msra.mxu0 %v3646
        %3704 = vmatprep.subr.mxu0 0.0
        %3705 = vmatpush1.msra.mxu0 %v3647
        %3706 = vmatprep.subr.mxu0 0.0
        %3707 = vmatpush1.msra.mxu0 %v3648
        %3708 = vmatprep.subr.mxu0 0.0
        %3709 = vmatpush1.msra.mxu0 %v3649
        %3710 = vmatprep.subr.mxu0 0.0
        %3711 = vmatpush1.msra.mxu0 %v3650
        %3712 = vmatprep.subr.mxu0 0.0
        %3713 = vmatpush1.msra.mxu0 %v3651
        %3714 = vmatprep.subr.mxu0 0.0
        %3715 = vmatpush1.msra.mxu0 %v3652
        %3716 = vmatprep.subr.mxu0 0.0
        %3717 = vmatpush1.msra.mxu0 %v3653
        %3718 = vmatprep.subr.mxu0 0.0
        %3719 = vmatpush1.msra.mxu0 %v3654
        %3720 = vmatprep.subr.mxu0 0.0
        %3721 = vmatpush1.msra.mxu0 %v3655
        %3722 = vmatprep.subr.mxu0 0.0
        %3723 = vmatpush1.msra.mxu0 %v3656
        %3724 = vmatprep.subr.mxu0 0.0
        %3725 = vmatpush1.msra.mxu0 %v3657
        %3726 = vmatprep.subr.mxu0 0.0
        %3727 = vmatpush1.msra.mxu0 %v3658
        %3728 = vmatprep.subr.mxu0 0.0
        %3729 = vmatpush1.msra.mxu0 %v3659
        %3730 = vmatprep.subr.mxu0 0.0
        %3731 = vmatpush1.msra.mxu0 %v3660
        %3732 = vmatprep.subr.mxu0 0.0
        %3733 = vmatpush1.msra.mxu0 %v3661
        %3734 = vmatprep.subr.mxu0 0.0
        %3735 = vmatpush1.msra.mxu0 %v3662
        %3736 = vmatprep.subr.mxu0 0.0
        %3737 = vmatpush1.msra.mxu0 %v3663
        %3738 = vmatprep.subr.mxu0 0.0
        %3739 = vmatpush1.msra.mxu0 %v3664
        %3740 = vmatprep.subr.mxu0 0.0
        %3741 = vmatpush1.msra.mxu0 %v3665
        %3742 = vmatprep.subr.mxu0 0.0
        %3743 = vmatpush1.msra.mxu0 %v3666
        %3744 = vmatprep.subr.mxu0 0.0
        %3745 = vmatpush1.msra.mxu0 %v3667
        %3746 = vmatprep.subr.mxu0 0.0
        %3747 = vmatpush1.msra.mxu0 %v3668
        %3748 = vmatprep.subr.mxu0 0.0
        %3749 = vmatpush1.msra.mxu0 %v3669
        %3750 = vmatprep.subr.mxu0 0.0
        %3751 = vmatpush1.msra.mxu0 %v3670
        %3752 = vmatprep.subr.mxu0 0.0
        %3753 = vmatpush1.msra.mxu0 %v3671
        %3754 = vmatprep.subr.mxu0 0.0
        %3755 = vmatpush1.msra.mxu0 %v3672
        %3756 = vmatprep.subr.mxu0 0.0
        %3757 = vmatpush1.msra.mxu0 %v3673
        %3758 = vmatprep.subr.mxu0 0.0
        %3759 = vmatpush1.msra.mxu0 %v3674
        %3760 = vmatprep.subr.mxu0 0.0
        %3761 = vmatpush1.msra.mxu0 %v3675
        %3762 = vmatprep.mubr.f32.mxu0 %v3693
        %3763 = vmatmul.mubr.f32.gmra.mrb[0].mxu0 %v3692
        %v3764 = vpop.f32.mrb[0].mxu0
        %v3765 = vadd.f32 0.0, %v3764
        %v3766 = vpop.f32.mrb[0].mxu0
        %3767 = vdwg.mxu0
        %3768 = vmatprep.subr.mxu0 0.0
        %3769 = vmatpush1.msra.mxu0 %v3676
        %3770 = vmatprep.subr.mxu0 0.0
        %3771 = vmatpush1.msra.mxu0 %v3677
        %3772 = vmatprep.subr.mxu0 0.0
        %3773 = vmatpush1.msra.mxu0 %v3678
        %3774 = vmatprep.subr.mxu0 0.0
        %3775 = vmatpush1.msra.mxu0 %v3679
        %3776 = vmatprep.subr.mxu0 0.0
        %3777 = vmatpush1.msra.mxu0 %v3680
        %3778 = vmatprep.subr.mxu0 0.0
        %3779 = vmatpush1.msra.mxu0 %v3681
        %3780 = vmatprep.subr.mxu0 0.0
        %3781 = vmatpush1.msra.mxu0 %v3682
        %3782 = vmatprep.subr.mxu0 0.0
        %3783 = vmatpush1.msra.mxu0 %v3683
        %3784 = vmatprep.subr.mxu0 0.0
        %3785 = vmatpush1.msra.mxu0 %v3684
        %3786 = vmatprep.subr.mxu0 0.0
        %3787 = vmatpush1.msra.mxu0 %v3685
        %3788 = vmatprep.subr.mxu0 0.0
        %3789 = vmatpush1.msra.mxu0 %v3686
        %3790 = vmatprep.subr.mxu0 0.0
        %3791 = vmatpush1.msra.mxu0 %v3687
        %3792 = vmatprep.subr.mxu0 0.0
        %3793 = vmatpush1.msra.mxu0 %v3688
        %3794 = vmatprep.subr.mxu0 0.0
        %3795 = vmatpush1.msra.mxu0 %v3689
        %3796 = vmatprep.subr.mxu0 0.0
        %3797 = vmatpush1.msra.mxu0 %v3690
        %3798 = vmatprep.subr.mxu0 0.0
        %3799 = vmatpush1.msra.mxu0 %v3691
        %3800 = vmatprep.subr.mxu0 0.0
        %3801 = vmatpush1.msra.mxu0 0.0
        %3802 = vmatprep.subr.mxu0 0.0
        %3803 = vmatpush1.msra.mxu0 0.0
        %3804 = vmatprep.subr.mxu0 0.0
        %3805 = vmatpush1.msra.mxu0 0.0
        %3806 = vmatprep.subr.mxu0 0.0
        %3807 = vmatpush1.msra.mxu0 0.0
        %3808 = vmatprep.subr.mxu0 0.0
        %3809 = vmatpush1.msra.mxu0 0.0
        %3810 = vmatprep.subr.mxu0 0.0
        %3811 = vmatpush1.msra.mxu0 0.0
        %3812 = vmatprep.subr.mxu0 0.0
        %3813 = vmatpush1.msra.mxu0 0.0
        %3814 = vmatprep.subr.mxu0 0.0
        %3815 = vmatpush1.msra.mxu0 0.0
        %3816 = vmatprep.subr.mxu0 0.0
        %3817 = vmatpush1.msra.mxu0 0.0
        %3818 = vmatprep.subr.mxu0 0.0
        %3819 = vmatpush1.msra.mxu0 0.0
        %3820 = vmatprep.subr.mxu0 0.0
        %3821 = vmatpush1.msra.mxu0 0.0
        %3822 = vmatprep.subr.mxu0 0.0
        %3823 = vmatpush1.msra.mxu0 0.0
        %3824 = vmatprep.subr.mxu0 0.0
        %3825 = vmatpush1.msra.mxu0 0.0
        %3826 = vmatprep.subr.mxu0 0.0
        %3827 = vmatpush1.msra.mxu0 0.0
        %3828 = vmatprep.subr.mxu0 0.0
        %3829 = vmatpush1.msra.mxu0 0.0
        %3830 = vmatprep.subr.mxu0 0.0
        %3831 = vmatpush1.msra.mxu0 0.0
        %3832 = vmatprep.mubr.f32.mxu0 0.0
        %3833 = vmatmul.mubr.f32.gmra.mrb[0].mxu0 %v3694
        %v3834 = vpop.f32.mrb[0].mxu0
        %v3835 = vadd.f32 %v3765, %v3834
        %v3836 = vpop.f32.mrb[0].mxu0
        %3837 = vdwg.mxu0
        %v3838 = vadd.f32 %v3642, %v3835
        %s3839 = scalar_lea.vmem [#allocation11], 5376
        %v3840 = vld [vmem:[%s3839] sm:$0xff]
        %v3841 = vld [vmem:[%s3839 + $0x8] sm:$0xff]
        %v3842 = vld [vmem:[%s3839 + $0x10] sm:$0xff]
        %v3843 = vld [vmem:[%s3839 + $0x18] sm:$0xff]
        %v3844 = vld [vmem:[%s3839 + $0x20] sm:$0xff]
        %v3845 = vld [vmem:[%s3839 + $0x28] sm:$0xff]
        %v3846 = vld [vmem:[%s3839 + $0x30] sm:$0xff]
        %v3847 = vld [vmem:[%s3839 + $0x38] sm:$0xff]
        %v3848 = vld [vmem:[%s3839 + $0x40] sm:$0xff]
        %v3849 = vld [vmem:[%s3839 + $0x48] sm:$0xff]
        %v3850 = vld [vmem:[%s3839 + $0x50] sm:$0xff]
        %v3851 = vld [vmem:[%s3839 + $0x58] sm:$0xff]
        %v3852 = vld [vmem:[%s3839 + $0x60] sm:$0xff]
        %v3853 = vld [vmem:[%s3839 + $0x68] sm:$0xff]
        %v3854 = vld [vmem:[%s3839 + $0x70] sm:$0xff]
        %v3855 = vld [vmem:[%s3839 + $0x78] sm:$0xff]
        %v3856 = vld [vmem:[%s3839 + $0x80] sm:$0xff]
        %v3857 = vld [vmem:[%s3839 + $0x88] sm:$0xff]
        %v3858 = vld [vmem:[%s3839 + $0x90] sm:$0xff]
        %v3859 = vld [vmem:[%s3839 + $0x98] sm:$0xff]
        %v3860 = vld [vmem:[%s3839 + $0xa0] sm:$0xff]
        %v3861 = vld [vmem:[%s3839 + $0xa8] sm:$0xff]
        %v3862 = vld [vmem:[%s3839 + $0xb0] sm:$0xff]
        %v3863 = vld [vmem:[%s3839 + $0xb8] sm:$0xff]
        %v3864 = vld [vmem:[%s3839 + $0xc0] sm:$0xff]
        %v3865 = vld [vmem:[%s3839 + $0xc8] sm:$0xff]
        %v3866 = vld [vmem:[%s3839 + $0xd0] sm:$0xff]
        %v3867 = vld [vmem:[%s3839 + $0xd8] sm:$0xff]
        %v3868 = vld [vmem:[%s3839 + $0xe0] sm:$0xff]
        %v3869 = vld [vmem:[%s3839 + $0xe8] sm:$0xff]
        %v3870 = vld [vmem:[%s3839 + $0xf0] sm:$0xff]
        %v3871 = vld [vmem:[%s3839 + $0xf8] sm:$0xff]
        %v3872 = vld [vmem:[%s3839 + $0x100] sm:$0xff]
        %v3873 = vld [vmem:[%s3839 + $0x108] sm:$0xff]
        %v3874 = vld [vmem:[%s3839 + $0x110] sm:$0xff]
        %v3875 = vld [vmem:[%s3839 + $0x118] sm:$0xff]
        %v3876 = vld [vmem:[%s3839 + $0x120] sm:$0xff]
        %v3877 = vld [vmem:[%s3839 + $0x128] sm:$0xff]
        %v3878 = vld [vmem:[%s3839 + $0x130] sm:$0xff]
        %v3879 = vld [vmem:[%s3839 + $0x138] sm:$0xff]
        %v3880 = vld [vmem:[%s3839 + $0x140] sm:$0xff]
        %v3881 = vld [vmem:[%s3839 + $0x148] sm:$0xff]
        %v3882 = vld [vmem:[%s3839 + $0x150] sm:$0xff]
        %v3883 = vld [vmem:[%s3839 + $0x158] sm:$0xff]
        %v3884 = vld [vmem:[%s3839 + $0x160] sm:$0xff]
        %v3885 = vld [vmem:[%s3839 + $0x168] sm:$0xff]
        %v3886 = vld [vmem:[%s3839 + $0x170] sm:$0xff]
        %v3887 = vld [vmem:[%s3839 + $0x178] sm:$0xff]
        %v3888 = vrot.slane %v1098, 6
        %v3889 = vrot.slane %v1099, 6
        %v3890 = vrot.slane %v1100, 6
        %3894 = vmatprep.subr.mxu0 0.0
        %3895 = vmatpush1.msra.mxu0 %v3840
        %3896 = vmatprep.subr.mxu0 0.0
        %3897 = vmatpush1.msra.mxu0 %v3841
        %3898 = vmatprep.subr.mxu0 0.0
        %3899 = vmatpush1.msra.mxu0 %v3842
        %3900 = vmatprep.subr.mxu0 0.0
        %3901 = vmatpush1.msra.mxu0 %v3843
        %3902 = vmatprep.subr.mxu0 0.0
        %3903 = vmatpush1.msra.mxu0 %v3844
        %3904 = vmatprep.subr.mxu0 0.0
        %3905 = vmatpush1.msra.mxu0 %v3845
        %3906 = vmatprep.subr.mxu0 0.0
        %3907 = vmatpush1.msra.mxu0 %v3846
        %3908 = vmatprep.subr.mxu0 0.0
        %3909 = vmatpush1.msra.mxu0 %v3847
        %3910 = vmatprep.subr.mxu0 0.0
        %3911 = vmatpush1.msra.mxu0 %v3848
        %3912 = vmatprep.subr.mxu0 0.0
        %3913 = vmatpush1.msra.mxu0 %v3849
        %3914 = vmatprep.subr.mxu0 0.0
        %3915 = vmatpush1.msra.mxu0 %v3850
        %3916 = vmatprep.subr.mxu0 0.0
        %3917 = vmatpush1.msra.mxu0 %v3851
        %3918 = vmatprep.subr.mxu0 0.0
        %3919 = vmatpush1.msra.mxu0 %v3852
        %3920 = vmatprep.subr.mxu0 0.0
        %3921 = vmatpush1.msra.mxu0 %v3853
        %3922 = vmatprep.subr.mxu0 0.0
        %3923 = vmatpush1.msra.mxu0 %v3854
        %3924 = vmatprep.subr.mxu0 0.0
        %3925 = vmatpush1.msra.mxu0 %v3855
        %3926 = vmatprep.subr.mxu0 0.0
        %3927 = vmatpush1.msra.mxu0 %v3856
        %3928 = vmatprep.subr.mxu0 0.0
        %3929 = vmatpush1.msra.mxu0 %v3857
        %3930 = vmatprep.subr.mxu0 0.0
        %3931 = vmatpush1.msra.mxu0 %v3858
        %3932 = vmatprep.subr.mxu0 0.0
        %3933 = vmatpush1.msra.mxu0 %v3859
        %3934 = vmatprep.subr.mxu0 0.0
        %3935 = vmatpush1.msra.mxu0 %v3860
        %3936 = vmatprep.subr.mxu0 0.0
        %3937 = vmatpush1.msra.mxu0 %v3861
        %3938 = vmatprep.subr.mxu0 0.0
        %3939 = vmatpush1.msra.mxu0 %v3862
        %3940 = vmatprep.subr.mxu0 0.0
        %3941 = vmatpush1.msra.mxu0 %v3863
        %3942 = vmatprep.subr.mxu0 0.0
        %3943 = vmatpush1.msra.mxu0 %v3864
        %3944 = vmatprep.subr.mxu0 0.0
        %3945 = vmatpush1.msra.mxu0 %v3865
        %3946 = vmatprep.subr.mxu0 0.0
        %3947 = vmatpush1.msra.mxu0 %v3866
        %3948 = vmatprep.subr.mxu0 0.0
        %3949 = vmatpush1.msra.mxu0 %v3867
        %3950 = vmatprep.subr.mxu0 0.0
        %3951 = vmatpush1.msra.mxu0 %v3868
        %3952 = vmatprep.subr.mxu0 0.0
        %3953 = vmatpush1.msra.mxu0 %v3869
        %3954 = vmatprep.subr.mxu0 0.0
        %3955 = vmatpush1.msra.mxu0 %v3870
        %3956 = vmatprep.subr.mxu0 0.0
        %3957 = vmatpush1.msra.mxu0 %v3871
        %3958 = vmatprep.mubr.f32.mxu0 %v3889
        %3959 = vmatmul.mubr.f32.gmra.mrb[0].mxu0 %v3888
        %v3960 = vpop.f32.mrb[0].mxu0
        %v3961 = vadd.f32 0.0, %v3960
        %v3962 = vpop.f32.mrb[0].mxu0
        %3963 = vdwg.mxu0
        %3964 = vmatprep.subr.mxu0 0.0
        %3965 = vmatpush1.msra.mxu0 %v3872
        %3966 = vmatprep.subr.mxu0 0.0
        %3967 = vmatpush1.msra.mxu0 %v3873
        %3968 = vmatprep.subr.mxu0 0.0
        %3969 = vmatpush1.msra.mxu0 %v3874
        %3970 = vmatprep.subr.mxu0 0.0
        %3971 = vmatpush1.msra.mxu0 %v3875
        %3972 = vmatprep.subr.mxu0 0.0
        %3973 = vmatpush1.msra.mxu0 %v3876
        %3974 = vmatprep.subr.mxu0 0.0
        %3975 = vmatpush1.msra.mxu0 %v3877
        %3976 = vmatprep.subr.mxu0 0.0
        %3977 = vmatpush1.msra.mxu0 %v3878
        %3978 = vmatprep.subr.mxu0 0.0
        %3979 = vmatpush1.msra.mxu0 %v3879
        %3980 = vmatprep.subr.mxu0 0.0
        %3981 = vmatpush1.msra.mxu0 %v3880
        %3982 = vmatprep.subr.mxu0 0.0
        %3983 = vmatpush1.msra.mxu0 %v3881
        %3984 = vmatprep.subr.mxu0 0.0
        %3985 = vmatpush1.msra.mxu0 %v3882
        %3986 = vmatprep.subr.mxu0 0.0
        %3987 = vmatpush1.msra.mxu0 %v3883
        %3988 = vmatprep.subr.mxu0 0.0
        %3989 = vmatpush1.msra.mxu0 %v3884
        %3990 = vmatprep.subr.mxu0 0.0
        %3991 = vmatpush1.msra.mxu0 %v3885
        %3992 = vmatprep.subr.mxu0 0.0
        %3993 = vmatpush1.msra.mxu0 %v3886
        %3994 = vmatprep.subr.mxu0 0.0
        %3995 = vmatpush1.msra.mxu0 %v3887
        %3996 = vmatprep.subr.mxu0 0.0
        %3997 = vmatpush1.msra.mxu0 0.0
        %3998 = vmatprep.subr.mxu0 0.0
        %3999 = vmatpush1.msra.mxu0 0.0
        %4000 = vmatprep.subr.mxu0 0.0
        %4001 = vmatpush1.msra.mxu0 0.0
        %4002 = vmatprep.subr.mxu0 0.0
        %4003 = vmatpush1.msra.mxu0 0.0
        %4004 = vmatprep.subr.mxu0 0.0
        %4005 = vmatpush1.msra.mxu0 0.0
        %4006 = vmatprep.subr.mxu0 0.0
        %4007 = vmatpush1.msra.mxu0 0.0
        %4008 = vmatprep.subr.mxu0 0.0
        %4009 = vmatpush1.msra.mxu0 0.0
        %4010 = vmatprep.subr.mxu0 0.0
        %4011 = vmatpush1.msra.mxu0 0.0
        %4012 = vmatprep.subr.mxu0 0.0
        %4013 = vmatpush1.msra.mxu0 0.0
        %4014 = vmatprep.subr.mxu0 0.0
        %4015 = vmatpush1.msra.mxu0 0.0
        %4016 = vmatprep.subr.mxu0 0.0
        %4017 = vmatpush1.msra.mxu0 0.0
        %4018 = vmatprep.subr.mxu0 0.0
        %4019 = vmatpush1.msra.mxu0 0.0
        %4020 = vmatprep.subr.mxu0 0.0
        %4021 = vmatpush1.msra.mxu0 0.0
        %4022 = vmatprep.subr.mxu0 0.0
        %4023 = vmatpush1.msra.mxu0 0.0
        %4024 = vmatprep.subr.mxu0 0.0
        %4025 = vmatpush1.msra.mxu0 0.0
        %4026 = vmatprep.subr.mxu0 0.0
        %4027 = vmatpush1.msra.mxu0 0.0
        %4028 = vmatprep.mubr.f32.mxu0 0.0
        %4029 = vmatmul.mubr.f32.gmra.mrb[0].mxu0 %v3890
        %v4030 = vpop.f32.mrb[0].mxu0
        %v4031 = vadd.f32 %v3961, %v4030
        %v4032 = vpop.f32.mrb[0].mxu0
        %4033 = vdwg.mxu0
        %v4034 = vadd.f32 %v3838, %v4031
        %s4035 = scalar_lea.vmem [#allocation11], 5760
        %v4036 = vld [vmem:[%s4035] sm:$0xff]
        %v4037 = vld [vmem:[%s4035 + $0x8] sm:$0xff]
        %v4038 = vld [vmem:[%s4035 + $0x10] sm:$0xff]
        %v4039 = vld [vmem:[%s4035 + $0x18] sm:$0xff]
        %v4040 = vld [vmem:[%s4035 + $0x20] sm:$0xff]
        %v4041 = vld [vmem:[%s4035 + $0x28] sm:$0xff]
        %v4042 = vld [vmem:[%s4035 + $0x30] sm:$0xff]
        %v4043 = vld [vmem:[%s4035 + $0x38] sm:$0xff]
        %v4044 = vld [vmem:[%s4035 + $0x40] sm:$0xff]
        %v4045 = vld [vmem:[%s4035 + $0x48] sm:$0xff]
        %v4046 = vld [vmem:[%s4035 + $0x50] sm:$0xff]
        %v4047 = vld [vmem:[%s4035 + $0x58] sm:$0xff]
        %v4048 = vld [vmem:[%s4035 + $0x60] sm:$0xff]
        %v4049 = vld [vmem:[%s4035 + $0x68] sm:$0xff]
        %v4050 = vld [vmem:[%s4035 + $0x70] sm:$0xff]
        %v4051 = vld [vmem:[%s4035 + $0x78] sm:$0xff]
        %v4052 = vld [vmem:[%s4035 + $0x80] sm:$0xff]
        %v4053 = vld [vmem:[%s4035 + $0x88] sm:$0xff]
        %v4054 = vld [vmem:[%s4035 + $0x90] sm:$0xff]
        %v4055 = vld [vmem:[%s4035 + $0x98] sm:$0xff]
        %v4056 = vld [vmem:[%s4035 + $0xa0] sm:$0xff]
        %v4057 = vld [vmem:[%s4035 + $0xa8] sm:$0xff]
        %v4058 = vld [vmem:[%s4035 + $0xb0] sm:$0xff]
        %v4059 = vld [vmem:[%s4035 + $0xb8] sm:$0xff]
        %v4060 = vld [vmem:[%s4035 + $0xc0] sm:$0xff]
        %v4061 = vld [vmem:[%s4035 + $0xc8] sm:$0xff]
        %v4062 = vld [vmem:[%s4035 + $0xd0] sm:$0xff]
        %v4063 = vld [vmem:[%s4035 + $0xd8] sm:$0xff]
        %v4064 = vld [vmem:[%s4035 + $0xe0] sm:$0xff]
        %v4065 = vld [vmem:[%s4035 + $0xe8] sm:$0xff]
        %v4066 = vld [vmem:[%s4035 + $0xf0] sm:$0xff]
        %v4067 = vld [vmem:[%s4035 + $0xf8] sm:$0xff]
        %v4068 = vld [vmem:[%s4035 + $0x100] sm:$0xff]
        %v4069 = vld [vmem:[%s4035 + $0x108] sm:$0xff]
        %v4070 = vld [vmem:[%s4035 + $0x110] sm:$0xff]
        %v4071 = vld [vmem:[%s4035 + $0x118] sm:$0xff]
        %v4072 = vld [vmem:[%s4035 + $0x120] sm:$0xff]
        %v4073 = vld [vmem:[%s4035 + $0x128] sm:$0xff]
        %v4074 = vld [vmem:[%s4035 + $0x130] sm:$0xff]
        %v4075 = vld [vmem:[%s4035 + $0x138] sm:$0xff]
        %v4076 = vld [vmem:[%s4035 + $0x140] sm:$0xff]
        %v4077 = vld [vmem:[%s4035 + $0x148] sm:$0xff]
        %v4078 = vld [vmem:[%s4035 + $0x150] sm:$0xff]
        %v4079 = vld [vmem:[%s4035 + $0x158] sm:$0xff]
        %v4080 = vld [vmem:[%s4035 + $0x160] sm:$0xff]
        %v4081 = vld [vmem:[%s4035 + $0x168] sm:$0xff]
        %v4082 = vld [vmem:[%s4035 + $0x170] sm:$0xff]
        %v4083 = vld [vmem:[%s4035 + $0x178] sm:$0xff]
        %v4084 = vrot.slane %v1098, 7
        %v4085 = vrot.slane %v1099, 7
        %v4086 = vrot.slane %v1100, 7
        %4090 = vmatprep.subr.mxu0 0.0
        %4091 = vmatpush1.msra.mxu0 %v4036
        %4092 = vmatprep.subr.mxu0 0.0
        %4093 = vmatpush1.msra.mxu0 %v4037
        %4094 = vmatprep.subr.mxu0 0.0
        %4095 = vmatpush1.msra.mxu0 %v4038
        %4096 = vmatprep.subr.mxu0 0.0
        %4097 = vmatpush1.msra.mxu0 %v4039
        %4098 = vmatprep.subr.mxu0 0.0
        %4099 = vmatpush1.msra.mxu0 %v4040
        %4100 = vmatprep.subr.mxu0 0.0
        %4101 = vmatpush1.msra.mxu0 %v4041
        %4102 = vmatprep.subr.mxu0 0.0
        %4103 = vmatpush1.msra.mxu0 %v4042
        %4104 = vmatprep.subr.mxu0 0.0
        %4105 = vmatpush1.msra.mxu0 %v4043
        %4106 = vmatprep.subr.mxu0 0.0
        %4107 = vmatpush1.msra.mxu0 %v4044
        %4108 = vmatprep.subr.mxu0 0.0
        %4109 = vmatpush1.msra.mxu0 %v4045
        %4110 = vmatprep.subr.mxu0 0.0
        %4111 = vmatpush1.msra.mxu0 %v4046
        %4112 = vmatprep.subr.mxu0 0.0
        %4113 = vmatpush1.msra.mxu0 %v4047
        %4114 = vmatprep.subr.mxu0 0.0
        %4115 = vmatpush1.msra.mxu0 %v4048
        %4116 = vmatprep.subr.mxu0 0.0
        %4117 = vmatpush1.msra.mxu0 %v4049
        %4118 = vmatprep.subr.mxu0 0.0
        %4119 = vmatpush1.msra.mxu0 %v4050
        %4120 = vmatprep.subr.mxu0 0.0
        %4121 = vmatpush1.msra.mxu0 %v4051
        %4122 = vmatprep.subr.mxu0 0.0
        %4123 = vmatpush1.msra.mxu0 %v4052
        %4124 = vmatprep.subr.mxu0 0.0
        %4125 = vmatpush1.msra.mxu0 %v4053
        %4126 = vmatprep.subr.mxu0 0.0
        %4127 = vmatpush1.msra.mxu0 %v4054
        %4128 = vmatprep.subr.mxu0 0.0
        %4129 = vmatpush1.msra.mxu0 %v4055
        %4130 = vmatprep.subr.mxu0 0.0
        %4131 = vmatpush1.msra.mxu0 %v4056
        %4132 = vmatprep.subr.mxu0 0.0
        %4133 = vmatpush1.msra.mxu0 %v4057
        %4134 = vmatprep.subr.mxu0 0.0
        %4135 = vmatpush1.msra.mxu0 %v4058
        %4136 = vmatprep.subr.mxu0 0.0
        %4137 = vmatpush1.msra.mxu0 %v4059
        %4138 = vmatprep.subr.mxu0 0.0
        %4139 = vmatpush1.msra.mxu0 %v4060
        %4140 = vmatprep.subr.mxu0 0.0
        %4141 = vmatpush1.msra.mxu0 %v4061
        %4142 = vmatprep.subr.mxu0 0.0
        %4143 = vmatpush1.msra.mxu0 %v4062
        %4144 = vmatprep.subr.mxu0 0.0
        %4145 = vmatpush1.msra.mxu0 %v4063
        %4146 = vmatprep.subr.mxu0 0.0
        %4147 = vmatpush1.msra.mxu0 %v4064
        %4148 = vmatprep.subr.mxu0 0.0
        %4149 = vmatpush1.msra.mxu0 %v4065
        %4150 = vmatprep.subr.mxu0 0.0
        %4151 = vmatpush1.msra.mxu0 %v4066
        %4152 = vmatprep.subr.mxu0 0.0
        %4153 = vmatpush1.msra.mxu0 %v4067
        %4154 = vmatprep.mubr.f32.mxu0 %v4085
        %4155 = vmatmul.mubr.f32.gmra.mrb[0].mxu0 %v4084
        %v4156 = vpop.f32.mrb[0].mxu0
        %v4157 = vadd.f32 0.0, %v4156
        %v4158 = vpop.f32.mrb[0].mxu0
        %4159 = vdwg.mxu0
        %4160 = vmatprep.subr.mxu0 0.0
        %4161 = vmatpush1.msra.mxu0 %v4068
        %4162 = vmatprep.subr.mxu0 0.0
        %4163 = vmatpush1.msra.mxu0 %v4069
        %4164 = vmatprep.subr.mxu0 0.0
        %4165 = vmatpush1.msra.mxu0 %v4070
        %4166 = vmatprep.subr.mxu0 0.0
        %4167 = vmatpush1.msra.mxu0 %v4071
        %4168 = vmatprep.subr.mxu0 0.0
        %4169 = vmatpush1.msra.mxu0 %v4072
        %4170 = vmatprep.subr.mxu0 0.0
        %4171 = vmatpush1.msra.mxu0 %v4073
        %4172 = vmatprep.subr.mxu0 0.0
        %4173 = vmatpush1.msra.mxu0 %v4074
        %4174 = vmatprep.subr.mxu0 0.0
        %4175 = vmatpush1.msra.mxu0 %v4075
        %4176 = vmatprep.subr.mxu0 0.0
        %4177 = vmatpush1.msra.mxu0 %v4076
        %4178 = vmatprep.subr.mxu0 0.0
        %4179 = vmatpush1.msra.mxu0 %v4077
        %4180 = vmatprep.subr.mxu0 0.0
        %4181 = vmatpush1.msra.mxu0 %v4078
        %4182 = vmatprep.subr.mxu0 0.0
        %4183 = vmatpush1.msra.mxu0 %v4079
        %4184 = vmatprep.subr.mxu0 0.0
        %4185 = vmatpush1.msra.mxu0 %v4080
        %4186 = vmatprep.subr.mxu0 0.0
        %4187 = vmatpush1.msra.mxu0 %v4081
        %4188 = vmatprep.subr.mxu0 0.0
        %4189 = vmatpush1.msra.mxu0 %v4082
        %4190 = vmatprep.subr.mxu0 0.0
        %4191 = vmatpush1.msra.mxu0 %v4083
        %4192 = vmatprep.subr.mxu0 0.0
        %4193 = vmatpush1.msra.mxu0 0.0
        %4194 = vmatprep.subr.mxu0 0.0
        %4195 = vmatpush1.msra.mxu0 0.0
        %4196 = vmatprep.subr.mxu0 0.0
        %4197 = vmatpush1.msra.mxu0 0.0
        %4198 = vmatprep.subr.mxu0 0.0
        %4199 = vmatpush1.msra.mxu0 0.0
        %4200 = vmatprep.subr.mxu0 0.0
        %4201 = vmatpush1.msra.mxu0 0.0
        %4202 = vmatprep.subr.mxu0 0.0
        %4203 = vmatpush1.msra.mxu0 0.0
        %4204 = vmatprep.subr.mxu0 0.0
        %4205 = vmatpush1.msra.mxu0 0.0
        %4206 = vmatprep.subr.mxu0 0.0
        %4207 = vmatpush1.msra.mxu0 0.0
        %4208 = vmatprep.subr.mxu0 0.0
        %4209 = vmatpush1.msra.mxu0 0.0
        %4210 = vmatprep.subr.mxu0 0.0
        %4211 = vmatpush1.msra.mxu0 0.0
        %4212 = vmatprep.subr.mxu0 0.0
        %4213 = vmatpush1.msra.mxu0 0.0
        %4214 = vmatprep.subr.mxu0 0.0
        %4215 = vmatpush1.msra.mxu0 0.0
        %4216 = vmatprep.subr.mxu0 0.0
        %4217 = vmatpush1.msra.mxu0 0.0
        %4218 = vmatprep.subr.mxu0 0.0
        %4219 = vmatpush1.msra.mxu0 0.0
        %4220 = vmatprep.subr.mxu0 0.0
        %4221 = vmatpush1.msra.mxu0 0.0
        %4222 = vmatprep.subr.mxu0 0.0
        %4223 = vmatpush1.msra.mxu0 0.0
        %4224 = vmatprep.mubr.f32.mxu0 0.0
        %4225 = vmatmul.mubr.f32.gmra.mrb[0].mxu0 %v4086
        %v4226 = vpop.f32.mrb[0].mxu0
        %v4227 = vadd.f32 %v4157, %v4226
        %v4228 = vpop.f32.mrb[0].mxu0
        %4229 = vdwg.mxu0
        %v4230 = vadd.f32 %v4034, %v4227
        %v4231 = vmax.f32 %v4230, 0.0
        %v4232 = vld [vmem:[#allocation14] sm:$0xff]
        %v4233 = vld [vmem:[#allocation14 + $0x8] sm:$0xff]
        %v4234 = vld [vmem:[#allocation14 + $0x10] sm:$0xff]
        %v4235 = vld [vmem:[#allocation14 + $0x18] sm:$0xff]
        %v4236 = vld [vmem:[#allocation16] sm:$0x1]
        %vm4237 = vcmask 261120
        %v4239 = vsel %vm4237, %v4231, 0
        %4241 = vmatprep.subr.mxu0 0.0
        %4242 = vmatpush1.msra.mxu0 %v4232
        %4243 = vmatprep.subr.mxu0 0.0
        %4244 = vmatpush1.msra.mxu0 %v4233
        %4245 = vmatprep.subr.mxu0 0.0
        %4246 = vmatpush1.msra.mxu0 %v4234
        %4247 = vmatprep.subr.mxu0 0.0
        %4248 = vmatpush1.msra.mxu0 %v4235
        %4249 = vmatprep.subr.mxu0 0.0
        %4250 = vmatpush1.msra.mxu0 0.0
        %4251 = vmatprep.subr.mxu0 0.0
        %4252 = vmatpush1.msra.mxu0 0.0
        %4253 = vmatprep.subr.mxu0 0.0
        %4254 = vmatpush1.msra.mxu0 0.0
        %4255 = vmatprep.subr.mxu0 0.0
        %4256 = vmatpush1.msra.mxu0 0.0
        %4257 = vmatprep.subr.mxu0 0.0
        %4258 = vmatpush1.msra.mxu0 0.0
        %4259 = vmatprep.subr.mxu0 0.0
        %4260 = vmatpush1.msra.mxu0 0.0
        %4261 = vmatprep.subr.mxu0 0.0
        %4262 = vmatpush1.msra.mxu0 0.0
        %4263 = vmatprep.subr.mxu0 0.0
        %4264 = vmatpush1.msra.mxu0 0.0
        %4265 = vmatprep.subr.mxu0 0.0
        %4266 = vmatpush1.msra.mxu0 0.0
        %4267 = vmatprep.subr.mxu0 0.0
        %4268 = vmatpush1.msra.mxu0 0.0
        %4269 = vmatprep.subr.mxu0 0.0
        %4270 = vmatpush1.msra.mxu0 0.0
        %4271 = vmatprep.subr.mxu0 0.0
        %4272 = vmatpush1.msra.mxu0 0.0
        %4273 = vmatprep.subr.mxu0 0.0
        %4274 = vmatpush1.msra.mxu0 0.0
        %4275 = vmatprep.subr.mxu0 0.0
        %4276 = vmatpush1.msra.mxu0 0.0
        %4277 = vmatprep.subr.mxu0 0.0
        %4278 = vmatpush1.msra.mxu0 0.0
        %4279 = vmatprep.subr.mxu0 0.0
        %4280 = vmatpush1.msra.mxu0 0.0
        %4281 = vmatprep.subr.mxu0 0.0
        %4282 = vmatpush1.msra.mxu0 0.0
        %4283 = vmatprep.subr.mxu0 0.0
        %4284 = vmatpush1.msra.mxu0 0.0
        %4285 = vmatprep.subr.mxu0 0.0
        %4286 = vmatpush1.msra.mxu0 0.0
        %4287 = vmatprep.subr.mxu0 0.0
        %4288 = vmatpush1.msra.mxu0 0.0
        %4289 = vmatprep.subr.mxu0 0.0
        %4290 = vmatpush1.msra.mxu0 0.0
        %4291 = vmatprep.subr.mxu0 0.0
        %4292 = vmatpush1.msra.mxu0 0.0
        %4293 = vmatprep.subr.mxu0 0.0
        %4294 = vmatpush1.msra.mxu0 0.0
        %4295 = vmatprep.subr.mxu0 0.0
        %4296 = vmatpush1.msra.mxu0 0.0
        %4297 = vmatprep.subr.mxu0 0.0
        %4298 = vmatpush1.msra.mxu0 0.0
        %4299 = vmatprep.subr.mxu0 0.0
        %4300 = vmatpush1.msra.mxu0 0.0
        %4301 = vmatprep.subr.mxu0 0.0
        %4302 = vmatpush1.msra.mxu0 0.0
        %4303 = vmatprep.subr.mxu0 0.0
        %4304 = vmatpush1.msra.mxu0 0.0
        %4305 = vmatprep.mubr.f32.mxu0 0.0
        %4306 = vmatmul.mubr.f32.gmra.mrb[0].mxu0 %v4239
        %v4307 = vpop.f32.mrb[0].mxu0
        %v4308 = vadd.f32 %v4236, %v4307
        %v4309 = vpop.f32.mrb[0].mxu0
        %4310 = vdwg.mxu0
        %vm4311 = vcmask 32768
        %4312 = vst.msk [vmem:[%s472] sm:$0x1] %vm4311, %v4308
        %s4313 = sand.u32 %s252, 1
        %s4314 = scalar_lea.sflag [#allocation4], %s4313
        %s4315 = sand.u32 %s252, 1
        %s4316 = scalar_lea.vmem [#allocation17], %s4315
        // Predicated region
        $region97: #{_forward.1} parent=59 // pred_check
          %p4317 = pneg %p262
        $region98: #{_forward.1} parent=59 // pred_check_branch
          %4319 = sbr.rel (%p4317) target = $region100
        $region99: #{_forward.1} parent=59 // pred_region
          %s4321 = ssub.s32 16, 16
          %4322 = vsyncadd %s4314, %s4321
          %s4323 = smul.addr %s29, 16
          %s4324 = scalar_lea.hbm %s10, %s4323
          %s4326 = sshll.u32 %s4316, 4
          %s4327 = int_to_ptr.vmem [resolvable:$true] %s4326
          %4329 = dma.vmem_to_hbm [thread:$0]  %s4327, 16, %s4324, %s4314
        $region100: #{_forward.1} parent=59 // pred_fallthru
          _
      $region60: #{_forward.1} parent=5 // pred_fallthru
        _
      %p4330 = scmp.le.s32.totalorder 2, %s24
      // Predicated region
      $region101: #{_forward.1} parent=5 // pred_check
        %p4331 = pneg %p4330
      $region102: #{_forward.1} parent=5 // pred_check_branch
        %4333 = sbr.rel (%p4331) target = $region104
      $region103: #{_forward.1} parent=5 // pred_region
        %s4334 = ssub.s32 %s24, 2
        // Predicated region
        $region105: #{_forward.1} parent=103 // pred_check
          %p4335 = pneg %p268
        $region106: #{_forward.1} parent=103 // pred_check_branch
          %4337 = sbr.rel (%p4335) target = $region108
        $region107: #{_forward.1} parent=103 // pred_region
          %s4338 = sand.u32 %s253, 1
          %s4339 = scalar_lea.sflag [#allocation4], %s4338
          %s4340 = sand.u32 %s253, 1
          %s4341 = scalar_lea.vmem [#allocation17], %s4340
          %4342 = dma.done %s4339, 16
        $region108: #{_forward.1} parent=103 // pred_fallthru
          _
      $region104: #{_forward.1} parent=5 // pred_fallthru
        _
    $region6: #{_forward.1} parent=1 // loop_footer
      %s28 = sadd.s32 1, %s24
    $region7: #{_forward.1} parent=1 // loop_footer_branch
      %23 = sbr.rel target = $region3
    $region8: #{_forward.1} parent=1 // loop_exit
      _
    %4343 = vsyncpa [#allocation3], 1
    %s4344 = scalar_lea.sflag [#allocation3], 1
    %4345 = vsyncpa %s4344, 1
    %4346 = vsyncpa [#allocation6], 1
    %4347 = vsyncpa [#allocation9], 1
    %4348 = vsyncpa [#allocation12], 1
    %4349 = vsyncpa [#allocation15], 1
    %4350 = vsyncpa [#allocation4], 1
    %s4351 = scalar_lea.sflag [#allocation4], 1
    %4352 = vsyncpa %s4351, 1

</llo_original>
